<compile_context>
chip_gen: v5e
topology: v5e:2x2
jax: 0.10.0
libtpu: 0.0.40
codegen_flags: <defaults>
</compile_context>

<pallas_src>
import jax
import jax.numpy as jnp
from jax.experimental import pallas as pl
from jax.experimental.pallas import tpu as pltpu


KERNEL_SIZE = 3
IN_CH = 1
OUT_CH = 8
IMG = 28
OUT_HW = IMG - KERNEL_SIZE + 1            # 26
CONV_PIX = OUT_HW * OUT_HW                # 676
LINEAR_IN = CONV_PIX * OUT_CH             # 5408
HIDDEN = 1024
NUM_CLASSES = 10
LOGITS_PAD = 128                          # pad 10 -> one full lane tile
BN_EPS = 1e-5


# ---------------------------------------------------------------------------
# Kernel 1: im2col-conv + BatchNorm(batch statistics, training mode) + ReLU
# ---------------------------------------------------------------------------
def _conv_bn_relu_kernel(p_ref, w_ref, gb_ref, o_ref):
    # p_ref : (B, 9, 676)  bf16 im2col patches; k index ordered (ki, kj)
    # w_ref : (8, 9)       bf16 conv weight, rows = out channel
    # gb_ref: (8, 2)       f32, column 0 = gamma, column 1 = beta
    # o_ref : (B, 8, 676)  bf16, (b, c, oh*ow) == PyTorch flatten order
    B = p_ref.shape[0]
    M = p_ref.shape[2]
    w = w_ref[...]

    # Per-image conv as a (C,K)@(K,M) bf16 MXU matmul (f32 accumulate);
    # last dim (676) is lane-dense.
    # TODO(synk): for B >~ 8 switch to a grid over B with two-pass BN stats in
    # a small scratch; the unrolled list below would start spilling vregs.
    ys = [jnp.dot(w, p_ref[b], preferred_element_type=jnp.float32)
          for b in range(B)]                                           # (C, M)

    # Train-mode BatchNorm2d: biased mean/var over (N, H, W) per channel.
    # (Conv bias intentionally omitted: it would be subtracted right back out.)
    n = float(B * M)
    mean = sum(jnp.sum(y, axis=1, keepdims=True) for y in ys) / n      # (C, 1)
    var = sum(jnp.sum(jnp.square(y - mean), axis=1, keepdims=True)
              for y in ys) / n                                         # (C, 1)
    inv = jax.lax.rsqrt(var + BN_EPS)

    gamma = gb_ref[:, 0:1]                                             # (C, 1)
    beta = gb_ref[:, 1:2]                                              # (C, 1)
    scale = inv * gamma
    shift = beta - mean * scale

    for b in range(B):
        o_ref[b] = jnp.maximum(ys[b] * scale + shift, 0.0).astype(o_ref.dtype)


def conv_bn_relu(patches, w, gamma_beta):
    # TODO(synk): fuse im2col into this kernel (pass the raw (B,28,28) image,
    # build the 9 shifted views in VMEM) to cut kernel-1 input bytes another 9x
    # as batch grows; at B=2 the bf16 patch stream is already noise.
    B, K, M = patches.shape
    C = w.shape[0]
    flops = 2 * B * M * K * C + 12 * B * M * C
    bytes_accessed = (B * K * M * 2) + (C * K * 2) + (C * 2 * 4) + (B * C * M * 2)
    return pl.pallas_call(
        _conv_bn_relu_kernel,
        out_shape=jax.ShapeDtypeStruct((B, C, M), jnp.bfloat16),
        grid=(1,),
        in_specs=[
            pl.BlockSpec((B, K, M), lambda i: (0, 0, 0)),
            pl.BlockSpec((C, K), lambda i: (0, 0)),
            pl.BlockSpec((C, 2), lambda i: (0, 0)),
        ],
        out_specs=pl.BlockSpec((B, C, M), lambda i: (0, 0, 0)),
        compiler_params=pltpu.CompilerParams(dimension_semantics=("arbitrary",)),
        cost_estimate=pl.CostEstimate(
            flops=flops, transcendentals=C, bytes_accessed=bytes_accessed),
    )(patches, w, gamma_beta)


# ---------------------------------------------------------------------------
# Kernel 2: fused Linear(5408,1024) + Linear(1024,128-padded) MLP head.
# Grid is over 256-wide output tiles of the first linear; W1 streams as int8
# (per-output-channel scale applied to the f32 accumulator); each step also
# contracts its h-tile with the matching W2 rows and writes partial logits.
# ---------------------------------------------------------------------------
def _mlp_fused_kernel(x_ref, w1q_ref, s1_ref, b1_ref, w2_ref, part_ref):
    # x_ref   : (B, 5408)   bf16 features (same block every step -> resident)
    # w1q_ref : (5408, tn)  int8 quantized W1 tile
    # s1_ref  : (1, tn)     f32 per-output-channel dequant scale
    # b1_ref  : (1, tn)     f32 fc1 bias tile
    # w2_ref  : (tn, 128)   bf16 W2 rows for this tile
    # part_ref: (1, B, 128) f32 partial logits for this grid step
    w1 = w1q_ref[...].astype(jnp.bfloat16)          # exact: |q| <= 127 in bf16
    h = jnp.dot(x_ref[...], w1, preferred_element_type=jnp.float32)
    h = h * s1_ref[...] + b1_ref[...]                               # (B, tn)
    part_ref[0] = jnp.dot(h.astype(jnp.bfloat16), w2_ref[...],
                          preferred_element_type=jnp.float32)       # (B, 128)


def fused_mlp(feat, w1_q, w1_scale, b1, w2, tn=256):
    M, K = feat.shape
    N = w1_q.shape[1]
    C2 = w2.shape[1]
    assert N % tn == 0
    G = N // tn
    flops = 2 * M * K * N + 2 * M * N * C2
    bytes_accessed = (M * K * 2 + K * N * 1 + 2 * N * 4
                      + N * C2 * 2 + G * M * C2 * 4)
    return pl.pallas_call(
        _mlp_fused_kernel,
        out_shape=jax.ShapeDtypeStruct((G, M, C2), jnp.float32),
        grid=(G,),
        in_specs=[
            pl.BlockSpec((M, K), lambda j: (0, 0)),
            pl.BlockSpec((K, tn), lambda j: (0, j)),
            pl.BlockSpec((1, tn), lambda j: (0, j)),
            pl.BlockSpec((1, tn), lambda j: (0, j)),
            pl.BlockSpec((tn, C2), lambda j: (j, 0)),
        ],
        out_specs=pl.BlockSpec((1, M, C2), lambda j: (j, 0, 0)),
        compiler_params=pltpu.CompilerParams(
            dimension_semantics=("parallel",),
            vmem_limit_bytes=32 * 1024 * 1024,
        ),
        cost_estimate=pl.CostEstimate(
            flops=flops, transcendentals=0, bytes_accessed=bytes_accessed),
    )(feat, w1_q, w1_scale, b1, w2)


# ---------------------------------------------------------------------------
# Forward pass (glue + kernels)
# ---------------------------------------------------------------------------
@jax.jit
def cnn_forward(x_nchw, params):
    B = x_nchw.shape[0]
    OH = OW = OUT_HW

    # im2col in (k, pixel) order: patches[b, ki*3+kj, oh*OW+ow] = x[b,0,oh+ki,ow+kj]
    x = x_nchw[:, 0].astype(jnp.bfloat16)                         # (B, 28, 28)
    rows = []
    for ki in range(KERNEL_SIZE):
        for kj in range(KERNEL_SIZE):
            rows.append(x[:, ki:ki + OH, kj:kj + OW].reshape(B, OH * OW))
    patches = jnp.stack(rows, axis=1)                             # (B, 9, 676) bf16

    # Conv + BatchNorm(batch stats) + ReLU in one Pallas kernel -> bf16 (B,C,676).
    conv_out = conv_bn_relu(patches, params["conv_w"], params["bn_gamma_beta"])

    # Already in PyTorch's (c, h, w) flatten order: plain reshape, no transpose.
    feat = conv_out.reshape(B, LINEAR_IN)                         # (B, 5408) bf16

    # Fused Linear(5408,1024) -> Linear(1024,128): int8 W1 stream, bf16 W2,
    # f32 MXU accumulation, per-grid-step partial logits ('parallel' axis).
    partials = fused_mlp(feat, params["w1_q"], params["w1_scale"],
                         params["b1"], params["w2"], tn=256)      # (4, B, 128)

    logits = partials.sum(axis=0) + params["b2"][None, :]         # (B, 128) f32
    return logits[:, :NUM_CLASSES]


def init_params(key):
    ks = jax.random.split(key, 6)
    fan_conv = KERNEL_SIZE * KERNEL_SIZE * IN_CH

    # Conv weight stored as (C_out, K*K) with k ordered (ki, kj), bf16 stream.
    conv_w = (jax.random.normal(ks[0], (OUT_CH, fan_conv), jnp.float32)
              / jnp.sqrt(fan_conv)).astype(jnp.bfloat16)
    # NOTE: Conv2d bias omitted on purpose — train-mode BatchNorm subtracts the
    # per-channel batch mean, which exactly cancels any pre-BN bias.
    gamma = jnp.ones((OUT_CH,), jnp.float32)      # PyTorch BatchNorm2d init
    beta = jnp.zeros((OUT_CH,), jnp.float32)

    # fc1 weight: int8 symmetric quant, per-output-channel scale.
    w1 = (jax.random.normal(ks[2], (LINEAR_IN, HIDDEN), jnp.float32)
          / jnp.sqrt(LINEAR_IN))
    w1_scale = jnp.max(jnp.abs(w1), axis=0, keepdims=True) / 127.0     # (1, 1024)
    w1_q = jnp.clip(jnp.round(w1 / w1_scale), -127, 127).astype(jnp.int8)
    b1 = (jax.random.normal(ks[3], (HIDDEN,), jnp.float32) * 0.1).reshape(1, HIDDEN)

    # fc2: bf16 weight, zero-padded 10 -> 128 output lanes (sliced in wrapper).
    w2 = jax.random.normal(ks[4], (HIDDEN, NUM_CLASSES), jnp.float32) / jnp.sqrt(HIDDEN)
    b2 = jax.random.normal(ks[5], (NUM_CLASSES,), jnp.float32) * 0.1
    w2p = (jnp.zeros((HIDDEN, LOGITS_PAD), jnp.float32)
           .at[:, :NUM_CLASSES].set(w2).astype(jnp.bfloat16))
    b2p = jnp.zeros((LOGITS_PAD,), jnp.float32).at[:NUM_CLASSES].set(b2)

    return {
        "conv_w": conv_w,
        "bn_gamma_beta": jnp.stack([gamma, beta], axis=1),        # (C, 2) f32
        "w1_q": w1_q,                                             # (5408, 1024) int8
        "w1_scale": w1_scale,                                     # (1, 1024) f32
        "b1": b1,                                                 # (1, 1024) f32
        "w2": w2p,                                                # (1024, 128) bf16
        "b2": b2p,                                                # (128,) f32
    }


if __name__ == "__main__":
    key = jax.random.PRNGKey(0)
    pkey, xkey = jax.random.split(key)
    params = init_params(pkey)

    # Module hard-codes 28x28 single-channel images; small batch of 2.
    x = jax.random.normal(xkey, (2, IN_CH, IMG, IMG), jnp.float32)

    logits = cnn_forward(x, params)
    jax.block_until_ready(logits)
    assert logits.shape == (2, NUM_CLASSES) and logits.dtype == jnp.float32
    print("KERNEL_OK")
</pallas_src>

<mosaic_0001>
module attributes {stable_mosaic.version = 11 : i64} {
  func.func @_conv_bn_relu_kernel(%arg0: i32, %arg1: memref<2x9x676xbf16, #tpu.memory_space<vmem>>, %arg2: memref<8x9xbf16, #tpu.memory_space<vmem>>, %arg3: memref<8x2xf32, #tpu.memory_space<vmem>>, %arg4: memref<2x8x676xbf16, #tpu.memory_space<vmem>>) attributes {dimension_semantics = [#tpu.dimension_semantics<arbitrary>], iteration_bounds = array<i64: 1>, scalar_prefetch = 0 : i64, scratch_operands = 0 : i64, tpu.core_type = #tpu.core_type<tc>, window_params = [{pipeline_mode = #tpu.pipeline_mode<synchronous>, transform_indices = @transform_0, window_bounds = array<i64: 2, 9, 676>}, {pipeline_mode = #tpu.pipeline_mode<synchronous>, transform_indices = @transform_1, window_bounds = array<i64: 8, 9>}, {pipeline_mode = #tpu.pipeline_mode<synchronous>, transform_indices = @transform_2, window_bounds = array<i64: 8, 2>}, {pipeline_mode = #tpu.pipeline_mode<synchronous>, transform_indices = @transform_3, window_bounds = array<i64: 2, 8, 676>}]} {
    %c0 = arith.constant 0 : index
    %c0_0 = arith.constant 0 : index
    %0 = vector.load %arg2[%c0, %c0_0] : memref<8x9xbf16, #tpu.memory_space<vmem>>, vector<8x9xbf16>
    %c0_1 = arith.constant 0 : index
    %c0_2 = arith.constant 0 : index
    %c0_3 = arith.constant 0 : index
    %1 = vector.load %arg1[%c0_1, %c0_2, %c0_3] : memref<2x9x676xbf16, #tpu.memory_space<vmem>>, vector<1x9x676xbf16>
    %2 = vector.shape_cast %1 : vector<1x9x676xbf16> to vector<9x676xbf16>
    %cst = arith.constant dense<0.000000e+00> : vector<8x676xf32>
    %3 = tpu.matmul %0, %2, %cst {dimension_numbers = #tpu.dot_dimension_numbers<[1], [0], [0], [1], [0, 0, 1, 1], [], []>} : vector<8x9xbf16>, vector<9x676xbf16>, vector<8x676xf32> -> vector<8x676xf32>
    %c1 = arith.constant 1 : index
    %c0_4 = arith.constant 0 : index
    %c0_5 = arith.constant 0 : index
    %4 = vector.load %arg1[%c1, %c0_4, %c0_5] : memref<2x9x676xbf16, #tpu.memory_space<vmem>>, vector<1x9x676xbf16>
    %5 = vector.shape_cast %4 : vector<1x9x676xbf16> to vector<9x676xbf16>
    %cst_6 = arith.constant dense<0.000000e+00> : vector<8x676xf32>
    %6 = tpu.matmul %0, %5, %cst_6 {dimension_numbers = #tpu.dot_dimension_numbers<[1], [0], [0], [1], [0, 0, 1, 1], [], []>} : vector<8x9xbf16>, vector<9x676xbf16>, vector<8x676xf32> -> vector<8x676xf32>
    %cst_7 = arith.constant dense<0.000000e+00> : vector<8xf32>
    %7 = vector.multi_reduction <add>, %3, %cst_7 [1] : vector<8x676xf32> to vector<8xf32>
    %8 = vector.shape_cast %7 : vector<8xf32> to vector<8x1xf32>
    %cst_8 = arith.constant 0.000000e+00 : f32
    %9 = vector.broadcast %cst_8 : f32 to vector<8x1xf32>
    %10 = arith.addf %9, %8 : vector<8x1xf32>
    %cst_9 = arith.constant dense<0.000000e+00> : vector<8xf32>
    %11 = vector.multi_reduction <add>, %6, %cst_9 [1] : vector<8x676xf32> to vector<8xf32>
    %12 = vector.shape_cast %11 : vector<8xf32> to vector<8x1xf32>
    %13 = arith.addf %10, %12 : vector<8x1xf32>
    %cst_10 = arith.constant 1.352000e+03 : f32
    %14 = vector.broadcast %cst_10 : f32 to vector<8x1xf32>
    %15 = arith.divf %13, %14 : vector<8x1xf32>
    %16 = vector.broadcast %15 : vector<8x1xf32> to vector<8x676xf32>
    %17 = arith.subf %3, %16 : vector<8x676xf32>
    %18 = arith.mulf %17, %17 : vector<8x676xf32>
    %cst_11 = arith.constant dense<0.000000e+00> : vector<8xf32>
    %19 = vector.multi_reduction <add>, %18, %cst_11 [1] : vector<8x676xf32> to vector<8xf32>
    %20 = vector.shape_cast %19 : vector<8xf32> to vector<8x1xf32>
    %cst_12 = arith.constant 0.000000e+00 : f32
    %21 = vector.broadcast %cst_12 : f32 to vector<8x1xf32>
    %22 = arith.addf %21, %20 : vector<8x1xf32>
    %23 = vector.broadcast %15 : vector<8x1xf32> to vector<8x676xf32>
    %24 = arith.subf %6, %23 : vector<8x676xf32>
    %25 = arith.mulf %24, %24 : vector<8x676xf32>
    %cst_13 = arith.constant dense<0.000000e+00> : vector<8xf32>
    %26 = vector.multi_reduction <add>, %25, %cst_13 [1] : vector<8x676xf32> to vector<8xf32>
    %27 = vector.shape_cast %26 : vector<8xf32> to vector<8x1xf32>
    %28 = arith.addf %22, %27 : vector<8x1xf32>
    %cst_14 = arith.constant 1.352000e+03 : f32
    %29 = vector.broadcast %cst_14 : f32 to vector<8x1xf32>
    %30 = arith.divf %28, %29 : vector<8x1xf32>
    %cst_15 = arith.constant 9.99999974E-6 : f32
    %31 = vector.broadcast %cst_15 : f32 to vector<8x1xf32>
    %32 = arith.addf %30, %31 : vector<8x1xf32>
    %33 = math.rsqrt %32 : vector<8x1xf32>
    %c0_16 = arith.constant 0 : index
    %c0_17 = arith.constant 0 : index
    %34 = vector.load %arg3[%c0_16, %c0_17] : memref<8x2xf32, #tpu.memory_space<vmem>>, vector<8x1xf32>
    %c0_18 = arith.constant 0 : index
    %c1_19 = arith.constant 1 : index
    %35 = vector.load %arg3[%c0_18, %c1_19] : memref<8x2xf32, #tpu.memory_space<vmem>>, vector<8x1xf32>
    %36 = arith.mulf %33, %34 : vector<8x1xf32>
    %37 = arith.mulf %15, %36 : vector<8x1xf32>
    %38 = arith.subf %35, %37 : vector<8x1xf32>
    %39 = vector.broadcast %36 : vector<8x1xf32> to vector<8x676xf32>
    %40 = arith.mulf %3, %39 : vector<8x676xf32>
    %41 = vector.broadcast %38 : vector<8x1xf32> to vector<8x676xf32>
    %42 = arith.addf %40, %41 : vector<8x676xf32>
    %cst_20 = arith.constant 0.000000e+00 : f32
    %43 = vector.broadcast %cst_20 : f32 to vector<8x676xf32>
    %44 = arith.maximumf %42, %43 : vector<8x676xf32>
    %45 = arith.truncf %44 : vector<8x676xf32> to vector<8x676xbf16>
    %c0_21 = arith.constant 0 : index
    %c0_22 = arith.constant 0 : index
    %c0_23 = arith.constant 0 : index
    %46 = vector.load %arg4[%c0_21, %c0_22, %c0_23] : memref<2x8x676xbf16, #tpu.memory_space<vmem>>, vector<1x8x676xbf16>
    %47 = vector.shape_cast %46 : vector<1x8x676xbf16> to vector<8x676xbf16>
    %48 = vector.shape_cast %45 : vector<8x676xbf16> to vector<1x8x676xbf16>
    tpu.vector_store %arg4[%c0_21, %c0_22, %c0_23], %48 {strides = array<i32>} : memref<2x8x676xbf16, #tpu.memory_space<vmem>>, vector<1x8x676xbf16>,
    %49 = vector.broadcast %36 : vector<8x1xf32> to vector<8x676xf32>
    %50 = arith.mulf %6, %49 : vector<8x676xf32>
    %51 = vector.broadcast %38 : vector<8x1xf32> to vector<8x676xf32>
    %52 = arith.addf %50, %51 : vector<8x676xf32>
    %cst_24 = arith.constant 0.000000e+00 : f32
    %53 = vector.broadcast %cst_24 : f32 to vector<8x676xf32>
    %54 = arith.maximumf %52, %53 : vector<8x676xf32>
    %55 = arith.truncf %54 : vector<8x676xf32> to vector<8x676xbf16>
    %c1_25 = arith.constant 1 : index
    %c0_26 = arith.constant 0 : index
    %c0_27 = arith.constant 0 : index
    %56 = vector.load %arg4[%c1_25, %c0_26, %c0_27] : memref<2x8x676xbf16, #tpu.memory_space<vmem>>, vector<1x8x676xbf16>
    %57 = vector.shape_cast %56 : vector<1x8x676xbf16> to vector<8x676xbf16>
    %58 = vector.shape_cast %55 : vector<8x676xbf16> to vector<1x8x676xbf16>
    tpu.vector_store %arg4[%c1_25, %c0_26, %c0_27], %58 {strides = array<i32>} : memref<2x8x676xbf16, #tpu.memory_space<vmem>>, vector<1x8x676xbf16>,
    return
  }
  func.func @transform_0(%arg0: i32) -> (i32, i32, i32) {
    %c0_i32 = arith.constant 0 : i32
    %c0_i32_0 = arith.constant 0 : i32
    %c0_i32_1 = arith.constant 0 : i32
    %c0_i32_2 = arith.constant 0 : i32
    return %c0_i32, %c0_i32_0, %c0_i32_1 : i32, i32, i32
  }
  func.func @transform_1(%arg0: i32) -> (i32, i32) {
    %c0_i32 = arith.constant 0 : i32
    %c0_i32_0 = arith.constant 0 : i32
    %c0_i32_1 = arith.constant 0 : i32
    return %c0_i32, %c0_i32_0 : i32, i32
  }
  func.func @transform_2(%arg0: i32) -> (i32, i32) {
    %c0_i32 = arith.constant 0 : i32
    %c0_i32_0 = arith.constant 0 : i32
    %c0_i32_1 = arith.constant 0 : i32
    return %c0_i32, %c0_i32_0 : i32, i32
  }
  func.func @transform_3(%arg0: i32) -> (i32, i32, i32) {
    %c0_i32 = arith.constant 0 : i32
    %c0_i32_0 = arith.constant 0 : i32
    %c0_i32_1 = arith.constant 0 : i32
    %c0_i32_2 = arith.constant 0 : i32
    return %c0_i32, %c0_i32_0, %c0_i32_1 : i32, i32, i32
  }
}

module attributes {stable_mosaic.version = 11 : i64} {
  func.func @_mlp_fused_kernel(%arg0: i32, %arg1: memref<2x5408xbf16, #tpu.memory_space<vmem>>, %arg2: memref<5408x256xi8, #tpu.memory_space<vmem>>, %arg3: memref<1x256xf32, #tpu.memory_space<vmem>>, %arg4: memref<1x256xf32, #tpu.memory_space<vmem>>, %arg5: memref<256x128xbf16, #tpu.memory_space<vmem>>, %arg6: memref<1x2x128xf32, #tpu.memory_space<vmem>>) attributes {dimension_semantics = [#tpu.dimension_semantics<parallel>], iteration_bounds = array<i64: 4>, scalar_prefetch = 0 : i64, scratch_operands = 0 : i64, tpu.core_type = #tpu.core_type<tc>, window_params = [{pipeline_mode = #tpu.pipeline_mode<synchronous>, transform_indices = @transform_0, window_bounds = array<i64: 2, 5408>}, {transform_indices = @transform_1, window_bounds = array<i64: 5408, 256>}, {transform_indices = @transform_2, window_bounds = array<i64: 1, 256>}, {transform_indices = @transform_3, window_bounds = array<i64: 1, 256>}, {transform_indices = @transform_4, window_bounds = array<i64: 256, 128>}, {transform_indices = @transform_5, window_bounds = array<i64: 1, 2, 128>}]} {
    %c0 = arith.constant 0 : index
    %c0_0 = arith.constant 0 : index
    %0 = vector.load %arg2[%c0, %c0_0] : memref<5408x256xi8, #tpu.memory_space<vmem>>, vector<5408x256xi8>
    %1 = arith.sitofp %0 : vector<5408x256xi8> to vector<5408x256xbf16>
    %c0_1 = arith.constant 0 : index
    %c0_2 = arith.constant 0 : index
    %2 = vector.load %arg1[%c0_1, %c0_2] : memref<2x5408xbf16, #tpu.memory_space<vmem>>, vector<2x5408xbf16>
    %cst = arith.constant dense<0.000000e+00> : vector<2x256xf32>
    %3 = tpu.matmul %2, %1, %cst {dimension_numbers = #tpu.dot_dimension_numbers<[1], [0], [0], [1], [0, 0, 1, 1], [], []>} : vector<2x5408xbf16>, vector<5408x256xbf16>, vector<2x256xf32> -> vector<2x256xf32>
    %c0_3 = arith.constant 0 : index
    %c0_4 = arith.constant 0 : index
    %4 = vector.load %arg3[%c0_3, %c0_4] : memref<1x256xf32, #tpu.memory_space<vmem>>, vector<1x256xf32>
    %5 = vector.broadcast %4 : vector<1x256xf32> to vector<2x256xf32>
    %6 = arith.mulf %3, %5 : vector<2x256xf32>
    %c0_5 = arith.constant 0 : index
    %c0_6 = arith.constant 0 : index
    %7 = vector.load %arg4[%c0_5, %c0_6] : memref<1x256xf32, #tpu.memory_space<vmem>>, vector<1x256xf32>
    %8 = vector.broadcast %7 : vector<1x256xf32> to vector<2x256xf32>
    %9 = arith.addf %6, %8 : vector<2x256xf32>
    %10 = arith.truncf %9 : vector<2x256xf32> to vector<2x256xbf16>
    %c0_7 = arith.constant 0 : index
    %c0_8 = arith.constant 0 : index
    %11 = vector.load %arg5[%c0_7, %c0_8] : memref<256x128xbf16, #tpu.memory_space<vmem>>, vector<256x128xbf16>
    %cst_9 = arith.constant dense<0.000000e+00> : vector<2x128xf32>
    %12 = tpu.matmul %10, %11, %cst_9 {dimension_numbers = #tpu.dot_dimension_numbers<[1], [0], [0], [1], [0, 0, 1, 1], [], []>} : vector<2x256xbf16>, vector<256x128xbf16>, vector<2x128xf32> -> vector<2x128xf32>
    %c0_10 = arith.constant 0 : index
    %c0_11 = arith.constant 0 : index
    %c0_12 = arith.constant 0 : index
    %13 = vector.load %arg6[%c0_10, %c0_11, %c0_12] : memref<1x2x128xf32, #tpu.memory_space<vmem>>, vector<1x2x128xf32>
    %14 = vector.shape_cast %13 : vector<1x2x128xf32> to vector<2x128xf32>
    %15 = vector.shape_cast %12 : vector<2x128xf32> to vector<1x2x128xf32>
    tpu.vector_store %arg6[%c0_10, %c0_11, %c0_12], %15 {strides = array<i32>} : memref<1x2x128xf32, #tpu.memory_space<vmem>>, vector<1x2x128xf32>,
    return
  }
  func.func @transform_0(%arg0: i32) -> (i32, i32) {
    %c0_i32 = arith.constant 0 : i32
    %c0_i32_0 = arith.constant 0 : i32
    %c0_i32_1 = arith.constant 0 : i32
    return %c0_i32, %c0_i32_0 : i32, i32
  }
  func.func @transform_1(%arg0: i32) -> (i32, i32) {
    %c0_i32 = arith.constant 0 : i32
    %c0_i32_0 = arith.constant 0 : i32
    return %c0_i32, %arg0 : i32, i32
  }
  func.func @transform_2(%arg0: i32) -> (i32, i32) {
    %c0_i32 = arith.constant 0 : i32
    %c0_i32_0 = arith.constant 0 : i32
    return %c0_i32, %arg0 : i32, i32
  }
  func.func @transform_3(%arg0: i32) -> (i32, i32) {
    %c0_i32 = arith.constant 0 : i32
    %c0_i32_0 = arith.constant 0 : i32
    return %c0_i32, %arg0 : i32, i32
  }
  func.func @transform_4(%arg0: i32) -> (i32, i32) {
    %c0_i32 = arith.constant 0 : i32
    %c0_i32_0 = arith.constant 0 : i32
    return %arg0, %c0_i32 : i32, i32
  }
  func.func @transform_5(%arg0: i32) -> (i32, i32, i32) {
    %c0_i32 = arith.constant 0 : i32
    %c0_i32_0 = arith.constant 0 : i32
    %c0_i32_1 = arith.constant 0 : i32
    return %arg0, %c0_i32, %c0_i32_0 : i32, i32, i32
  }
}

</mosaic_0001>

<llo_original>
// kernel: cnn_forward.2
$region0: #{cnn_forward.2}
  #allocation0 [shape = 'u32[]', space=smem, size = 0x4, offset = 0x4, fixed_abs, tag = 'smem constant byte address 0x4 - core index']
  #allocation1 [shape = 'u32[72,128]{1,0:T(1,128)}', space=vmem, size = 0x9000, scoped, tag = 'internal scratch']
  %s0 = inlined_call_operand.vmem [shape: bf16[2,9,676], index: 0, kind: input, shape index: {}]
  %s1 = inlined_call_operand.hbm [shape: bf16[8,9], index: 1, kind: input, shape index: {}]
  %s2 = inlined_call_operand.vmem [shape: f32[8,2], index: 2, kind: input, shape index: {}]
  %s3 = inlined_call_operand.vmem [shape: bf16[2,8,676], index: 3, kind: output, shape index: {}]
  %s4 = sld [smem:[#allocation0]]
  $region26: #{cnn_forward.2} parent=0
    _
  %s6 = ssub.s32 1, %s4
  %s7 = scalar_select 0, %s6, %s4
  $region1: #{cnn_forward.2} parent=0
    #allocation2 [shape = 'u8[2048]{0}', space=vmem, size = 0x800, scoped, tag = 'input window, operand 1, single buffered']
    #allocation3 [shape = 's32[1]{0}', space=sflag, size = 0x4, scoped, tag = 'scoped memory for cnn_forward.2']
    %8 = vsyncpa [#allocation3], 0
    // Predicated region
    $region2: #{cnn_forward.2} parent=1 // pred_check
      _
    $region3: #{cnn_forward.2} parent=1 // pred_check_branch
      %10 = sbr.rel (0) target = $region5
    $region4: #{cnn_forward.2} parent=1 // pred_region
      _
    $region5: #{cnn_forward.2} parent=1 // pred_fallthru
      _
    // Predicated region
    $region6: #{cnn_forward.2} parent=1 // pred_check
      _
    $region7: #{cnn_forward.2} parent=1 // pred_check_branch
      %12 = sbr.rel (0) target = $region9
    $region8: #{cnn_forward.2} parent=1 // pred_region
      %14 = vsyncadd [#allocation3], 0
      %s16 = sshll.u32 %s1, 4
      %s17 = int_to_ptr.hbm [resolvable:$true] %s16
      %s18 = sshll.u32 [#allocation2], 4
      %s19 = int_to_ptr.vmem [resolvable:$true] %s18
      %21 = dma.hbm_to_vmem [thread:$0]  %s17, 64, %s19, [#allocation3]
    $region9: #{cnn_forward.2} parent=1 // pred_fallthru
      _
    // Predicated region
    $region10: #{cnn_forward.2} parent=1 // pred_check
      _
    $region11: #{cnn_forward.2} parent=1 // pred_check_branch
      %23 = sbr.rel (0) target = $region13
    $region12: #{cnn_forward.2} parent=1 // pred_region
      _
    $region13: #{cnn_forward.2} parent=1 // pred_fallthru
      _
    // Predicated region
    $region14: #{cnn_forward.2} parent=1 // pred_check
      _
    $region15: #{cnn_forward.2} parent=1 // pred_check_branch
      %25 = sbr.rel (0) target = $region17
    $region16: #{cnn_forward.2} parent=1 // pred_region
      %27 = dma.done [#allocation3], 64
    $region17: #{cnn_forward.2} parent=1 // pred_fallthru
      _
    %v29 = vld [vmem:[#allocation2] sm:$0xf]
    %v30 = vld [vmem:[%s0] sm:$0xff]
    %v31 = vld [vmem:[%s0 + $0x8] sm:$0xff]
    %v32 = vld [vmem:[%s0 + $0x10] sm:$0xff]
    %v33 = vld [vmem:[%s0 + $0x18] sm:$0x11]
    %v34 = vld [vmem:[%s0 + $0x20] sm:$0x11]
    %v35 = vld [vmem:[%s0 + $0x28] sm:$0x11]
    %v42 = vunpack.c.l.b16 %v30
    %v43 = vunpack.c.h.b16 %v30
    %v44 = vunpack.c.l.b16 %v31
    %v45 = vunpack.c.h.b16 %v31
    %v46 = vunpack.c.l.b16 %v32
    %v47 = vunpack.c.h.b16 %v32
    %v48 = vunpack.c.l.b16 %v33
    %v49 = vunpack.c.h.b16 %v33
    %v50 = vunpack.c.l.b16 %v34
    %v51 = vunpack.c.h.b16 %v34
    %v52 = vunpack.c.l.b16 %v35
    %v53 = vunpack.c.h.b16 %v35
    %v54 = vpack.c.b16 %v48, %v42
    %v55 = vpack.c.b16 %v49, %v43
    %v56 = vpack.c.b16 %v50, %v44
    %v57 = vpack.c.b16 %v51, %v45
    %v58 = vpack.c.b16 %v52, %v46
    %v59 = vpack.c.b16 %v53, %v47
    %vm60 = vcmask 72704
    %v62 = vsel %vm60, %v29, 0
    %vm64 = vcmask 1043456
    %vm65 = vcmask 1044480
    %v66 = vsel %vm64, 4294967295, 65535
    %v67 = vsel %vm65, %v66, 0
    %v69 = vand.u32 %v54, %v67
    %v72 = vand.u32 %v55, %v67
    %v75 = vand.u32 %v56, %v67
    %v78 = vand.u32 %v57, %v67
    %v81 = vand.u32 %v58, %v67
    %v84 = vand.u32 %v59, %v67
    %86 = vmatpush.bf16.msra.mxu0 0
    %87 = vmatpush.bf16.msra.mxu0 0
    %88 = vmatpush.bf16.msra.mxu0 0
    %89 = vmatpush.bf16.msra.mxu0 0
    %90 = vmatpush.bf16.msra.mxu0 0
    %91 = vmatpush.bf16.msra.mxu0 0
    %92 = vmatpush.bf16.msra.mxu0 0
    %93 = vmatpush.bf16.msra.mxu0 %v69
    %94 = vmatmul.bf16.gmra.mxu0 %v62
    %v95 = vpop.f32.mrf.mxu0
    %v96 = vadd.f32 0.0, %v95
    %v97 = vpop.f32.mrf.mxu0
    %98 = vdwg.mxu0
    %99 = vmatpush.bf16.msra.mxu0 0
    %100 = vmatpush.bf16.msra.mxu0 0
    %101 = vmatpush.bf16.msra.mxu0 0
    %102 = vmatpush.bf16.msra.mxu0 0
    %103 = vmatpush.bf16.msra.mxu0 0
    %104 = vmatpush.bf16.msra.mxu0 0
    %105 = vmatpush.bf16.msra.mxu0 0
    %106 = vmatpush.bf16.msra.mxu0 %v72
    %107 = vmatmul.bf16.gmra.mxu0 %v62
    %v108 = vpop.f32.mrf.mxu0
    %v109 = vadd.f32 0.0, %v108
    %v110 = vpop.f32.mrf.mxu0
    %111 = vdwg.mxu0
    %112 = vmatpush.bf16.msra.mxu0 0
    %113 = vmatpush.bf16.msra.mxu0 0
    %114 = vmatpush.bf16.msra.mxu0 0
    %115 = vmatpush.bf16.msra.mxu0 0
    %116 = vmatpush.bf16.msra.mxu0 0
    %117 = vmatpush.bf16.msra.mxu0 0
    %118 = vmatpush.bf16.msra.mxu0 0
    %119 = vmatpush.bf16.msra.mxu0 %v75
    %120 = vmatmul.bf16.gmra.mxu0 %v62
    %v121 = vpop.f32.mrf.mxu0
    %v122 = vadd.f32 0.0, %v121
    %v123 = vpop.f32.mrf.mxu0
    %124 = vdwg.mxu0
    %125 = vmatpush.bf16.msra.mxu0 0
    %126 = vmatpush.bf16.msra.mxu0 0
    %127 = vmatpush.bf16.msra.mxu0 0
    %128 = vmatpush.bf16.msra.mxu0 0
    %129 = vmatpush.bf16.msra.mxu0 0
    %130 = vmatpush.bf16.msra.mxu0 0
    %131 = vmatpush.bf16.msra.mxu0 0
    %132 = vmatpush.bf16.msra.mxu0 %v78
    %133 = vmatmul.bf16.gmra.mxu0 %v62
    %v134 = vpop.f32.mrf.mxu0
    %v135 = vadd.f32 0.0, %v134
    %v136 = vpop.f32.mrf.mxu0
    %137 = vdwg.mxu0
    %138 = vmatpush.bf16.msra.mxu0 0
    %139 = vmatpush.bf16.msra.mxu0 0
    %140 = vmatpush.bf16.msra.mxu0 0
    %141 = vmatpush.bf16.msra.mxu0 0
    %142 = vmatpush.bf16.msra.mxu0 0
    %143 = vmatpush.bf16.msra.mxu0 0
    %144 = vmatpush.bf16.msra.mxu0 0
    %145 = vmatpush.bf16.msra.mxu0 %v81
    %146 = vmatmul.bf16.gmra.mxu0 %v62
    %v147 = vpop.f32.mrf.mxu0
    %v148 = vadd.f32 0.0, %v147
    %v149 = vpop.f32.mrf.mxu0
    %150 = vdwg.mxu0
    %151 = vmatpush.bf16.msra.mxu0 0
    %152 = vmatpush.bf16.msra.mxu0 0
    %153 = vmatpush.bf16.msra.mxu0 0
    %154 = vmatpush.bf16.msra.mxu0 0
    %155 = vmatpush.bf16.msra.mxu0 0
    %156 = vmatpush.bf16.msra.mxu0 0
    %157 = vmatpush.bf16.msra.mxu0 0
    %158 = vmatpush.bf16.msra.mxu0 %v84
    %159 = vmatmul.bf16.gmra.mxu0 %v62
    %v160 = vpop.f32.mrf.mxu0
    %v161 = vadd.f32 0.0, %v160
    %v162 = vpop.f32.mrf.mxu0
    %163 = vdwg.mxu0
    %s164 = scalar_lea.vmem %s0, 48
    %v165 = vld [vmem:[%s164] sm:$0xff]
    %v166 = vld [vmem:[%s164 + $0x8] sm:$0xff]
    %v167 = vld [vmem:[%s164 + $0x10] sm:$0xff]
    %v168 = vld [vmem:[%s164 + $0x18] sm:$0x11]
    %v169 = vld [vmem:[%s164 + $0x20] sm:$0x11]
    %v170 = vld [vmem:[%s164 + $0x28] sm:$0x11]
    %v177 = vunpack.c.l.b16 %v165
    %v178 = vunpack.c.h.b16 %v165
    %v179 = vunpack.c.l.b16 %v166
    %v180 = vunpack.c.h.b16 %v166
    %v181 = vunpack.c.l.b16 %v167
    %v182 = vunpack.c.h.b16 %v167
    %v183 = vunpack.c.l.b16 %v168
    %v184 = vunpack.c.h.b16 %v168
    %v185 = vunpack.c.l.b16 %v169
    %v186 = vunpack.c.h.b16 %v169
    %v187 = vunpack.c.l.b16 %v170
    %v188 = vunpack.c.h.b16 %v170
    %v189 = vpack.c.b16 %v183, %v177
    %v190 = vpack.c.b16 %v184, %v178
    %v191 = vpack.c.b16 %v185, %v179
    %v192 = vpack.c.b16 %v186, %v180
    %v193 = vpack.c.b16 %v187, %v181
    %v194 = vpack.c.b16 %v188, %v182
    %v196 = vand.u32 %v189, %v67
    %v199 = vand.u32 %v190, %v67
    %v202 = vand.u32 %v191, %v67
    %v205 = vand.u32 %v192, %v67
    %v208 = vand.u32 %v193, %v67
    %v211 = vand.u32 %v194, %v67
    %213 = vmatpush.bf16.msra.mxu0 0
    %214 = vmatpush.bf16.msra.mxu0 0
    %215 = vmatpush.bf16.msra.mxu0 0
    %216 = vmatpush.bf16.msra.mxu0 0
    %217 = vmatpush.bf16.msra.mxu0 0
    %218 = vmatpush.bf16.msra.mxu0 0
    %219 = vmatpush.bf16.msra.mxu0 0
    %220 = vmatpush.bf16.msra.mxu0 %v196
    %221 = vmatmul.bf16.gmra.mxu0 %v62
    %v222 = vpop.f32.mrf.mxu0
    %v223 = vadd.f32 0.0, %v222
    %v224 = vpop.f32.mrf.mxu0
    %225 = vdwg.mxu0
    %226 = vmatpush.bf16.msra.mxu0 0
    %227 = vmatpush.bf16.msra.mxu0 0
    %228 = vmatpush.bf16.msra.mxu0 0
    %229 = vmatpush.bf16.msra.mxu0 0
    %230 = vmatpush.bf16.msra.mxu0 0
    %231 = vmatpush.bf16.msra.mxu0 0
    %232 = vmatpush.bf16.msra.mxu0 0
    %233 = vmatpush.bf16.msra.mxu0 %v199
    %234 = vmatmul.bf16.gmra.mxu0 %v62
    %v235 = vpop.f32.mrf.mxu0
    %v236 = vadd.f32 0.0, %v235
    %v237 = vpop.f32.mrf.mxu0
    %238 = vdwg.mxu0
    %239 = vmatpush.bf16.msra.mxu0 0
    %240 = vmatpush.bf16.msra.mxu0 0
    %241 = vmatpush.bf16.msra.mxu0 0
    %242 = vmatpush.bf16.msra.mxu0 0
    %243 = vmatpush.bf16.msra.mxu0 0
    %244 = vmatpush.bf16.msra.mxu0 0
    %245 = vmatpush.bf16.msra.mxu0 0
    %246 = vmatpush.bf16.msra.mxu0 %v202
    %247 = vmatmul.bf16.gmra.mxu0 %v62
    %v248 = vpop.f32.mrf.mxu0
    %v249 = vadd.f32 0.0, %v248
    %v250 = vpop.f32.mrf.mxu0
    %251 = vdwg.mxu0
    %252 = vmatpush.bf16.msra.mxu0 0
    %253 = vmatpush.bf16.msra.mxu0 0
    %254 = vmatpush.bf16.msra.mxu0 0
    %255 = vmatpush.bf16.msra.mxu0 0
    %256 = vmatpush.bf16.msra.mxu0 0
    %257 = vmatpush.bf16.msra.mxu0 0
    %258 = vmatpush.bf16.msra.mxu0 0
    %259 = vmatpush.bf16.msra.mxu0 %v205
    %260 = vmatmul.bf16.gmra.mxu0 %v62
    %v261 = vpop.f32.mrf.mxu0
    %v262 = vadd.f32 0.0, %v261
    %v263 = vpop.f32.mrf.mxu0
    %264 = vdwg.mxu0
    %265 = vmatpush.bf16.msra.mxu0 0
    %266 = vmatpush.bf16.msra.mxu0 0
    %267 = vmatpush.bf16.msra.mxu0 0
    %268 = vmatpush.bf16.msra.mxu0 0
    %269 = vmatpush.bf16.msra.mxu0 0
    %270 = vmatpush.bf16.msra.mxu0 0
    %271 = vmatpush.bf16.msra.mxu0 0
    %272 = vmatpush.bf16.msra.mxu0 %v208
    %273 = vmatmul.bf16.gmra.mxu0 %v62
    %v274 = vpop.f32.mrf.mxu0
    %v275 = vadd.f32 0.0, %v274
    %v276 = vpop.f32.mrf.mxu0
    %277 = vdwg.mxu0
    %278 = vmatpush.bf16.msra.mxu0 0
    %279 = vmatpush.bf16.msra.mxu0 0
    %280 = vmatpush.bf16.msra.mxu0 0
    %281 = vmatpush.bf16.msra.mxu0 0
    %282 = vmatpush.bf16.msra.mxu0 0
    %283 = vmatpush.bf16.msra.mxu0 0
    %284 = vmatpush.bf16.msra.mxu0 0
    %285 = vmatpush.bf16.msra.mxu0 %v211
    %286 = vmatmul.bf16.gmra.mxu0 %v62
    %v287 = vpop.f32.mrf.mxu0
    %v288 = vadd.f32 0.0, %v287
    %v289 = vpop.f32.mrf.mxu0
    %290 = vdwg.mxu0
    %v291 = vadd.f32 %v96, %v109
    %v292 = vadd.f32 %v291, %v122
    %v293 = vadd.f32 %v292, %v135
    %v294 = vadd.f32 %v293, %v148
    %vm295 = vcmask 293888
    %v296 = vsel %vm295, %v161, 0.0
    %v297 = vadd.f32 %v294, %v296
    %298 = vadd.xlane.f32.xlu0 %v297
    %v299 = vpop.xlane.xlu0 %298
    %v300 = vadd.f32 %v299, 0.0
    %v301 = vadd.f32 %v223, %v236
    %v302 = vadd.f32 %v301, %v249
    %v303 = vadd.f32 %v302, %v262
    %v304 = vadd.f32 %v303, %v275
    %v305 = vsel %vm295, %v288, 0.0
    %v306 = vadd.f32 %v304, %v305
    %307 = vadd.xlane.f32.xlu0 %v306
    %v308 = vpop.xlane.xlu0 %307
    %v309 = vadd.f32 %v300, %v308
    %v310 = vrcp.pop 1352.0
    %v311 = vmul.f32 1352.0, %v310
    %v312 = vsub.f32 1.0, %v311
    %v313 = vmul.f32 %v310, %v312
    %v314 = vadd.f32 %v310, %v313
    %vm315 = vweird.f32 %v310
    %v316 = vsel %vm315, %v310, %v314
    %v317 = vmul.f32 %v309, %v316
    %v318 = vsub.f32 %v96, %v317
    %v319 = vsub.f32 %v109, %v317
    %v320 = vsub.f32 %v122, %v317
    %v321 = vsub.f32 %v135, %v317
    %v322 = vsub.f32 %v148, %v317
    %v323 = vsub.f32 %v161, %v317
    %v324 = vmul.f32 %v318, %v318
    %v325 = vmul.f32 %v319, %v319
    %v326 = vmul.f32 %v320, %v320
    %v327 = vmul.f32 %v321, %v321
    %v328 = vmul.f32 %v322, %v322
    %v329 = vmul.f32 %v323, %v323
    %v330 = vadd.f32 %v324, %v325
    %v331 = vadd.f32 %v330, %v326
    %v332 = vadd.f32 %v331, %v327
    %v333 = vadd.f32 %v332, %v328
    %v334 = vsel %vm295, %v329, 0.0
    %v335 = vadd.f32 %v333, %v334
    %336 = vadd.xlane.f32.xlu0 %v335
    %v337 = vpop.xlane.xlu0 %336
    %v338 = vadd.f32 %v337, 0.0
    %v339 = vsub.f32 %v223, %v317
    %v340 = vsub.f32 %v236, %v317
    %v341 = vsub.f32 %v249, %v317
    %v342 = vsub.f32 %v262, %v317
    %v343 = vsub.f32 %v275, %v317
    %v344 = vsub.f32 %v288, %v317
    %v345 = vmul.f32 %v339, %v339
    %v346 = vmul.f32 %v340, %v340
    %v347 = vmul.f32 %v341, %v341
    %v348 = vmul.f32 %v342, %v342
    %v349 = vmul.f32 %v343, %v343
    %v350 = vmul.f32 %v344, %v344
    %v351 = vadd.f32 %v345, %v346
    %v352 = vadd.f32 %v351, %v347
    %v353 = vadd.f32 %v352, %v348
    %v354 = vadd.f32 %v353, %v349
    %v355 = vsel %vm295, %v350, 0.0
    %v356 = vadd.f32 %v354, %v355
    %357 = vadd.xlane.f32.xlu0 %v356
    %v358 = vpop.xlane.xlu0 %357
    %v359 = vadd.f32 %v338, %v358
    %v360 = vmul.f32 %v359, %v316
    %v361 = vadd.f32 %v360, 1e-05
    %v362 = vrsqrt.pop %v361
    %v363 = vmul.f32 %v362, %v361
    %v364 = vmul.f32 %v363, %v362
    %v365 = vmul.f32 0.5, %v364
    %v366 = vsub.f32 1.5, %v365
    %v367 = vmul.f32 %v362, %v366
    %vm368 = vweird.f32 %v361
    %vm369 = vweird.f32 %v362
    %vm370 = vmor %vm368, %vm369
    %v371 = vsel %vm370, %v362, %v367
    %v372 = vld [vmem:[%s2] sm:$0xff]
    %v373 = vmul.f32 %v371, %v372
    %v374 = vmul.f32 %v317, %v373
    %376 = vrot.lane.b32.xlu0 %v374, 1
    %v377 = vpop.permute.xlu0 %376
    %v379 = vsub.f32 %v372, %v377
    %381 = vset.pattern.permute.xlu0 0
    %382 = vperm.xlu0 %381, %v373
    %v383 = vpop.permute.xlu0 %382
    %v385 = vmul.f32 %v96, %v383
    %v386 = vmul.f32 %v109, %v383
    %v387 = vmul.f32 %v122, %v383
    %v388 = vmul.f32 %v135, %v383
    %v389 = vmul.f32 %v148, %v383
    %v390 = vmul.f32 %v161, %v383
    %392 = vset.pattern.permute.xlu0 1
    %393 = vperm.xlu0 %392, %v379
    %v394 = vpop.permute.xlu0 %393
    %v396 = vadd.f32 %v385, %v394
    %v397 = vadd.f32 %v386, %v394
    %v398 = vadd.f32 %v387, %v394
    %v399 = vadd.f32 %v388, %v394
    %v400 = vadd.f32 %v389, %v394
    %v401 = vadd.f32 %v390, %v394
    %v402 = vmax.f32 %v396, 0.0
    %v403 = vmax.f32 %v397, 0.0
    %v404 = vmax.f32 %v398, 0.0
    %v405 = vmax.f32 %v399, 0.0
    %v406 = vmax.f32 %v400, 0.0
    %v407 = vmax.f32 %v401, 0.0
    %v408 = vpack.c.bf16 %v403, %v402
    %v409 = vpack.c.bf16 %v405, %v404
    %v410 = vpack.c.bf16 %v407, %v406
    %411 = vst [vmem:[%s3] sm:$0xff] %v408
    %412 = vst [vmem:[%s3 + $0x8] sm:$0xff] %v409
    %vm413 = vcmask 293892
    %vm414 = vmor %vm413, %vm64
    %415 = vst.msk [vmem:[%s3 + $0x10] sm:$0xff] %vm414, %v410
    %v416 = vmul.f32 %v223, %v383
    %v417 = vmul.f32 %v236, %v383
    %v418 = vmul.f32 %v249, %v383
    %v419 = vmul.f32 %v262, %v383
    %v420 = vmul.f32 %v275, %v383
    %v421 = vmul.f32 %v288, %v383
    %v422 = vadd.f32 %v416, %v394
    %v423 = vadd.f32 %v417, %v394
    %v424 = vadd.f32 %v418, %v394
    %v425 = vadd.f32 %v419, %v394
    %v426 = vadd.f32 %v420, %v394
    %v427 = vadd.f32 %v421, %v394
    %v428 = vmax.f32 %v422, 0.0
    %v429 = vmax.f32 %v423, 0.0
    %v430 = vmax.f32 %v424, 0.0
    %v431 = vmax.f32 %v425, 0.0
    %v432 = vmax.f32 %v426, 0.0
    %v433 = vmax.f32 %v427, 0.0
    %v434 = vpack.c.bf16 %v429, %v428
    %v435 = vpack.c.bf16 %v431, %v430
    %v436 = vpack.c.bf16 %v433, %v432
    %s437 = scalar_lea.vmem %s3, 24
    %438 = vst [vmem:[%s437] sm:$0xff] %v434
    %439 = vst [vmem:[%s437 + $0x8] sm:$0xff] %v435
    %440 = vst.msk [vmem:[%s437 + $0x10] sm:$0xff] %vm414, %v436
    // Predicated region
    $region18: #{cnn_forward.2} parent=1 // pred_check
      _
    $region19: #{cnn_forward.2} parent=1 // pred_check_branch
      %442 = sbr.rel (0) target = $region21
    $region20: #{cnn_forward.2} parent=1 // pred_region
      _
    $region21: #{cnn_forward.2} parent=1 // pred_fallthru
      _
    // Predicated region
    $region22: #{cnn_forward.2} parent=1 // pred_check
      _
    $region23: #{cnn_forward.2} parent=1 // pred_check_branch
      %444 = sbr.rel (0) target = $region25
    $region24: #{cnn_forward.2} parent=1 // pred_region
      _
    $region25: #{cnn_forward.2} parent=1 // pred_fallthru
      _
    %445 = vsyncpa [#allocation3], 1

// kernel: cnn_forward.3
$region0: #{cnn_forward.3}
  #allocation0 [shape = 'u32[]', space=smem, size = 0x4, offset = 0x4, fixed_abs, tag = 'smem constant byte address 0x4 - core index']
  #allocation1 [shape = 'u32[72,128]{1,0:T(1,128)}', space=vmem, size = 0x9000, scoped, tag = 'internal scratch']
  %s0 = inlined_call_operand.vmem [shape: bf16[2,5408], index: 0, kind: input, shape index: {}]
  %s1 = inlined_call_operand.hbm [shape: s8[5408,1024], index: 1, kind: input, shape index: {}]
  %s2 = inlined_call_operand.hbm [shape: f32[1,1024], index: 2, kind: input, shape index: {}]
  %s3 = inlined_call_operand.hbm [shape: f32[1,1024], index: 3, kind: input, shape index: {}]
  %s4 = inlined_call_operand.hbm [shape: bf16[1024,128], index: 4, kind: input, shape index: {}]
  %s5 = inlined_call_operand.vmem [shape: f32[4,2,128], index: 5, kind: output, shape index: {}]
  %s6 = sld [smem:[#allocation0]]
  $region69: #{cnn_forward.3} parent=0
    _
  %s8 = ssub.s32 1, %s6
  %s9 = scalar_select 0, %s8, %s6
  $region1: #{cnn_forward.3} parent=0
    #allocation2 [shape = 'u8[2768896]{0}', space=vmem, size = 0x2a4000, scoped, tag = 'input window, operand 1']
    #allocation3 [shape = 's32[2]{0}', space=sflag, size = 0x8, scoped, tag = 'scoped memory for cnn_forward.3']
    #allocation4 [shape = 'u8[2048]{0}', space=vmem, size = 0x800, scoped, tag = 'input window, operand 2']
    #allocation5 [shape = 's32[2]{0}', space=sflag, size = 0x8, scoped, tag = 'scoped memory for cnn_forward.3']
    #allocation6 [shape = 'u8[2048]{0}', space=vmem, size = 0x800, scoped, tag = 'input window, operand 3']
    #allocation7 [shape = 'u8[131072]{0}', space=vmem, size = 0x20000, scoped, tag = 'input window, operand 4']
    #allocation8 [shape = 's32[2]{0}', space=sflag, size = 0x8, scoped, tag = 'scoped memory for cnn_forward.3']
    %10 = vsyncpa [#allocation3], 0
    %s11 = scalar_lea.sflag [#allocation3], 1
    %12 = vsyncpa %s11, 0
    %13 = vsyncpa [#allocation5], 0
    %s14 = scalar_lea.sflag [#allocation5], 1
    %15 = vsyncpa %s14, 0
    %16 = vsyncpa [#allocation8], 0
    %s17 = scalar_lea.sflag [#allocation8], 1
    %18 = vsyncpa %s17, 0
    loop: start=0, step=1, limit=6
    $region2: #{cnn_forward.3} parent=1 // loop_pre_header
      _
    $region3: #{cnn_forward.3} parent=1 // loop_header
      %s20 = sphi 0, %s24
      %p21 = scmp.ge.s32.totalorder %s20, 6
      %s28 = sphi 0, %s28
      %s30 = sphi 0, %s28
      %s31 = sphi 0, %s30
      %s45 = sphi 0, %s31
      %s51 = sphi 0, %s53
      %s54 = sphi 0, %s51
      %s55 = sphi 0, %s54
      %s71 = sphi 0, %s55
      %s77 = sphi 0, %s79
      %s80 = sphi 0, %s77
      %s81 = sphi 0, %s80
      %s97 = sphi 0, %s81
      %s103 = sphi 0, %s105
      %s106 = sphi 0, %s103
      %s107 = sphi 0, %s106
      %s123 = sphi 0, %s107
      %s129 = sphi 0, %s131
      %s132 = sphi 0, %s129
      %s133 = sphi 0, %s132
      %s149 = sphi 0, %s133
      %s155 = sphi 0, %s157
      %s158 = sphi 0, %s155
      %s159 = sphi 0, %s158
      %s175 = sphi 0, %s159
    $region4: #{cnn_forward.3} parent=1 // loop_header_branch
      %23 = sbr.rel (%p21) target = $region8
    $region5: #{cnn_forward.3} parent=1 // loop_body
      %s25 = ssub.s32 %s20, 1
      %s26 = ssub.s32 %s20, 2
      %s27 = sadd.s32 %s20, 1
      %s29 = sadd.s32 %s28, 1
      %p32 = scmp.eq.s32.totalorder %s20, 3
      %p33 = scmp.ne.s32.totalorder %s28, %s30
      %p34 = scmp.eq.s32.totalorder %s20, 0
      %p35 = por %p33, %p34
      %p36 = scmp.ne.s32.totalorder %s28, %s30
      %p37 = scmp.eq.s32.totalorder %s25, 3
      %p38 = por %p36, %p37
      %p39 = scmp.ne.s32.totalorder %s30, %s31
      %p40 = scmp.eq.s32.totalorder %s25, 0
      %p41 = por %p39, %p40
      %p42 = scmp.ne.s32.totalorder %s30, %s31
      %p43 = scmp.eq.s32.totalorder %s26, 3
      %p44 = por %p42, %p43
      %p46 = scmp.ne.s32.totalorder %s31, %s45
      %p47 = scmp.eq.s32.totalorder %s26, 0
      %p48 = por %p46, %p47
      %s49 = ssub.s32 %s20, %s27
      %p50 = scmp.eq.s32.totalorder %s49, 0
      %s52 = sadd.s32 %s51, 1
      %s53 = scalar_select %p50, %s51, %s52
      %p56 = pneg %p50
      %p57 = scmp.eq.s32.totalorder %s20, 3
      %p58 = por %p56, %p57
      %p59 = scmp.ne.s32.totalorder %s51, %s54
      %p60 = scmp.eq.s32.totalorder %s20, 0
      %p61 = por %p59, %p60
      %p62 = scmp.ne.s32.totalorder %s51, %s54
      %p63 = scmp.eq.s32.totalorder %s25, 3
      %p64 = por %p62, %p63
      %p65 = scmp.ne.s32.totalorder %s54, %s55
      %p66 = scmp.eq.s32.totalorder %s25, 0
      %p67 = por %p65, %p66
      %p68 = scmp.ne.s32.totalorder %s54, %s55
      %p69 = scmp.eq.s32.totalorder %s26, 3
      %p70 = por %p68, %p69
      %p72 = scmp.ne.s32.totalorder %s55, %s71
      %p73 = scmp.eq.s32.totalorder %s26, 0
      %p74 = por %p72, %p73
      %s75 = ssub.s32 %s20, %s27
      %p76 = scmp.eq.s32.totalorder %s75, 0
      %s78 = sadd.s32 %s77, 1
      %s79 = scalar_select %p76, %s77, %s78
      %p82 = pneg %p76
      %p83 = scmp.eq.s32.totalorder %s20, 3
      %p84 = por %p82, %p83
      %p85 = scmp.ne.s32.totalorder %s77, %s80
      %p86 = scmp.eq.s32.totalorder %s20, 0
      %p87 = por %p85, %p86
      %p88 = scmp.ne.s32.totalorder %s77, %s80
      %p89 = scmp.eq.s32.totalorder %s25, 3
      %p90 = por %p88, %p89
      %p91 = scmp.ne.s32.totalorder %s80, %s81
      %p92 = scmp.eq.s32.totalorder %s25, 0
      %p93 = por %p91, %p92
      %p94 = scmp.ne.s32.totalorder %s80, %s81
      %p95 = scmp.eq.s32.totalorder %s26, 3
      %p96 = por %p94, %p95
      %p98 = scmp.ne.s32.totalorder %s81, %s97
      %p99 = scmp.eq.s32.totalorder %s26, 0
      %p100 = por %p98, %p99
      %s101 = ssub.s32 %s20, %s27
      %p102 = scmp.eq.s32.totalorder %s101, 0
      %s104 = sadd.s32 %s103, 1
      %s105 = scalar_select %p102, %s103, %s104
      %p108 = pneg %p102
      %p109 = scmp.eq.s32.totalorder %s20, 3
      %p110 = por %p108, %p109
      %p111 = scmp.ne.s32.totalorder %s103, %s106
      %p112 = scmp.eq.s32.totalorder %s20, 0
      %p113 = por %p111, %p112
      %p114 = scmp.ne.s32.totalorder %s103, %s106
      %p115 = scmp.eq.s32.totalorder %s25, 3
      %p116 = por %p114, %p115
      %p117 = scmp.ne.s32.totalorder %s106, %s107
      %p118 = scmp.eq.s32.totalorder %s25, 0
      %p119 = por %p117, %p118
      %p120 = scmp.ne.s32.totalorder %s106, %s107
      %p121 = scmp.eq.s32.totalorder %s26, 3
      %p122 = por %p120, %p121
      %p124 = scmp.ne.s32.totalorder %s107, %s123
      %p125 = scmp.eq.s32.totalorder %s26, 0
      %p126 = por %p124, %p125
      %s127 = ssub.s32 %s20, %s27
      %p128 = scmp.eq.s32.totalorder %s127, 0
      %s130 = sadd.s32 %s129, 1
      %s131 = scalar_select %p128, %s129, %s130
      %p134 = pneg %p128
      %p135 = scmp.eq.s32.totalorder %s20, 3
      %p136 = por %p134, %p135
      %p137 = scmp.ne.s32.totalorder %s129, %s132
      %p138 = scmp.eq.s32.totalorder %s20, 0
      %p139 = por %p137, %p138
      %p140 = scmp.ne.s32.totalorder %s129, %s132
      %p141 = scmp.eq.s32.totalorder %s25, 3
      %p142 = por %p140, %p141
      %p143 = scmp.ne.s32.totalorder %s132, %s133
      %p144 = scmp.eq.s32.totalorder %s25, 0
      %p145 = por %p143, %p144
      %p146 = scmp.ne.s32.totalorder %s132, %s133
      %p147 = scmp.eq.s32.totalorder %s26, 3
      %p148 = por %p146, %p147
      %p150 = scmp.ne.s32.totalorder %s133, %s149
      %p151 = scmp.eq.s32.totalorder %s26, 0
      %p152 = por %p150, %p151
      %s153 = ssub.s32 %s20, %s27
      %p154 = scmp.eq.s32.totalorder %s153, 0
      %s156 = sadd.s32 %s155, 1
      %s157 = scalar_select %p154, %s155, %s156
      %p160 = pneg %p154
      %p161 = scmp.eq.s32.totalorder %s20, 3
      %p162 = por %p160, %p161
      %p163 = scmp.ne.s32.totalorder %s155, %s158
      %p164 = scmp.eq.s32.totalorder %s20, 0
      %p165 = por %p163, %p164
      %p166 = scmp.ne.s32.totalorder %s155, %s158
      %p167 = scmp.eq.s32.totalorder %s25, 3
      %p168 = por %p166, %p167
      %p169 = scmp.ne.s32.totalorder %s158, %s159
      %p170 = scmp.eq.s32.totalorder %s25, 0
      %p171 = por %p169, %p170
      %p172 = scmp.ne.s32.totalorder %s158, %s159
      %p173 = scmp.eq.s32.totalorder %s26, 3
      %p174 = por %p172, %p173
      %p176 = scmp.ne.s32.totalorder %s159, %s175
      %p177 = scmp.eq.s32.totalorder %s26, 0
      %p178 = por %p176, %p177
      %p179 = scmp.le.s32.totalorder 1, %s20
      %p180 = scmp.lt.s32.totalorder %s20, 5
      %p181 = pnand %p179, %p180
      %p182 = pneg %p181
      // Predicated region
      $region9: #{cnn_forward.3} parent=5 // pred_check
        _
      $region10: #{cnn_forward.3} parent=5 // pred_check_branch
        %184 = sbr.rel (%p181) target = $region12
      $region11: #{cnn_forward.3} parent=5 // pred_region
        %s185 = ssub.s32 %s20, 1
        // Predicated region
        $region13: #{cnn_forward.3} parent=11 // pred_check
          %p186 = pneg %p41
        $region14: #{cnn_forward.3} parent=11 // pred_check_branch
          %188 = sbr.rel (%p186) target = $region16
        $region15: #{cnn_forward.3} parent=11 // pred_region
          _
        $region16: #{cnn_forward.3} parent=11 // pred_fallthru
          _
      $region12: #{cnn_forward.3} parent=5 // pred_fallthru
        _
      %p189 = scmp.lt.s32.totalorder %s20, 4
      // Predicated region
      $region17: #{cnn_forward.3} parent=5 // pred_check
        %p190 = pneg %p189
      $region18: #{cnn_forward.3} parent=5 // pred_check_branch
        %192 = sbr.rel (%p190) target = $region20
      $region19: #{cnn_forward.3} parent=5 // pred_region
        // Predicated region
        $region21: #{cnn_forward.3} parent=19 // pred_check
          %p193 = pneg %p61
        $region22: #{cnn_forward.3} parent=19 // pred_check_branch
          %195 = sbr.rel (%p193) target = $region24
        $region23: #{cnn_forward.3} parent=19 // pred_region
          %s196 = sand.u32 %s51, 1
          %s197 = scalar_lea.sflag [#allocation3], %s196
          %s198 = sand.u32 %s51, 1
          %s199 = smul.addr %s198, 2704
          %s200 = scalar_lea.vmem [#allocation2], %s199
          %s201 = smul.u32 2, %s20
          %203 = vsyncadd %s197, 0
          %s204 = smul.addr %s201, 8
          %s205 = scalar_lea.hbm %s1, %s204
          %s206 = sshll.u32 %s205, 4
          %s207 = int_to_ptr.hbm [resolvable:$true] %s206
          %s208 = sshll.u32 %s200, 4
          %s209 = int_to_ptr.vmem [resolvable:$true] %s208
          %214 = dma.hbm_to_vmem [thread:$0]  %s207, 43264, %s209, %s197, 1024, 256, 16
        $region24: #{cnn_forward.3} parent=19 // pred_fallthru
          _
        // Predicated region
        $region25: #{cnn_forward.3} parent=19 // pred_check
          %p215 = pneg %p87
        $region26: #{cnn_forward.3} parent=19 // pred_check_branch
          %217 = sbr.rel (%p215) target = $region28
        $region27: #{cnn_forward.3} parent=19 // pred_region
          %s218 = sand.u32 %s20, 1
          %s219 = scalar_lea.sflag [#allocation5], %s218
          %s220 = sand.u32 %s77, 1
          %s221 = smul.addr %s220, 2
          %s222 = scalar_lea.vmem [#allocation4], %s221
          %s223 = smul.u32 2, %s20
          %225 = vsyncadd %s219, 0
          %s226 = scalar_lea.hbm %s2, %s223
          %s228 = sshll.u32 %s226, 4
          %s229 = int_to_ptr.hbm [resolvable:$true] %s228
          %s230 = sshll.u32 %s222, 4
          %s231 = int_to_ptr.vmem [resolvable:$true] %s230
          %233 = dma.hbm_to_vmem [thread:$0]  %s229, 32, %s231, %s219
        $region28: #{cnn_forward.3} parent=19 // pred_fallthru
          _
        // Predicated region
        $region29: #{cnn_forward.3} parent=19 // pred_check
          %p234 = pneg %p113
        $region30: #{cnn_forward.3} parent=19 // pred_check_branch
          %236 = sbr.rel (%p234) target = $region32
        $region31: #{cnn_forward.3} parent=19 // pred_region
          %s237 = sand.u32 %s20, 1
          %s238 = scalar_lea.sflag [#allocation5], %s237
          %s239 = sand.u32 %s103, 1
          %s240 = smul.addr %s239, 2
          %s241 = scalar_lea.vmem [#allocation6], %s240
          %s242 = smul.u32 2, %s20
          %244 = vsyncadd %s238, 0
          %s245 = scalar_lea.hbm %s3, %s242
          %s247 = sshll.u32 %s245, 4
          %s248 = int_to_ptr.hbm [resolvable:$true] %s247
          %s249 = sshll.u32 %s241, 4
          %s250 = int_to_ptr.vmem [resolvable:$true] %s249
          %252 = dma.hbm_to_vmem [thread:$0]  %s248, 32, %s250, %s238
        $region32: #{cnn_forward.3} parent=19 // pred_fallthru
          _
        // Predicated region
        $region33: #{cnn_forward.3} parent=19 // pred_check
          %p253 = pneg %p139
        $region34: #{cnn_forward.3} parent=19 // pred_check_branch
          %255 = sbr.rel (%p253) target = $region36
        $region35: #{cnn_forward.3} parent=19 // pred_region
          %s256 = sand.u32 %s129, 1
          %s257 = scalar_lea.sflag [#allocation8], %s256
          %s258 = sand.u32 %s129, 1
          %s259 = smul.addr %s258, 128
          %s260 = scalar_lea.vmem [#allocation7], %s259
          %s261 = smul.u32 32, %s20
          %263 = vsyncadd %s257, 0
          %s264 = smul.addr %s261, 4
          %s265 = scalar_lea.hbm %s4, %s264
          %s266 = sshll.u32 %s265, 4
          %s267 = int_to_ptr.hbm [resolvable:$true] %s266
          %s268 = sshll.u32 %s260, 4
          %s269 = int_to_ptr.vmem [resolvable:$true] %s268
          %274 = dma.hbm_to_vmem [thread:$0]  %s267, 2048, %s269, %s257, 64, 64, 4
        $region36: #{cnn_forward.3} parent=19 // pred_fallthru
          _
      $region20: #{cnn_forward.3} parent=5 // pred_fallthru
        _
      %p275 = scmp.le.s32.totalorder 1, %s20
      %p276 = scmp.lt.s32.totalorder %s20, 5
      %p277 = pnand %p275, %p276
      %p278 = pneg %p277
      // Predicated region
      $region37: #{cnn_forward.3} parent=5 // pred_check
        _
      $region38: #{cnn_forward.3} parent=5 // pred_check_branch
        %280 = sbr.rel (%p277) target = $region40
      $region39: #{cnn_forward.3} parent=5 // pred_region
        %s281 = ssub.s32 %s20, 1
        %s282 = sand.u32 %s54, 1
        %s283 = scalar_lea.sflag [#allocation3], %s282
        %s284 = sand.u32 %s54, 1
        %s285 = smul.addr %s284, 2704
        %s286 = scalar_lea.vmem [#allocation2], %s285
        // Predicated region
        $region41: #{cnn_forward.3} parent=39 // pred_check
          %p287 = pneg %p67
        $region42: #{cnn_forward.3} parent=39 // pred_check_branch
          %289 = sbr.rel (%p287) target = $region44
        $region43: #{cnn_forward.3} parent=39 // pred_region
          %291 = dma.done %s283, 43264
        $region44: #{cnn_forward.3} parent=39 // pred_fallthru
          _
        %s292 = sand.u32 %s25, 1
        %s293 = scalar_lea.sflag [#allocation5], %s292
        %s294 = sand.u32 %s80, 1
        %s295 = smul.addr %s294, 2
        %s296 = scalar_lea.vmem [#allocation4], %s295
        // Predicated region
        $region45: #{cnn_forward.3} parent=39 // pred_check
          %p297 = pneg %p93
        $region46: #{cnn_forward.3} parent=39 // pred_check_branch
          %299 = sbr.rel (%p297) target = $region48
        $region47: #{cnn_forward.3} parent=39 // pred_region
          %301 = dma.done %s293, 32
        $region48: #{cnn_forward.3} parent=39 // pred_fallthru
          _
        %s302 = sand.u32 %s25, 1
        %s303 = scalar_lea.sflag [#allocation5], %s302
        %s304 = sand.u32 %s106, 1
        %s305 = smul.addr %s304, 2
        %s306 = scalar_lea.vmem [#allocation6], %s305
        // Predicated region
        $region49: #{cnn_forward.3} parent=39 // pred_check
          %p307 = pneg %p119
        $region50: #{cnn_forward.3} parent=39 // pred_check_branch
          %309 = sbr.rel (%p307) target = $region52
        $region51: #{cnn_forward.3} parent=39 // pred_region
          %311 = dma.done %s303, 32
        $region52: #{cnn_forward.3} parent=39 // pred_fallthru
          _
        %s312 = sand.u32 %s132, 1
        %s313 = scalar_lea.sflag [#allocation8], %s312
        %s314 = sand.u32 %s132, 1
        %s315 = smul.addr %s314, 128
        %s316 = scalar_lea.vmem [#allocation7], %s315
        // Predicated region
        $region53: #{cnn_forward.3} parent=39 // pred_check
          %p317 = pneg %p145
        $region54: #{cnn_forward.3} parent=39 // pred_check_branch
          %319 = sbr.rel (%p317) target = $region56
        $region55: #{cnn_forward.3} parent=39 // pred_region
          %321 = dma.done %s313, 2048
        $region56: #{cnn_forward.3} parent=39 // pred_fallthru
          _
        %p322 = pneg %p41
        %p323 = pneg %p38
        %s324 = sand.u32 %s54, 1
        %s325 = scalar_lea.sflag [#allocation3], %s324
        %s326 = sand.u32 %s54, 1
        %s327 = smul.addr %s326, 2704
        %s328 = scalar_lea.vmem [#allocation2], %s327
        %p329 = pneg %p67
        %p330 = pneg %p64
        %s331 = sand.u32 %s25, 1
        %s332 = scalar_lea.sflag [#allocation5], %s331
        %s333 = sand.u32 %s80, 1
        %s334 = smul.addr %s333, 2
        %s335 = scalar_lea.vmem [#allocation4], %s334
        %p336 = pneg %p93
        %p337 = pneg %p90
        %s338 = sand.u32 %s25, 1
        %s339 = scalar_lea.sflag [#allocation5], %s338
        %s340 = sand.u32 %s106, 1
        %s341 = smul.addr %s340, 2
        %s342 = scalar_lea.vmem [#allocation6], %s341
        %p343 = pneg %p119
        %p344 = pneg %p116
        %s345 = sand.u32 %s132, 1
        %s346 = scalar_lea.sflag [#allocation8], %s345
        %s347 = sand.u32 %s132, 1
        %s348 = smul.addr %s347, 128
        %s349 = scalar_lea.vmem [#allocation7], %s348
        %p350 = pneg %p145
        %p351 = pneg %p142
        %p352 = pneg %p171
        %p353 = pneg %p168
        %p354 = scmp.lt.s32.totalorder %s25, 3
        %s355 = scalar_select %p354, %s25, 3
        %s356 = smul.addr %s355, 2
        %s357 = scalar_lea.vmem %s5, %s356
        %s358 = smul.u32 2, %s25
        %s359 = smul.u32 2, %s25
        %s360 = smul.u32 2, %s25
        %s361 = smul.u32 32, %s25
        %p362 = scmp.lt.s32.totalorder %s25, 3
        %s363 = scalar_select %p362, %s25, 3
        %s364 = smul.addr %s363, 2
        %s365 = scalar_lea.vmem %s5, %s364
        %v367 = vld [vmem:[%s286] sm:$0xff]
        %v368 = vld [vmem:[%s286 + $0x8] sm:$0xff]
        %v369 = vld [vmem:[%s286 + $0x10] sm:$0xff]
        %v370 = vld [vmem:[%s286 + $0x18] sm:$0xff]
        %v371 = vld [vmem:[%s286 + $0x20] sm:$0xff]
        %v372 = vld [vmem:[%s286 + $0x28] sm:$0xff]
        %v373 = vld [vmem:[%s286 + $0x30] sm:$0xff]
        %v374 = vld [vmem:[%s286 + $0x38] sm:$0xff]
        %v375 = vld [vmem:[%s286 + $0x40] sm:$0xff]
        %v376 = vld [vmem:[%s286 + $0x48] sm:$0xff]
        %v377 = vld [vmem:[%s286 + $0x50] sm:$0xff]
        %v378 = vld [vmem:[%s286 + $0x58] sm:$0xff]
        %v379 = vld [vmem:[%s286 + $0x60] sm:$0xff]
        %v380 = vld [vmem:[%s286 + $0x68] sm:$0xff]
        %v381 = vld [vmem:[%s286 + $0x70] sm:$0xff]
        %v382 = vld [vmem:[%s286 + $0x78] sm:$0xff]
        %v383 = vld [vmem:[%s286 + $0x80] sm:$0xff]
        %v384 = vld [vmem:[%s286 + $0x88] sm:$0xff]
        %v385 = vld [vmem:[%s286 + $0x90] sm:$0xff]
        %v386 = vld [vmem:[%s286 + $0x98] sm:$0xff]
        %v387 = vld [vmem:[%s286 + $0xa0] sm:$0xff]
        %v388 = vld [vmem:[%s286 + $0xa8] sm:$0xff]
        %v389 = vld [vmem:[%s286 + $0xb0] sm:$0xff]
        %v390 = vld [vmem:[%s286 + $0xb8] sm:$0xff]
        %v391 = vld [vmem:[%s286 + $0xc0] sm:$0xff]
        %v392 = vld [vmem:[%s286 + $0xc8] sm:$0xff]
        %v393 = vld [vmem:[%s286 + $0xd0] sm:$0xff]
        %v394 = vld [vmem:[%s286 + $0xd8] sm:$0xff]
        %v395 = vld [vmem:[%s286 + $0xe0] sm:$0xff]
        %v396 = vld [vmem:[%s286 + $0xe8] sm:$0xff]
        %v397 = vld [vmem:[%s286 + $0xf0] sm:$0xff]
        %v398 = vld [vmem:[%s286 + $0xf8] sm:$0xff]
        %v399 = vld [vmem:[%s286 + $0x100] sm:$0xff]
        %v400 = vld [vmem:[%s286 + $0x108] sm:$0xff]
        %v401 = vld [vmem:[%s286 + $0x110] sm:$0xff]
        %v402 = vld [vmem:[%s286 + $0x118] sm:$0xff]
        %v403 = vld [vmem:[%s286 + $0x120] sm:$0xff]
        %v404 = vld [vmem:[%s286 + $0x128] sm:$0xff]
        %v405 = vld [vmem:[%s286 + $0x130] sm:$0xff]
        %v406 = vld [vmem:[%s286 + $0x138] sm:$0xff]
        %v407 = vld [vmem:[%s286 + $0x140] sm:$0xff]
        %v408 = vld [vmem:[%s286 + $0x148] sm:$0xff]
        %v409 = vld [vmem:[%s286 + $0x150] sm:$0xff]
        %v410 = vld [vmem:[%s286 + $0x158] sm:$0xff]
        %v411 = vld [vmem:[%s286 + $0x160] sm:$0xff]
        %v412 = vld [vmem:[%s286 + $0x168] sm:$0xff]
        %v413 = vld [vmem:[%s286 + $0x170] sm:$0xff]
        %v414 = vld [vmem:[%s286 + $0x178] sm:$0xff]
        %v415 = vld [vmem:[%s286 + $0x180] sm:$0xff]
        %v416 = vld [vmem:[%s286 + $0x188] sm:$0xff]
        %v417 = vld [vmem:[%s286 + $0x190] sm:$0xff]
        %v418 = vld [vmem:[%s286 + $0x198] sm:$0xff]
        %v419 = vld [vmem:[%s286 + $0x1a0] sm:$0xff]
        %v420 = vld [vmem:[%s286 + $0x1a8] sm:$0xff]
        %v421 = vld [vmem:[%s286 + $0x1b0] sm:$0xff]
        %v422 = vld [vmem:[%s286 + $0x1b8] sm:$0xff]
        %v423 = vld [vmem:[%s286 + $0x1c0] sm:$0xff]
        %v424 = vld [vmem:[%s286 + $0x1c8] sm:$0xff]
        %v425 = vld [vmem:[%s286 + $0x1d0] sm:$0xff]
        %v426 = vld [vmem:[%s286 + $0x1d8] sm:$0xff]
        %v427 = vld [vmem:[%s286 + $0x1e0] sm:$0xff]
        %v428 = vld [vmem:[%s286 + $0x1e8] sm:$0xff]
        %v429 = vld [vmem:[%s286 + $0x1f0] sm:$0xff]
        %v430 = vld [vmem:[%s286 + $0x1f8] sm:$0xff]
        %v431 = vld [vmem:[%s286 + $0x200] sm:$0xff]
        %v432 = vld [vmem:[%s286 + $0x208] sm:$0xff]
        %v433 = vld [vmem:[%s286 + $0x210] sm:$0xff]
        %v434 = vld [vmem:[%s286 + $0x218] sm:$0xff]
        %v435 = vld [vmem:[%s286 + $0x220] sm:$0xff]
        %v436 = vld [vmem:[%s286 + $0x228] sm:$0xff]
        %v437 = vld [vmem:[%s286 + $0x230] sm:$0xff]
        %v438 = vld [vmem:[%s286 + $0x238] sm:$0xff]
        %v439 = vld [vmem:[%s286 + $0x240] sm:$0xff]
        %v440 = vld [vmem:[%s286 + $0x248] sm:$0xff]
        %v441 = vld [vmem:[%s286 + $0x250] sm:$0xff]
        %v442 = vld [vmem:[%s286 + $0x258] sm:$0xff]
        %v443 = vld [vmem:[%s286 + $0x260] sm:$0xff]
        %v444 = vld [vmem:[%s286 + $0x268] sm:$0xff]
        %v445 = vld [vmem:[%s286 + $0x270] sm:$0xff]
        %v446 = vld [vmem:[%s286 + $0x278] sm:$0xff]
        %v447 = vld [vmem:[%s286 + $0x280] sm:$0xff]
        %v448 = vld [vmem:[%s286 + $0x288] sm:$0xff]
        %v449 = vld [vmem:[%s286 + $0x290] sm:$0xff]
        %v450 = vld [vmem:[%s286 + $0x298] sm:$0xff]
        %v451 = vld [vmem:[%s286 + $0x2a0] sm:$0xff]
        %v452 = vld [vmem:[%s286 + $0x2a8] sm:$0xff]
        %v453 = vld [vmem:[%s286 + $0x2b0] sm:$0xff]
        %v454 = vld [vmem:[%s286 + $0x2b8] sm:$0xff]
        %v455 = vld [vmem:[%s286 + $0x2c0] sm:$0xff]
        %v456 = vld [vmem:[%s286 + $0x2c8] sm:$0xff]
        %v457 = vld [vmem:[%s286 + $0x2d0] sm:$0xff]
        %v458 = vld [vmem:[%s286 + $0x2d8] sm:$0xff]
        %v459 = vld [vmem:[%s286 + $0x2e0] sm:$0xff]
        %v460 = vld [vmem:[%s286 + $0x2e8] sm:$0xff]
        %v461 = vld [vmem:[%s286 + $0x2f0] sm:$0xff]
        %v462 = vld [vmem:[%s286 + $0x2f8] sm:$0xff]
        %v463 = vld [vmem:[%s286 + $0x300] sm:$0xff]
        %v464 = vld [vmem:[%s286 + $0x308] sm:$0xff]
        %v465 = vld [vmem:[%s286 + $0x310] sm:$0xff]
        %v466 = vld [vmem:[%s286 + $0x318] sm:$0xff]
        %v467 = vld [vmem:[%s286 + $0x320] sm:$0xff]
        %v468 = vld [vmem:[%s286 + $0x328] sm:$0xff]
        %v469 = vld [vmem:[%s286 + $0x330] sm:$0xff]
        %v470 = vld [vmem:[%s286 + $0x338] sm:$0xff]
        %v471 = vld [vmem:[%s286 + $0x340] sm:$0xff]
        %v472 = vld [vmem:[%s286 + $0x348] sm:$0xff]
        %v473 = vld [vmem:[%s286 + $0x350] sm:$0xff]
        %v474 = vld [vmem:[%s286 + $0x358] sm:$0xff]
        %v475 = vld [vmem:[%s286 + $0x360] sm:$0xff]
        %v476 = vld [vmem:[%s286 + $0x368] sm:$0xff]
        %v477 = vld [vmem:[%s286 + $0x370] sm:$0xff]
        %v478 = vld [vmem:[%s286 + $0x378] sm:$0xff]
        %v479 = vld [vmem:[%s286 + $0x380] sm:$0xff]
        %v480 = vld [vmem:[%s286 + $0x388] sm:$0xff]
        %v481 = vld [vmem:[%s286 + $0x390] sm:$0xff]
        %v482 = vld [vmem:[%s286 + $0x398] sm:$0xff]
        %v483 = vld [vmem:[%s286 + $0x3a0] sm:$0xff]
        %v484 = vld [vmem:[%s286 + $0x3a8] sm:$0xff]
        %v485 = vld [vmem:[%s286 + $0x3b0] sm:$0xff]
        %v486 = vld [vmem:[%s286 + $0x3b8] sm:$0xff]
        %v487 = vld [vmem:[%s286 + $0x3c0] sm:$0xff]
        %v488 = vld [vmem:[%s286 + $0x3c8] sm:$0xff]
        %v489 = vld [vmem:[%s286 + $0x3d0] sm:$0xff]
        %v490 = vld [vmem:[%s286 + $0x3d8] sm:$0xff]
        %v491 = vld [vmem:[%s286 + $0x3e0] sm:$0xff]
        %v492 = vld [vmem:[%s286 + $0x3e8] sm:$0xff]
        %v493 = vld [vmem:[%s286 + $0x3f0] sm:$0xff]
        %v494 = vld [vmem:[%s286 + $0x3f8] sm:$0xff]
        %v495 = vld [vmem:[%s286 + $0x400] sm:$0xff]
        %v496 = vld [vmem:[%s286 + $0x408] sm:$0xff]
        %v497 = vld [vmem:[%s286 + $0x410] sm:$0xff]
        %v498 = vld [vmem:[%s286 + $0x418] sm:$0xff]
        %v499 = vld [vmem:[%s286 + $0x420] sm:$0xff]
        %v500 = vld [vmem:[%s286 + $0x428] sm:$0xff]
        %v501 = vld [vmem:[%s286 + $0x430] sm:$0xff]
        %v502 = vld [vmem:[%s286 + $0x438] sm:$0xff]
        %v503 = vld [vmem:[%s286 + $0x440] sm:$0xff]
        %v504 = vld [vmem:[%s286 + $0x448] sm:$0xff]
        %v505 = vld [vmem:[%s286 + $0x450] sm:$0xff]
        %v506 = vld [vmem:[%s286 + $0x458] sm:$0xff]
        %v507 = vld [vmem:[%s286 + $0x460] sm:$0xff]
        %v508 = vld [vmem:[%s286 + $0x468] sm:$0xff]
        %v509 = vld [vmem:[%s286 + $0x470] sm:$0xff]
        %v510 = vld [vmem:[%s286 + $0x478] sm:$0xff]
        %v511 = vld [vmem:[%s286 + $0x480] sm:$0xff]
        %v512 = vld [vmem:[%s286 + $0x488] sm:$0xff]
        %v513 = vld [vmem:[%s286 + $0x490] sm:$0xff]
        %v514 = vld [vmem:[%s286 + $0x498] sm:$0xff]
        %v515 = vld [vmem:[%s286 + $0x4a0] sm:$0xff]
        %v516 = vld [vmem:[%s286 + $0x4a8] sm:$0xff]
        %v517 = vld [vmem:[%s286 + $0x4b0] sm:$0xff]
        %v518 = vld [vmem:[%s286 + $0x4b8] sm:$0xff]
        %v519 = vld [vmem:[%s286 + $0x4c0] sm:$0xff]
        %v520 = vld [vmem:[%s286 + $0x4c8] sm:$0xff]
        %v521 = vld [vmem:[%s286 + $0x4d0] sm:$0xff]
        %v522 = vld [vmem:[%s286 + $0x4d8] sm:$0xff]
        %v523 = vld [vmem:[%s286 + $0x4e0] sm:$0xff]
        %v524 = vld [vmem:[%s286 + $0x4e8] sm:$0xff]
        %v525 = vld [vmem:[%s286 + $0x4f0] sm:$0xff]
        %v526 = vld [vmem:[%s286 + $0x4f8] sm:$0xff]
        %v527 = vld [vmem:[%s286 + $0x500] sm:$0xff]
        %v528 = vld [vmem:[%s286 + $0x508] sm:$0xff]
        %v529 = vld [vmem:[%s286 + $0x510] sm:$0xff]
        %v530 = vld [vmem:[%s286 + $0x518] sm:$0xff]
        %v531 = vld [vmem:[%s286 + $0x520] sm:$0xff]
        %v532 = vld [vmem:[%s286 + $0x528] sm:$0xff]
        %v533 = vld [vmem:[%s286 + $0x530] sm:$0xff]
        %v534 = vld [vmem:[%s286 + $0x538] sm:$0xff]
        %v535 = vld [vmem:[%s286 + $0x540] sm:$0xff]
        %v536 = vld [vmem:[%s286 + $0x548] sm:$0xff]
        %v537 = vld [vmem:[%s286 + $0x550] sm:$0xff]
        %v538 = vld [vmem:[%s286 + $0x558] sm:$0xff]
        %v539 = vld [vmem:[%s286 + $0x560] sm:$0xff]
        %v540 = vld [vmem:[%s286 + $0x568] sm:$0xff]
        %v541 = vld [vmem:[%s286 + $0x570] sm:$0xff]
        %v542 = vld [vmem:[%s286 + $0x578] sm:$0xff]
        %v543 = vld [vmem:[%s286 + $0x580] sm:$0xff]
        %v544 = vld [vmem:[%s286 + $0x588] sm:$0xff]
        %v545 = vld [vmem:[%s286 + $0x590] sm:$0xff]
        %v546 = vld [vmem:[%s286 + $0x598] sm:$0xff]
        %v547 = vld [vmem:[%s286 + $0x5a0] sm:$0xff]
        %v548 = vld [vmem:[%s286 + $0x5a8] sm:$0xff]
        %v549 = vld [vmem:[%s286 + $0x5b0] sm:$0xff]
        %v550 = vld [vmem:[%s286 + $0x5b8] sm:$0xff]
        %v551 = vld [vmem:[%s286 + $0x5c0] sm:$0xff]
        %v552 = vld [vmem:[%s286 + $0x5c8] sm:$0xff]
        %v553 = vld [vmem:[%s286 + $0x5d0] sm:$0xff]
        %v554 = vld [vmem:[%s286 + $0x5d8] sm:$0xff]
        %v555 = vld [vmem:[%s286 + $0x5e0] sm:$0xff]
        %v556 = vld [vmem:[%s286 + $0x5e8] sm:$0xff]
        %v557 = vld [vmem:[%s286 + $0x5f0] sm:$0xff]
        %v558 = vld [vmem:[%s286 + $0x5f8] sm:$0xff]
        %v559 = vld [vmem:[%s286 + $0x600] sm:$0xff]
        %v560 = vld [vmem:[%s286 + $0x608] sm:$0xff]
        %v561 = vld [vmem:[%s286 + $0x610] sm:$0xff]
        %v562 = vld [vmem:[%s286 + $0x618] sm:$0xff]
        %v563 = vld [vmem:[%s286 + $0x620] sm:$0xff]
        %v564 = vld [vmem:[%s286 + $0x628] sm:$0xff]
        %v565 = vld [vmem:[%s286 + $0x630] sm:$0xff]
        %v566 = vld [vmem:[%s286 + $0x638] sm:$0xff]
        %v567 = vld [vmem:[%s286 + $0x640] sm:$0xff]
        %v568 = vld [vmem:[%s286 + $0x648] sm:$0xff]
        %v569 = vld [vmem:[%s286 + $0x650] sm:$0xff]
        %v570 = vld [vmem:[%s286 + $0x658] sm:$0xff]
        %v571 = vld [vmem:[%s286 + $0x660] sm:$0xff]
        %v572 = vld [vmem:[%s286 + $0x668] sm:$0xff]
        %v573 = vld [vmem:[%s286 + $0x670] sm:$0xff]
        %v574 = vld [vmem:[%s286 + $0x678] sm:$0xff]
        %v575 = vld [vmem:[%s286 + $0x680] sm:$0xff]
        %v576 = vld [vmem:[%s286 + $0x688] sm:$0xff]
        %v577 = vld [vmem:[%s286 + $0x690] sm:$0xff]
        %v578 = vld [vmem:[%s286 + $0x698] sm:$0xff]
        %v579 = vld [vmem:[%s286 + $0x6a0] sm:$0xff]
        %v580 = vld [vmem:[%s286 + $0x6a8] sm:$0xff]
        %v581 = vld [vmem:[%s286 + $0x6b0] sm:$0xff]
        %v582 = vld [vmem:[%s286 + $0x6b8] sm:$0xff]
        %v583 = vld [vmem:[%s286 + $0x6c0] sm:$0xff]
        %v584 = vld [vmem:[%s286 + $0x6c8] sm:$0xff]
        %v585 = vld [vmem:[%s286 + $0x6d0] sm:$0xff]
        %v586 = vld [vmem:[%s286 + $0x6d8] sm:$0xff]
        %v587 = vld [vmem:[%s286 + $0x6e0] sm:$0xff]
        %v588 = vld [vmem:[%s286 + $0x6e8] sm:$0xff]
        %v589 = vld [vmem:[%s286 + $0x6f0] sm:$0xff]
        %v590 = vld [vmem:[%s286 + $0x6f8] sm:$0xff]
        %v591 = vld [vmem:[%s286 + $0x700] sm:$0xff]
        %v592 = vld [vmem:[%s286 + $0x708] sm:$0xff]
        %v593 = vld [vmem:[%s286 + $0x710] sm:$0xff]
        %v594 = vld [vmem:[%s286 + $0x718] sm:$0xff]
        %v595 = vld [vmem:[%s286 + $0x720] sm:$0xff]
        %v596 = vld [vmem:[%s286 + $0x728] sm:$0xff]
        %v597 = vld [vmem:[%s286 + $0x730] sm:$0xff]
        %v598 = vld [vmem:[%s286 + $0x738] sm:$0xff]
        %v599 = vld [vmem:[%s286 + $0x740] sm:$0xff]
        %v600 = vld [vmem:[%s286 + $0x748] sm:$0xff]
        %v601 = vld [vmem:[%s286 + $0x750] sm:$0xff]
        %v602 = vld [vmem:[%s286 + $0x758] sm:$0xff]
        %v603 = vld [vmem:[%s286 + $0x760] sm:$0xff]
        %v604 = vld [vmem:[%s286 + $0x768] sm:$0xff]
        %v605 = vld [vmem:[%s286 + $0x770] sm:$0xff]
        %v606 = vld [vmem:[%s286 + $0x778] sm:$0xff]
        %v607 = vld [vmem:[%s286 + $0x780] sm:$0xff]
        %v608 = vld [vmem:[%s286 + $0x788] sm:$0xff]
        %v609 = vld [vmem:[%s286 + $0x790] sm:$0xff]
        %v610 = vld [vmem:[%s286 + $0x798] sm:$0xff]
        %v611 = vld [vmem:[%s286 + $0x7a0] sm:$0xff]
        %v612 = vld [vmem:[%s286 + $0x7a8] sm:$0xff]
        %v613 = vld [vmem:[%s286 + $0x7b0] sm:$0xff]
        %v614 = vld [vmem:[%s286 + $0x7b8] sm:$0xff]
        %v615 = vld [vmem:[%s286 + $0x7c0] sm:$0xff]
        %v616 = vld [vmem:[%s286 + $0x7c8] sm:$0xff]
        %v617 = vld [vmem:[%s286 + $0x7d0] sm:$0xff]
        %v618 = vld [vmem:[%s286 + $0x7d8] sm:$0xff]
        %v619 = vld [vmem:[%s286 + $0x7e0] sm:$0xff]
        %v620 = vld [vmem:[%s286 + $0x7e8] sm:$0xff]
        %v621 = vld [vmem:[%s286 + $0x7f0] sm:$0xff]
        %v622 = vld [vmem:[%s286 + $0x7f8] sm:$0xff]
        %v623 = vld [vmem:[%s286 + $0x800] sm:$0xff]
        %v624 = vld [vmem:[%s286 + $0x808] sm:$0xff]
        %v625 = vld [vmem:[%s286 + $0x810] sm:$0xff]
        %v626 = vld [vmem:[%s286 + $0x818] sm:$0xff]
        %v627 = vld [vmem:[%s286 + $0x820] sm:$0xff]
        %v628 = vld [vmem:[%s286 + $0x828] sm:$0xff]
        %v629 = vld [vmem:[%s286 + $0x830] sm:$0xff]
        %v630 = vld [vmem:[%s286 + $0x838] sm:$0xff]
        %v631 = vld [vmem:[%s286 + $0x840] sm:$0xff]
        %v632 = vld [vmem:[%s286 + $0x848] sm:$0xff]
        %v633 = vld [vmem:[%s286 + $0x850] sm:$0xff]
        %v634 = vld [vmem:[%s286 + $0x858] sm:$0xff]
        %v635 = vld [vmem:[%s286 + $0x860] sm:$0xff]
        %v636 = vld [vmem:[%s286 + $0x868] sm:$0xff]
        %v637 = vld [vmem:[%s286 + $0x870] sm:$0xff]
        %v638 = vld [vmem:[%s286 + $0x878] sm:$0xff]
        %v639 = vld [vmem:[%s286 + $0x880] sm:$0xff]
        %v640 = vld [vmem:[%s286 + $0x888] sm:$0xff]
        %v641 = vld [vmem:[%s286 + $0x890] sm:$0xff]
        %v642 = vld [vmem:[%s286 + $0x898] sm:$0xff]
        %v643 = vld [vmem:[%s286 + $0x8a0] sm:$0xff]
        %v644 = vld [vmem:[%s286 + $0x8a8] sm:$0xff]
        %v645 = vld [vmem:[%s286 + $0x8b0] sm:$0xff]
        %v646 = vld [vmem:[%s286 + $0x8b8] sm:$0xff]
        %v647 = vld [vmem:[%s286 + $0x8c0] sm:$0xff]
        %v648 = vld [vmem:[%s286 + $0x8c8] sm:$0xff]
        %v649 = vld [vmem:[%s286 + $0x8d0] sm:$0xff]
        %v650 = vld [vmem:[%s286 + $0x8d8] sm:$0xff]
        %v651 = vld [vmem:[%s286 + $0x8e0] sm:$0xff]
        %v652 = vld [vmem:[%s286 + $0x8e8] sm:$0xff]
        %v653 = vld [vmem:[%s286 + $0x8f0] sm:$0xff]
        %v654 = vld [vmem:[%s286 + $0x8f8] sm:$0xff]
        %v655 = vld [vmem:[%s286 + $0x900] sm:$0xff]
        %v656 = vld [vmem:[%s286 + $0x908] sm:$0xff]
        %v657 = vld [vmem:[%s286 + $0x910] sm:$0xff]
        %v658 = vld [vmem:[%s286 + $0x918] sm:$0xff]
        %v659 = vld [vmem:[%s286 + $0x920] sm:$0xff]
        %v660 = vld [vmem:[%s286 + $0x928] sm:$0xff]
        %v661 = vld [vmem:[%s286 + $0x930] sm:$0xff]
        %v662 = vld [vmem:[%s286 + $0x938] sm:$0xff]
        %v663 = vld [vmem:[%s286 + $0x940] sm:$0xff]
        %v664 = vld [vmem:[%s286 + $0x948] sm:$0xff]
        %v665 = vld [vmem:[%s286 + $0x950] sm:$0xff]
        %v666 = vld [vmem:[%s286 + $0x958] sm:$0xff]
        %v667 = vld [vmem:[%s286 + $0x960] sm:$0xff]
        %v668 = vld [vmem:[%s286 + $0x968] sm:$0xff]
        %v669 = vld [vmem:[%s286 + $0x970] sm:$0xff]
        %v670 = vld [vmem:[%s286 + $0x978] sm:$0xff]
        %v671 = vld [vmem:[%s286 + $0x980] sm:$0xff]
        %v672 = vld [vmem:[%s286 + $0x988] sm:$0xff]
        %v673 = vld [vmem:[%s286 + $0x990] sm:$0xff]
        %v674 = vld [vmem:[%s286 + $0x998] sm:$0xff]
        %v675 = vld [vmem:[%s286 + $0x9a0] sm:$0xff]
        %v676 = vld [vmem:[%s286 + $0x9a8] sm:$0xff]
        %v677 = vld [vmem:[%s286 + $0x9b0] sm:$0xff]
        %v678 = vld [vmem:[%s286 + $0x9b8] sm:$0xff]
        %v679 = vld [vmem:[%s286 + $0x9c0] sm:$0xff]
        %v680 = vld [vmem:[%s286 + $0x9c8] sm:$0xff]
        %v681 = vld [vmem:[%s286 + $0x9d0] sm:$0xff]
        %v682 = vld [vmem:[%s286 + $0x9d8] sm:$0xff]
        %v683 = vld [vmem:[%s286 + $0x9e0] sm:$0xff]
        %v684 = vld [vmem:[%s286 + $0x9e8] sm:$0xff]
        %v685 = vld [vmem:[%s286 + $0x9f0] sm:$0xff]
        %v686 = vld [vmem:[%s286 + $0x9f8] sm:$0xff]
        %v687 = vld [vmem:[%s286 + $0xa00] sm:$0xff]
        %v688 = vld [vmem:[%s286 + $0xa08] sm:$0xff]
        %v689 = vld [vmem:[%s286 + $0xa10] sm:$0xff]
        %v690 = vld [vmem:[%s286 + $0xa18] sm:$0xff]
        %v691 = vld [vmem:[%s286 + $0xa20] sm:$0xff]
        %v692 = vld [vmem:[%s286 + $0xa28] sm:$0xff]
        %v693 = vld [vmem:[%s286 + $0xa30] sm:$0xff]
        %v694 = vld [vmem:[%s286 + $0xa38] sm:$0xff]
        %v695 = vld [vmem:[%s286 + $0xa40] sm:$0xff]
        %v696 = vld [vmem:[%s286 + $0xa48] sm:$0xff]
        %v697 = vld [vmem:[%s286 + $0xa50] sm:$0xff]
        %v698 = vld [vmem:[%s286 + $0xa58] sm:$0xff]
        %v699 = vld [vmem:[%s286 + $0xa60] sm:$0xff]
        %v700 = vld [vmem:[%s286 + $0xa68] sm:$0xff]
        %v701 = vld [vmem:[%s286 + $0xa70] sm:$0xff]
        %v702 = vld [vmem:[%s286 + $0xa78] sm:$0xff]
        %v703 = vld [vmem:[%s286 + $0xa80] sm:$0xff]
        %v704 = vld [vmem:[%s286 + $0xa88] sm:$0xff]
        %v705 = vunpack.c.0.s8 %v367
        %v706 = vunpack.c.0.s8 %v368
        %v707 = vunpack.c.1.s8 %v367
        %v708 = vunpack.c.1.s8 %v368
        %v709 = vunpack.c.2.s8 %v367
        %v710 = vunpack.c.2.s8 %v368
        %v711 = vunpack.c.3.s8 %v367
        %v712 = vunpack.c.3.s8 %v368
        %v713 = vunpack.c.0.s8 %v369
        %v714 = vunpack.c.0.s8 %v370
        %v715 = vunpack.c.1.s8 %v369
        %v716 = vunpack.c.1.s8 %v370
        %v717 = vunpack.c.2.s8 %v369
        %v718 = vunpack.c.2.s8 %v370
        %v719 = vunpack.c.3.s8 %v369
        %v720 = vunpack.c.3.s8 %v370
        %v721 = vunpack.c.0.s8 %v371
        %v722 = vunpack.c.0.s8 %v372
        %v723 = vunpack.c.1.s8 %v371
        %v724 = vunpack.c.1.s8 %v372
        %v725 = vunpack.c.2.s8 %v371
        %v726 = vunpack.c.2.s8 %v372
        %v727 = vunpack.c.3.s8 %v371
        %v728 = vunpack.c.3.s8 %v372
        %v729 = vunpack.c.0.s8 %v373
        %v730 = vunpack.c.0.s8 %v374
        %v731 = vunpack.c.1.s8 %v373
        %v732 = vunpack.c.1.s8 %v374
        %v733 = vunpack.c.2.s8 %v373
        %v734 = vunpack.c.2.s8 %v374
        %v735 = vunpack.c.3.s8 %v373
        %v736 = vunpack.c.3.s8 %v374
        %v737 = vunpack.c.0.s8 %v375
        %v738 = vunpack.c.0.s8 %v376
        %v739 = vunpack.c.1.s8 %v375
        %v740 = vunpack.c.1.s8 %v376
        %v741 = vunpack.c.2.s8 %v375
        %v742 = vunpack.c.2.s8 %v376
        %v743 = vunpack.c.3.s8 %v375
        %v744 = vunpack.c.3.s8 %v376
        %v745 = vunpack.c.0.s8 %v377
        %v746 = vunpack.c.0.s8 %v378
        %v747 = vunpack.c.1.s8 %v377
        %v748 = vunpack.c.1.s8 %v378
        %v749 = vunpack.c.2.s8 %v377
        %v750 = vunpack.c.2.s8 %v378
        %v751 = vunpack.c.3.s8 %v377
        %v752 = vunpack.c.3.s8 %v378
        %v753 = vunpack.c.0.s8 %v379
        %v754 = vunpack.c.0.s8 %v380
        %v755 = vunpack.c.1.s8 %v379
        %v756 = vunpack.c.1.s8 %v380
        %v757 = vunpack.c.2.s8 %v379
        %v758 = vunpack.c.2.s8 %v380
        %v759 = vunpack.c.3.s8 %v379
        %v760 = vunpack.c.3.s8 %v380
        %v761 = vunpack.c.0.s8 %v381
        %v762 = vunpack.c.0.s8 %v382
        %v763 = vunpack.c.1.s8 %v381
        %v764 = vunpack.c.1.s8 %v382
        %v765 = vunpack.c.2.s8 %v381
        %v766 = vunpack.c.2.s8 %v382
        %v767 = vunpack.c.3.s8 %v381
        %v768 = vunpack.c.3.s8 %v382
        %v769 = vunpack.c.0.s8 %v383
        %v770 = vunpack.c.0.s8 %v384
        %v771 = vunpack.c.1.s8 %v383
        %v772 = vunpack.c.1.s8 %v384
        %v773 = vunpack.c.2.s8 %v383
        %v774 = vunpack.c.2.s8 %v384
        %v775 = vunpack.c.3.s8 %v383
        %v776 = vunpack.c.3.s8 %v384
        %v777 = vunpack.c.0.s8 %v385
        %v778 = vunpack.c.0.s8 %v386
        %v779 = vunpack.c.1.s8 %v385
        %v780 = vunpack.c.1.s8 %v386
        %v781 = vunpack.c.2.s8 %v385
        %v782 = vunpack.c.2.s8 %v386
        %v783 = vunpack.c.3.s8 %v385
        %v784 = vunpack.c.3.s8 %v386
        %v785 = vunpack.c.0.s8 %v387
        %v786 = vunpack.c.0.s8 %v388
        %v787 = vunpack.c.1.s8 %v387
        %v788 = vunpack.c.1.s8 %v388
        %v789 = vunpack.c.2.s8 %v387
        %v790 = vunpack.c.2.s8 %v388
        %v791 = vunpack.c.3.s8 %v387
        %v792 = vunpack.c.3.s8 %v388
        %v793 = vunpack.c.0.s8 %v389
        %v794 = vunpack.c.0.s8 %v390
        %v795 = vunpack.c.1.s8 %v389
        %v796 = vunpack.c.1.s8 %v390
        %v797 = vunpack.c.2.s8 %v389
        %v798 = vunpack.c.2.s8 %v390
        %v799 = vunpack.c.3.s8 %v389
        %v800 = vunpack.c.3.s8 %v390
        %v801 = vunpack.c.0.s8 %v391
        %v802 = vunpack.c.0.s8 %v392
        %v803 = vunpack.c.1.s8 %v391
        %v804 = vunpack.c.1.s8 %v392
        %v805 = vunpack.c.2.s8 %v391
        %v806 = vunpack.c.2.s8 %v392
        %v807 = vunpack.c.3.s8 %v391
        %v808 = vunpack.c.3.s8 %v392
        %v809 = vunpack.c.0.s8 %v393
        %v810 = vunpack.c.0.s8 %v394
        %v811 = vunpack.c.1.s8 %v393
        %v812 = vunpack.c.1.s8 %v394
        %v813 = vunpack.c.2.s8 %v393
        %v814 = vunpack.c.2.s8 %v394
        %v815 = vunpack.c.3.s8 %v393
        %v816 = vunpack.c.3.s8 %v394
        %v817 = vunpack.c.0.s8 %v395
        %v818 = vunpack.c.0.s8 %v396
        %v819 = vunpack.c.1.s8 %v395
        %v820 = vunpack.c.1.s8 %v396
        %v821 = vunpack.c.2.s8 %v395
        %v822 = vunpack.c.2.s8 %v396
        %v823 = vunpack.c.3.s8 %v395
        %v824 = vunpack.c.3.s8 %v396
        %v825 = vunpack.c.0.s8 %v397
        %v826 = vunpack.c.0.s8 %v398
        %v827 = vunpack.c.1.s8 %v397
        %v828 = vunpack.c.1.s8 %v398
        %v829 = vunpack.c.2.s8 %v397
        %v830 = vunpack.c.2.s8 %v398
        %v831 = vunpack.c.3.s8 %v397
        %v832 = vunpack.c.3.s8 %v398
        %v833 = vunpack.c.0.s8 %v399
        %v834 = vunpack.c.0.s8 %v400
        %v835 = vunpack.c.1.s8 %v399
        %v836 = vunpack.c.1.s8 %v400
        %v837 = vunpack.c.2.s8 %v399
        %v838 = vunpack.c.2.s8 %v400
        %v839 = vunpack.c.3.s8 %v399
        %v840 = vunpack.c.3.s8 %v400
        %v841 = vunpack.c.0.s8 %v401
        %v842 = vunpack.c.0.s8 %v402
        %v843 = vunpack.c.1.s8 %v401
        %v844 = vunpack.c.1.s8 %v402
        %v845 = vunpack.c.2.s8 %v401
        %v846 = vunpack.c.2.s8 %v402
        %v847 = vunpack.c.3.s8 %v401
        %v848 = vunpack.c.3.s8 %v402
        %v849 = vunpack.c.0.s8 %v403
        %v850 = vunpack.c.0.s8 %v404
        %v851 = vunpack.c.1.s8 %v403
        %v852 = vunpack.c.1.s8 %v404
        %v853 = vunpack.c.2.s8 %v403
        %v854 = vunpack.c.2.s8 %v404
        %v855 = vunpack.c.3.s8 %v403
        %v856 = vunpack.c.3.s8 %v404
        %v857 = vunpack.c.0.s8 %v405
        %v858 = vunpack.c.0.s8 %v406
        %v859 = vunpack.c.1.s8 %v405
        %v860 = vunpack.c.1.s8 %v406
        %v861 = vunpack.c.2.s8 %v405
        %v862 = vunpack.c.2.s8 %v406
        %v863 = vunpack.c.3.s8 %v405
        %v864 = vunpack.c.3.s8 %v406
        %v865 = vunpack.c.0.s8 %v407
        %v866 = vunpack.c.0.s8 %v408
        %v867 = vunpack.c.1.s8 %v407
        %v868 = vunpack.c.1.s8 %v408
        %v869 = vunpack.c.2.s8 %v407
        %v870 = vunpack.c.2.s8 %v408
        %v871 = vunpack.c.3.s8 %v407
        %v872 = vunpack.c.3.s8 %v408
        %v873 = vunpack.c.0.s8 %v409
        %v874 = vunpack.c.0.s8 %v410
        %v875 = vunpack.c.1.s8 %v409
        %v876 = vunpack.c.1.s8 %v410
        %v877 = vunpack.c.2.s8 %v409
        %v878 = vunpack.c.2.s8 %v410
        %v879 = vunpack.c.3.s8 %v409
        %v880 = vunpack.c.3.s8 %v410
        %v881 = vunpack.c.0.s8 %v411
        %v882 = vunpack.c.0.s8 %v412
        %v883 = vunpack.c.1.s8 %v411
        %v884 = vunpack.c.1.s8 %v412
        %v885 = vunpack.c.2.s8 %v411
        %v886 = vunpack.c.2.s8 %v412
        %v887 = vunpack.c.3.s8 %v411
        %v888 = vunpack.c.3.s8 %v412
        %v889 = vunpack.c.0.s8 %v413
        %v890 = vunpack.c.0.s8 %v414
        %v891 = vunpack.c.1.s8 %v413
        %v892 = vunpack.c.1.s8 %v414
        %v893 = vunpack.c.2.s8 %v413
        %v894 = vunpack.c.2.s8 %v414
        %v895 = vunpack.c.3.s8 %v413
        %v896 = vunpack.c.3.s8 %v414
        %v897 = vunpack.c.0.s8 %v415
        %v898 = vunpack.c.0.s8 %v416
        %v899 = vunpack.c.1.s8 %v415
        %v900 = vunpack.c.1.s8 %v416
        %v901 = vunpack.c.2.s8 %v415
        %v902 = vunpack.c.2.s8 %v416
        %v903 = vunpack.c.3.s8 %v415
        %v904 = vunpack.c.3.s8 %v416
        %v905 = vunpack.c.0.s8 %v417
        %v906 = vunpack.c.0.s8 %v418
        %v907 = vunpack.c.1.s8 %v417
        %v908 = vunpack.c.1.s8 %v418
        %v909 = vunpack.c.2.s8 %v417
        %v910 = vunpack.c.2.s8 %v418
        %v911 = vunpack.c.3.s8 %v417
        %v912 = vunpack.c.3.s8 %v418
        %v913 = vunpack.c.0.s8 %v419
        %v914 = vunpack.c.0.s8 %v420
        %v915 = vunpack.c.1.s8 %v419
        %v916 = vunpack.c.1.s8 %v420
        %v917 = vunpack.c.2.s8 %v419
        %v918 = vunpack.c.2.s8 %v420
        %v919 = vunpack.c.3.s8 %v419
        %v920 = vunpack.c.3.s8 %v420
        %v921 = vunpack.c.0.s8 %v421
        %v922 = vunpack.c.0.s8 %v422
        %v923 = vunpack.c.1.s8 %v421
        %v924 = vunpack.c.1.s8 %v422
        %v925 = vunpack.c.2.s8 %v421
        %v926 = vunpack.c.2.s8 %v422
        %v927 = vunpack.c.3.s8 %v421
        %v928 = vunpack.c.3.s8 %v422
        %v929 = vunpack.c.0.s8 %v423
        %v930 = vunpack.c.0.s8 %v424
        %v931 = vunpack.c.1.s8 %v423
        %v932 = vunpack.c.1.s8 %v424
        %v933 = vunpack.c.2.s8 %v423
        %v934 = vunpack.c.2.s8 %v424
        %v935 = vunpack.c.3.s8 %v423
        %v936 = vunpack.c.3.s8 %v424
        %v937 = vunpack.c.0.s8 %v425
        %v938 = vunpack.c.0.s8 %v426
        %v939 = vunpack.c.1.s8 %v425
        %v940 = vunpack.c.1.s8 %v426
        %v941 = vunpack.c.2.s8 %v425
        %v942 = vunpack.c.2.s8 %v426
        %v943 = vunpack.c.3.s8 %v425
        %v944 = vunpack.c.3.s8 %v426
        %v945 = vunpack.c.0.s8 %v427
        %v946 = vunpack.c.0.s8 %v428
        %v947 = vunpack.c.1.s8 %v427
        %v948 = vunpack.c.1.s8 %v428
        %v949 = vunpack.c.2.s8 %v427
        %v950 = vunpack.c.2.s8 %v428
        %v951 = vunpack.c.3.s8 %v427
        %v952 = vunpack.c.3.s8 %v428
        %v953 = vunpack.c.0.s8 %v429
        %v954 = vunpack.c.0.s8 %v430
        %v955 = vunpack.c.1.s8 %v429
        %v956 = vunpack.c.1.s8 %v430
        %v957 = vunpack.c.2.s8 %v429
        %v958 = vunpack.c.2.s8 %v430
        %v959 = vunpack.c.3.s8 %v429
        %v960 = vunpack.c.3.s8 %v430
        %v961 = vunpack.c.0.s8 %v431
        %v962 = vunpack.c.0.s8 %v432
        %v963 = vunpack.c.1.s8 %v431
        %v964 = vunpack.c.1.s8 %v432
        %v965 = vunpack.c.2.s8 %v431
        %v966 = vunpack.c.2.s8 %v432
        %v967 = vunpack.c.3.s8 %v431
        %v968 = vunpack.c.3.s8 %v432
        %v969 = vunpack.c.0.s8 %v433
        %v970 = vunpack.c.0.s8 %v434
        %v971 = vunpack.c.1.s8 %v433
        %v972 = vunpack.c.1.s8 %v434
        %v973 = vunpack.c.2.s8 %v433
        %v974 = vunpack.c.2.s8 %v434
        %v975 = vunpack.c.3.s8 %v433
        %v976 = vunpack.c.3.s8 %v434
        %v977 = vunpack.c.0.s8 %v435
        %v978 = vunpack.c.0.s8 %v436
        %v979 = vunpack.c.1.s8 %v435
        %v980 = vunpack.c.1.s8 %v436
        %v981 = vunpack.c.2.s8 %v435
        %v982 = vunpack.c.2.s8 %v436
        %v983 = vunpack.c.3.s8 %v435
        %v984 = vunpack.c.3.s8 %v436
        %v985 = vunpack.c.0.s8 %v437
        %v986 = vunpack.c.0.s8 %v438
        %v987 = vunpack.c.1.s8 %v437
        %v988 = vunpack.c.1.s8 %v438
        %v989 = vunpack.c.2.s8 %v437
        %v990 = vunpack.c.2.s8 %v438
        %v991 = vunpack.c.3.s8 %v437
        %v992 = vunpack.c.3.s8 %v438
        %v993 = vunpack.c.0.s8 %v439
        %v994 = vunpack.c.0.s8 %v440
        %v995 = vunpack.c.1.s8 %v439
        %v996 = vunpack.c.1.s8 %v440
        %v997 = vunpack.c.2.s8 %v439
        %v998 = vunpack.c.2.s8 %v440
        %v999 = vunpack.c.3.s8 %v439
        %v1000 = vunpack.c.3.s8 %v440
        %v1001 = vunpack.c.0.s8 %v441
        %v1002 = vunpack.c.0.s8 %v442
        %v1003 = vunpack.c.1.s8 %v441
        %v1004 = vunpack.c.1.s8 %v442
        %v1005 = vunpack.c.2.s8 %v441
        %v1006 = vunpack.c.2.s8 %v442
        %v1007 = vunpack.c.3.s8 %v441
        %v1008 = vunpack.c.3.s8 %v442
        %v1009 = vunpack.c.0.s8 %v443
        %v1010 = vunpack.c.0.s8 %v444
        %v1011 = vunpack.c.1.s8 %v443
        %v1012 = vunpack.c.1.s8 %v444
        %v1013 = vunpack.c.2.s8 %v443
        %v1014 = vunpack.c.2.s8 %v444
        %v1015 = vunpack.c.3.s8 %v443
        %v1016 = vunpack.c.3.s8 %v444
        %v1017 = vunpack.c.0.s8 %v445
        %v1018 = vunpack.c.0.s8 %v446
        %v1019 = vunpack.c.1.s8 %v445
        %v1020 = vunpack.c.1.s8 %v446
        %v1021 = vunpack.c.2.s8 %v445
        %v1022 = vunpack.c.2.s8 %v446
        %v1023 = vunpack.c.3.s8 %v445
        %v1024 = vunpack.c.3.s8 %v446
        %v1025 = vunpack.c.0.s8 %v447
        %v1026 = vunpack.c.0.s8 %v448
        %v1027 = vunpack.c.1.s8 %v447
        %v1028 = vunpack.c.1.s8 %v448
        %v1029 = vunpack.c.2.s8 %v447
        %v1030 = vunpack.c.2.s8 %v448
        %v1031 = vunpack.c.3.s8 %v447
        %v1032 = vunpack.c.3.s8 %v448
        %v1033 = vunpack.c.0.s8 %v449
        %v1034 = vunpack.c.0.s8 %v450
        %v1035 = vunpack.c.1.s8 %v449
        %v1036 = vunpack.c.1.s8 %v450
        %v1037 = vunpack.c.2.s8 %v449
        %v1038 = vunpack.c.2.s8 %v450
        %v1039 = vunpack.c.3.s8 %v449
        %v1040 = vunpack.c.3.s8 %v450
        %v1041 = vunpack.c.0.s8 %v451
        %v1042 = vunpack.c.0.s8 %v452
        %v1043 = vunpack.c.1.s8 %v451
        %v1044 = vunpack.c.1.s8 %v452
        %v1045 = vunpack.c.2.s8 %v451
        %v1046 = vunpack.c.2.s8 %v452
        %v1047 = vunpack.c.3.s8 %v451
        %v1048 = vunpack.c.3.s8 %v452
        %v1049 = vunpack.c.0.s8 %v453
        %v1050 = vunpack.c.0.s8 %v454
        %v1051 = vunpack.c.1.s8 %v453
        %v1052 = vunpack.c.1.s8 %v454
        %v1053 = vunpack.c.2.s8 %v453
        %v1054 = vunpack.c.2.s8 %v454
        %v1055 = vunpack.c.3.s8 %v453
        %v1056 = vunpack.c.3.s8 %v454
        %v1057 = vunpack.c.0.s8 %v455
        %v1058 = vunpack.c.0.s8 %v456
        %v1059 = vunpack.c.1.s8 %v455
        %v1060 = vunpack.c.1.s8 %v456
        %v1061 = vunpack.c.2.s8 %v455
        %v1062 = vunpack.c.2.s8 %v456
        %v1063 = vunpack.c.3.s8 %v455
        %v1064 = vunpack.c.3.s8 %v456
        %v1065 = vunpack.c.0.s8 %v457
        %v1066 = vunpack.c.0.s8 %v458
        %v1067 = vunpack.c.1.s8 %v457
        %v1068 = vunpack.c.1.s8 %v458
        %v1069 = vunpack.c.2.s8 %v457
        %v1070 = vunpack.c.2.s8 %v458
        %v1071 = vunpack.c.3.s8 %v457
        %v1072 = vunpack.c.3.s8 %v458
        %v1073 = vunpack.c.0.s8 %v459
        %v1074 = vunpack.c.0.s8 %v460
        %v1075 = vunpack.c.1.s8 %v459
        %v1076 = vunpack.c.1.s8 %v460
        %v1077 = vunpack.c.2.s8 %v459
        %v1078 = vunpack.c.2.s8 %v460
        %v1079 = vunpack.c.3.s8 %v459
        %v1080 = vunpack.c.3.s8 %v460
        %v1081 = vunpack.c.0.s8 %v461
        %v1082 = vunpack.c.0.s8 %v462
        %v1083 = vunpack.c.1.s8 %v461
        %v1084 = vunpack.c.1.s8 %v462
        %v1085 = vunpack.c.2.s8 %v461
        %v1086 = vunpack.c.2.s8 %v462
        %v1087 = vunpack.c.3.s8 %v461
        %v1088 = vunpack.c.3.s8 %v462
        %v1089 = vunpack.c.0.s8 %v463
        %v1090 = vunpack.c.0.s8 %v464
        %v1091 = vunpack.c.1.s8 %v463
        %v1092 = vunpack.c.1.s8 %v464
        %v1093 = vunpack.c.2.s8 %v463
        %v1094 = vunpack.c.2.s8 %v464
        %v1095 = vunpack.c.3.s8 %v463
        %v1096 = vunpack.c.3.s8 %v464
        %v1097 = vunpack.c.0.s8 %v465
        %v1098 = vunpack.c.0.s8 %v466
        %v1099 = vunpack.c.1.s8 %v465
        %v1100 = vunpack.c.1.s8 %v466
        %v1101 = vunpack.c.2.s8 %v465
        %v1102 = vunpack.c.2.s8 %v466
        %v1103 = vunpack.c.3.s8 %v465
        %v1104 = vunpack.c.3.s8 %v466
        %v1105 = vunpack.c.0.s8 %v467
        %v1106 = vunpack.c.0.s8 %v468
        %v1107 = vunpack.c.1.s8 %v467
        %v1108 = vunpack.c.1.s8 %v468
        %v1109 = vunpack.c.2.s8 %v467
        %v1110 = vunpack.c.2.s8 %v468
        %v1111 = vunpack.c.3.s8 %v467
        %v1112 = vunpack.c.3.s8 %v468
        %v1113 = vunpack.c.0.s8 %v469
        %v1114 = vunpack.c.0.s8 %v470
        %v1115 = vunpack.c.1.s8 %v469
        %v1116 = vunpack.c.1.s8 %v470
        %v1117 = vunpack.c.2.s8 %v469
        %v1118 = vunpack.c.2.s8 %v470
        %v1119 = vunpack.c.3.s8 %v469
        %v1120 = vunpack.c.3.s8 %v470
        %v1121 = vunpack.c.0.s8 %v471
        %v1122 = vunpack.c.0.s8 %v472
        %v1123 = vunpack.c.1.s8 %v471
        %v1124 = vunpack.c.1.s8 %v472
        %v1125 = vunpack.c.2.s8 %v471
        %v1126 = vunpack.c.2.s8 %v472
        %v1127 = vunpack.c.3.s8 %v471
        %v1128 = vunpack.c.3.s8 %v472
        %v1129 = vunpack.c.0.s8 %v473
        %v1130 = vunpack.c.0.s8 %v474
        %v1131 = vunpack.c.1.s8 %v473
        %v1132 = vunpack.c.1.s8 %v474
        %v1133 = vunpack.c.2.s8 %v473
        %v1134 = vunpack.c.2.s8 %v474
        %v1135 = vunpack.c.3.s8 %v473
        %v1136 = vunpack.c.3.s8 %v474
        %v1137 = vunpack.c.0.s8 %v475
        %v1138 = vunpack.c.0.s8 %v476
        %v1139 = vunpack.c.1.s8 %v475
        %v1140 = vunpack.c.1.s8 %v476
        %v1141 = vunpack.c.2.s8 %v475
        %v1142 = vunpack.c.2.s8 %v476
        %v1143 = vunpack.c.3.s8 %v475
        %v1144 = vunpack.c.3.s8 %v476
        %v1145 = vunpack.c.0.s8 %v477
        %v1146 = vunpack.c.0.s8 %v478
        %v1147 = vunpack.c.1.s8 %v477
        %v1148 = vunpack.c.1.s8 %v478
        %v1149 = vunpack.c.2.s8 %v477
        %v1150 = vunpack.c.2.s8 %v478
        %v1151 = vunpack.c.3.s8 %v477
        %v1152 = vunpack.c.3.s8 %v478
        %v1153 = vunpack.c.0.s8 %v479
        %v1154 = vunpack.c.0.s8 %v480
        %v1155 = vunpack.c.1.s8 %v479
        %v1156 = vunpack.c.1.s8 %v480
        %v1157 = vunpack.c.2.s8 %v479
        %v1158 = vunpack.c.2.s8 %v480
        %v1159 = vunpack.c.3.s8 %v479
        %v1160 = vunpack.c.3.s8 %v480
        %v1161 = vunpack.c.0.s8 %v481
        %v1162 = vunpack.c.0.s8 %v482
        %v1163 = vunpack.c.1.s8 %v481
        %v1164 = vunpack.c.1.s8 %v482
        %v1165 = vunpack.c.2.s8 %v481
        %v1166 = vunpack.c.2.s8 %v482
        %v1167 = vunpack.c.3.s8 %v481
        %v1168 = vunpack.c.3.s8 %v482
        %v1169 = vunpack.c.0.s8 %v483
        %v1170 = vunpack.c.0.s8 %v484
        %v1171 = vunpack.c.1.s8 %v483
        %v1172 = vunpack.c.1.s8 %v484
        %v1173 = vunpack.c.2.s8 %v483
        %v1174 = vunpack.c.2.s8 %v484
        %v1175 = vunpack.c.3.s8 %v483
        %v1176 = vunpack.c.3.s8 %v484
        %v1177 = vunpack.c.0.s8 %v485
        %v1178 = vunpack.c.0.s8 %v486
        %v1179 = vunpack.c.1.s8 %v485
        %v1180 = vunpack.c.1.s8 %v486
        %v1181 = vunpack.c.2.s8 %v485
        %v1182 = vunpack.c.2.s8 %v486
        %v1183 = vunpack.c.3.s8 %v485
        %v1184 = vunpack.c.3.s8 %v486
        %v1185 = vunpack.c.0.s8 %v487
        %v1186 = vunpack.c.0.s8 %v488
        %v1187 = vunpack.c.1.s8 %v487
        %v1188 = vunpack.c.1.s8 %v488
        %v1189 = vunpack.c.2.s8 %v487
        %v1190 = vunpack.c.2.s8 %v488
        %v1191 = vunpack.c.3.s8 %v487
        %v1192 = vunpack.c.3.s8 %v488
        %v1193 = vunpack.c.0.s8 %v489
        %v1194 = vunpack.c.0.s8 %v490
        %v1195 = vunpack.c.1.s8 %v489
        %v1196 = vunpack.c.1.s8 %v490
        %v1197 = vunpack.c.2.s8 %v489
        %v1198 = vunpack.c.2.s8 %v490
        %v1199 = vunpack.c.3.s8 %v489
        %v1200 = vunpack.c.3.s8 %v490
        %v1201 = vunpack.c.0.s8 %v491
        %v1202 = vunpack.c.0.s8 %v492
        %v1203 = vunpack.c.1.s8 %v491
        %v1204 = vunpack.c.1.s8 %v492
        %v1205 = vunpack.c.2.s8 %v491
        %v1206 = vunpack.c.2.s8 %v492
        %v1207 = vunpack.c.3.s8 %v491
        %v1208 = vunpack.c.3.s8 %v492
        %v1209 = vunpack.c.0.s8 %v493
        %v1210 = vunpack.c.0.s8 %v494
        %v1211 = vunpack.c.1.s8 %v493
        %v1212 = vunpack.c.1.s8 %v494
        %v1213 = vunpack.c.2.s8 %v493
        %v1214 = vunpack.c.2.s8 %v494
        %v1215 = vunpack.c.3.s8 %v493
        %v1216 = vunpack.c.3.s8 %v494
        %v1217 = vunpack.c.0.s8 %v495
        %v1218 = vunpack.c.0.s8 %v496
        %v1219 = vunpack.c.1.s8 %v495
        %v1220 = vunpack.c.1.s8 %v496
        %v1221 = vunpack.c.2.s8 %v495
        %v1222 = vunpack.c.2.s8 %v496
        %v1223 = vunpack.c.3.s8 %v495
        %v1224 = vunpack.c.3.s8 %v496
        %v1225 = vunpack.c.0.s8 %v497
        %v1226 = vunpack.c.0.s8 %v498
        %v1227 = vunpack.c.1.s8 %v497
        %v1228 = vunpack.c.1.s8 %v498
        %v1229 = vunpack.c.2.s8 %v497
        %v1230 = vunpack.c.2.s8 %v498
        %v1231 = vunpack.c.3.s8 %v497
        %v1232 = vunpack.c.3.s8 %v498
        %v1233 = vunpack.c.0.s8 %v499
        %v1234 = vunpack.c.0.s8 %v500
        %v1235 = vunpack.c.1.s8 %v499
        %v1236 = vunpack.c.1.s8 %v500
        %v1237 = vunpack.c.2.s8 %v499
        %v1238 = vunpack.c.2.s8 %v500
        %v1239 = vunpack.c.3.s8 %v499
        %v1240 = vunpack.c.3.s8 %v500
        %v1241 = vunpack.c.0.s8 %v501
        %v1242 = vunpack.c.0.s8 %v502
        %v1243 = vunpack.c.1.s8 %v501
        %v1244 = vunpack.c.1.s8 %v502
        %v1245 = vunpack.c.2.s8 %v501
        %v1246 = vunpack.c.2.s8 %v502
        %v1247 = vunpack.c.3.s8 %v501
        %v1248 = vunpack.c.3.s8 %v502
        %v1249 = vunpack.c.0.s8 %v503
        %v1250 = vunpack.c.0.s8 %v504
        %v1251 = vunpack.c.1.s8 %v503
        %v1252 = vunpack.c.1.s8 %v504
        %v1253 = vunpack.c.2.s8 %v503
        %v1254 = vunpack.c.2.s8 %v504
        %v1255 = vunpack.c.3.s8 %v503
        %v1256 = vunpack.c.3.s8 %v504
        %v1257 = vunpack.c.0.s8 %v505
        %v1258 = vunpack.c.0.s8 %v506
        %v1259 = vunpack.c.1.s8 %v505
        %v1260 = vunpack.c.1.s8 %v506
        %v1261 = vunpack.c.2.s8 %v505
        %v1262 = vunpack.c.2.s8 %v506
        %v1263 = vunpack.c.3.s8 %v505
        %v1264 = vunpack.c.3.s8 %v506
        %v1265 = vunpack.c.0.s8 %v507
        %v1266 = vunpack.c.0.s8 %v508
        %v1267 = vunpack.c.1.s8 %v507
        %v1268 = vunpack.c.1.s8 %v508
        %v1269 = vunpack.c.2.s8 %v507
        %v1270 = vunpack.c.2.s8 %v508
        %v1271 = vunpack.c.3.s8 %v507
        %v1272 = vunpack.c.3.s8 %v508
        %v1273 = vunpack.c.0.s8 %v509
        %v1274 = vunpack.c.0.s8 %v510
        %v1275 = vunpack.c.1.s8 %v509
        %v1276 = vunpack.c.1.s8 %v510
        %v1277 = vunpack.c.2.s8 %v509
        %v1278 = vunpack.c.2.s8 %v510
        %v1279 = vunpack.c.3.s8 %v509
        %v1280 = vunpack.c.3.s8 %v510
        %v1281 = vunpack.c.0.s8 %v511
        %v1282 = vunpack.c.0.s8 %v512
        %v1283 = vunpack.c.1.s8 %v511
        %v1284 = vunpack.c.1.s8 %v512
        %v1285 = vunpack.c.2.s8 %v511
        %v1286 = vunpack.c.2.s8 %v512
        %v1287 = vunpack.c.3.s8 %v511
        %v1288 = vunpack.c.3.s8 %v512
        %v1289 = vunpack.c.0.s8 %v513
        %v1290 = vunpack.c.0.s8 %v514
        %v1291 = vunpack.c.1.s8 %v513
        %v1292 = vunpack.c.1.s8 %v514
        %v1293 = vunpack.c.2.s8 %v513
        %v1294 = vunpack.c.2.s8 %v514
        %v1295 = vunpack.c.3.s8 %v513
        %v1296 = vunpack.c.3.s8 %v514
        %v1297 = vunpack.c.0.s8 %v515
        %v1298 = vunpack.c.0.s8 %v516
        %v1299 = vunpack.c.1.s8 %v515
        %v1300 = vunpack.c.1.s8 %v516
        %v1301 = vunpack.c.2.s8 %v515
        %v1302 = vunpack.c.2.s8 %v516
        %v1303 = vunpack.c.3.s8 %v515
        %v1304 = vunpack.c.3.s8 %v516
        %v1305 = vunpack.c.0.s8 %v517
        %v1306 = vunpack.c.0.s8 %v518
        %v1307 = vunpack.c.1.s8 %v517
        %v1308 = vunpack.c.1.s8 %v518
        %v1309 = vunpack.c.2.s8 %v517
        %v1310 = vunpack.c.2.s8 %v518
        %v1311 = vunpack.c.3.s8 %v517
        %v1312 = vunpack.c.3.s8 %v518
        %v1313 = vunpack.c.0.s8 %v519
        %v1314 = vunpack.c.0.s8 %v520
        %v1315 = vunpack.c.1.s8 %v519
        %v1316 = vunpack.c.1.s8 %v520
        %v1317 = vunpack.c.2.s8 %v519
        %v1318 = vunpack.c.2.s8 %v520
        %v1319 = vunpack.c.3.s8 %v519
        %v1320 = vunpack.c.3.s8 %v520
        %v1321 = vunpack.c.0.s8 %v521
        %v1322 = vunpack.c.0.s8 %v522
        %v1323 = vunpack.c.1.s8 %v521
        %v1324 = vunpack.c.1.s8 %v522
        %v1325 = vunpack.c.2.s8 %v521
        %v1326 = vunpack.c.2.s8 %v522
        %v1327 = vunpack.c.3.s8 %v521
        %v1328 = vunpack.c.3.s8 %v522
        %v1329 = vunpack.c.0.s8 %v523
        %v1330 = vunpack.c.0.s8 %v524
        %v1331 = vunpack.c.1.s8 %v523
        %v1332 = vunpack.c.1.s8 %v524
        %v1333 = vunpack.c.2.s8 %v523
        %v1334 = vunpack.c.2.s8 %v524
        %v1335 = vunpack.c.3.s8 %v523
        %v1336 = vunpack.c.3.s8 %v524
        %v1337 = vunpack.c.0.s8 %v525
        %v1338 = vunpack.c.0.s8 %v526
        %v1339 = vunpack.c.1.s8 %v525
        %v1340 = vunpack.c.1.s8 %v526
        %v1341 = vunpack.c.2.s8 %v525
        %v1342 = vunpack.c.2.s8 %v526
        %v1343 = vunpack.c.3.s8 %v525
        %v1344 = vunpack.c.3.s8 %v526
        %v1345 = vunpack.c.0.s8 %v527
        %v1346 = vunpack.c.0.s8 %v528
        %v1347 = vunpack.c.1.s8 %v527
        %v1348 = vunpack.c.1.s8 %v528
        %v1349 = vunpack.c.2.s8 %v527
        %v1350 = vunpack.c.2.s8 %v528
        %v1351 = vunpack.c.3.s8 %v527
        %v1352 = vunpack.c.3.s8 %v528
        %v1353 = vunpack.c.0.s8 %v529
        %v1354 = vunpack.c.0.s8 %v530
        %v1355 = vunpack.c.1.s8 %v529
        %v1356 = vunpack.c.1.s8 %v530
        %v1357 = vunpack.c.2.s8 %v529
        %v1358 = vunpack.c.2.s8 %v530
        %v1359 = vunpack.c.3.s8 %v529
        %v1360 = vunpack.c.3.s8 %v530
        %v1361 = vunpack.c.0.s8 %v531
        %v1362 = vunpack.c.0.s8 %v532
        %v1363 = vunpack.c.1.s8 %v531
        %v1364 = vunpack.c.1.s8 %v532
        %v1365 = vunpack.c.2.s8 %v531
        %v1366 = vunpack.c.2.s8 %v532
        %v1367 = vunpack.c.3.s8 %v531
        %v1368 = vunpack.c.3.s8 %v532
        %v1369 = vunpack.c.0.s8 %v533
        %v1370 = vunpack.c.0.s8 %v534
        %v1371 = vunpack.c.1.s8 %v533
        %v1372 = vunpack.c.1.s8 %v534
        %v1373 = vunpack.c.2.s8 %v533
        %v1374 = vunpack.c.2.s8 %v534
        %v1375 = vunpack.c.3.s8 %v533
        %v1376 = vunpack.c.3.s8 %v534
        %v1377 = vunpack.c.0.s8 %v535
        %v1378 = vunpack.c.0.s8 %v536
        %v1379 = vunpack.c.1.s8 %v535
        %v1380 = vunpack.c.1.s8 %v536
        %v1381 = vunpack.c.2.s8 %v535
        %v1382 = vunpack.c.2.s8 %v536
        %v1383 = vunpack.c.3.s8 %v535
        %v1384 = vunpack.c.3.s8 %v536
        %v1385 = vunpack.c.0.s8 %v537
        %v1386 = vunpack.c.0.s8 %v538
        %v1387 = vunpack.c.1.s8 %v537
        %v1388 = vunpack.c.1.s8 %v538
        %v1389 = vunpack.c.2.s8 %v537
        %v1390 = vunpack.c.2.s8 %v538
        %v1391 = vunpack.c.3.s8 %v537
        %v1392 = vunpack.c.3.s8 %v538
        %v1393 = vunpack.c.0.s8 %v539
        %v1394 = vunpack.c.0.s8 %v540
        %v1395 = vunpack.c.1.s8 %v539
        %v1396 = vunpack.c.1.s8 %v540
        %v1397 = vunpack.c.2.s8 %v539
        %v1398 = vunpack.c.2.s8 %v540
        %v1399 = vunpack.c.3.s8 %v539
        %v1400 = vunpack.c.3.s8 %v540
        %v1401 = vunpack.c.0.s8 %v541
        %v1402 = vunpack.c.0.s8 %v542
        %v1403 = vunpack.c.1.s8 %v541
        %v1404 = vunpack.c.1.s8 %v542
        %v1405 = vunpack.c.2.s8 %v541
        %v1406 = vunpack.c.2.s8 %v542
        %v1407 = vunpack.c.3.s8 %v541
        %v1408 = vunpack.c.3.s8 %v542
        %v1409 = vunpack.c.0.s8 %v543
        %v1410 = vunpack.c.0.s8 %v544
        %v1411 = vunpack.c.1.s8 %v543
        %v1412 = vunpack.c.1.s8 %v544
        %v1413 = vunpack.c.2.s8 %v543
        %v1414 = vunpack.c.2.s8 %v544
        %v1415 = vunpack.c.3.s8 %v543
        %v1416 = vunpack.c.3.s8 %v544
        %v1417 = vunpack.c.0.s8 %v545
        %v1418 = vunpack.c.0.s8 %v546
        %v1419 = vunpack.c.1.s8 %v545
        %v1420 = vunpack.c.1.s8 %v546
        %v1421 = vunpack.c.2.s8 %v545
        %v1422 = vunpack.c.2.s8 %v546
        %v1423 = vunpack.c.3.s8 %v545
        %v1424 = vunpack.c.3.s8 %v546
        %v1425 = vunpack.c.0.s8 %v547
        %v1426 = vunpack.c.0.s8 %v548
        %v1427 = vunpack.c.1.s8 %v547
        %v1428 = vunpack.c.1.s8 %v548
        %v1429 = vunpack.c.2.s8 %v547
        %v1430 = vunpack.c.2.s8 %v548
        %v1431 = vunpack.c.3.s8 %v547
        %v1432 = vunpack.c.3.s8 %v548
        %v1433 = vunpack.c.0.s8 %v549
        %v1434 = vunpack.c.0.s8 %v550
        %v1435 = vunpack.c.1.s8 %v549
        %v1436 = vunpack.c.1.s8 %v550
        %v1437 = vunpack.c.2.s8 %v549
        %v1438 = vunpack.c.2.s8 %v550
        %v1439 = vunpack.c.3.s8 %v549
        %v1440 = vunpack.c.3.s8 %v550
        %v1441 = vunpack.c.0.s8 %v551
        %v1442 = vunpack.c.0.s8 %v552
        %v1443 = vunpack.c.1.s8 %v551
        %v1444 = vunpack.c.1.s8 %v552
        %v1445 = vunpack.c.2.s8 %v551
        %v1446 = vunpack.c.2.s8 %v552
        %v1447 = vunpack.c.3.s8 %v551
        %v1448 = vunpack.c.3.s8 %v552
        %v1449 = vunpack.c.0.s8 %v553
        %v1450 = vunpack.c.0.s8 %v554
        %v1451 = vunpack.c.1.s8 %v553
        %v1452 = vunpack.c.1.s8 %v554
        %v1453 = vunpack.c.2.s8 %v553
        %v1454 = vunpack.c.2.s8 %v554
        %v1455 = vunpack.c.3.s8 %v553
        %v1456 = vunpack.c.3.s8 %v554
        %v1457 = vunpack.c.0.s8 %v555
        %v1458 = vunpack.c.0.s8 %v556
        %v1459 = vunpack.c.1.s8 %v555
        %v1460 = vunpack.c.1.s8 %v556
        %v1461 = vunpack.c.2.s8 %v555
        %v1462 = vunpack.c.2.s8 %v556
        %v1463 = vunpack.c.3.s8 %v555
        %v1464 = vunpack.c.3.s8 %v556
        %v1465 = vunpack.c.0.s8 %v557
        %v1466 = vunpack.c.0.s8 %v558
        %v1467 = vunpack.c.1.s8 %v557
        %v1468 = vunpack.c.1.s8 %v558
        %v1469 = vunpack.c.2.s8 %v557
        %v1470 = vunpack.c.2.s8 %v558
        %v1471 = vunpack.c.3.s8 %v557
        %v1472 = vunpack.c.3.s8 %v558
        %v1473 = vunpack.c.0.s8 %v559
        %v1474 = vunpack.c.0.s8 %v560
        %v1475 = vunpack.c.1.s8 %v559
        %v1476 = vunpack.c.1.s8 %v560
        %v1477 = vunpack.c.2.s8 %v559
        %v1478 = vunpack.c.2.s8 %v560
        %v1479 = vunpack.c.3.s8 %v559
        %v1480 = vunpack.c.3.s8 %v560
        %v1481 = vunpack.c.0.s8 %v561
        %v1482 = vunpack.c.0.s8 %v562
        %v1483 = vunpack.c.1.s8 %v561
        %v1484 = vunpack.c.1.s8 %v562
        %v1485 = vunpack.c.2.s8 %v561
        %v1486 = vunpack.c.2.s8 %v562
        %v1487 = vunpack.c.3.s8 %v561
        %v1488 = vunpack.c.3.s8 %v562
        %v1489 = vunpack.c.0.s8 %v563
        %v1490 = vunpack.c.0.s8 %v564
        %v1491 = vunpack.c.1.s8 %v563
        %v1492 = vunpack.c.1.s8 %v564
        %v1493 = vunpack.c.2.s8 %v563
        %v1494 = vunpack.c.2.s8 %v564
        %v1495 = vunpack.c.3.s8 %v563
        %v1496 = vunpack.c.3.s8 %v564
        %v1497 = vunpack.c.0.s8 %v565
        %v1498 = vunpack.c.0.s8 %v566
        %v1499 = vunpack.c.1.s8 %v565
        %v1500 = vunpack.c.1.s8 %v566
        %v1501 = vunpack.c.2.s8 %v565
        %v1502 = vunpack.c.2.s8 %v566
        %v1503 = vunpack.c.3.s8 %v565
        %v1504 = vunpack.c.3.s8 %v566
        %v1505 = vunpack.c.0.s8 %v567
        %v1506 = vunpack.c.0.s8 %v568
        %v1507 = vunpack.c.1.s8 %v567
        %v1508 = vunpack.c.1.s8 %v568
        %v1509 = vunpack.c.2.s8 %v567
        %v1510 = vunpack.c.2.s8 %v568
        %v1511 = vunpack.c.3.s8 %v567
        %v1512 = vunpack.c.3.s8 %v568
        %v1513 = vunpack.c.0.s8 %v569
        %v1514 = vunpack.c.0.s8 %v570
        %v1515 = vunpack.c.1.s8 %v569
        %v1516 = vunpack.c.1.s8 %v570
        %v1517 = vunpack.c.2.s8 %v569
        %v1518 = vunpack.c.2.s8 %v570
        %v1519 = vunpack.c.3.s8 %v569
        %v1520 = vunpack.c.3.s8 %v570
        %v1521 = vunpack.c.0.s8 %v571
        %v1522 = vunpack.c.0.s8 %v572
        %v1523 = vunpack.c.1.s8 %v571
        %v1524 = vunpack.c.1.s8 %v572
        %v1525 = vunpack.c.2.s8 %v571
        %v1526 = vunpack.c.2.s8 %v572
        %v1527 = vunpack.c.3.s8 %v571
        %v1528 = vunpack.c.3.s8 %v572
        %v1529 = vunpack.c.0.s8 %v573
        %v1530 = vunpack.c.0.s8 %v574
        %v1531 = vunpack.c.1.s8 %v573
        %v1532 = vunpack.c.1.s8 %v574
        %v1533 = vunpack.c.2.s8 %v573
        %v1534 = vunpack.c.2.s8 %v574
        %v1535 = vunpack.c.3.s8 %v573
        %v1536 = vunpack.c.3.s8 %v574
        %v1537 = vunpack.c.0.s8 %v575
        %v1538 = vunpack.c.0.s8 %v576
        %v1539 = vunpack.c.1.s8 %v575
        %v1540 = vunpack.c.1.s8 %v576
        %v1541 = vunpack.c.2.s8 %v575
        %v1542 = vunpack.c.2.s8 %v576
        %v1543 = vunpack.c.3.s8 %v575
        %v1544 = vunpack.c.3.s8 %v576
        %v1545 = vunpack.c.0.s8 %v577
        %v1546 = vunpack.c.0.s8 %v578
        %v1547 = vunpack.c.1.s8 %v577
        %v1548 = vunpack.c.1.s8 %v578
        %v1549 = vunpack.c.2.s8 %v577
        %v1550 = vunpack.c.2.s8 %v578
        %v1551 = vunpack.c.3.s8 %v577
        %v1552 = vunpack.c.3.s8 %v578
        %v1553 = vunpack.c.0.s8 %v579
        %v1554 = vunpack.c.0.s8 %v580
        %v1555 = vunpack.c.1.s8 %v579
        %v1556 = vunpack.c.1.s8 %v580
        %v1557 = vunpack.c.2.s8 %v579
        %v1558 = vunpack.c.2.s8 %v580
        %v1559 = vunpack.c.3.s8 %v579
        %v1560 = vunpack.c.3.s8 %v580
        %v1561 = vunpack.c.0.s8 %v581
        %v1562 = vunpack.c.0.s8 %v582
        %v1563 = vunpack.c.1.s8 %v581
        %v1564 = vunpack.c.1.s8 %v582
        %v1565 = vunpack.c.2.s8 %v581
        %v1566 = vunpack.c.2.s8 %v582
        %v1567 = vunpack.c.3.s8 %v581
        %v1568 = vunpack.c.3.s8 %v582
        %v1569 = vunpack.c.0.s8 %v583
        %v1570 = vunpack.c.0.s8 %v584
        %v1571 = vunpack.c.1.s8 %v583
        %v1572 = vunpack.c.1.s8 %v584
        %v1573 = vunpack.c.2.s8 %v583
        %v1574 = vunpack.c.2.s8 %v584
        %v1575 = vunpack.c.3.s8 %v583
        %v1576 = vunpack.c.3.s8 %v584
        %v1577 = vunpack.c.0.s8 %v585
        %v1578 = vunpack.c.0.s8 %v586
        %v1579 = vunpack.c.1.s8 %v585
        %v1580 = vunpack.c.1.s8 %v586
        %v1581 = vunpack.c.2.s8 %v585
        %v1582 = vunpack.c.2.s8 %v586
        %v1583 = vunpack.c.3.s8 %v585
        %v1584 = vunpack.c.3.s8 %v586
        %v1585 = vunpack.c.0.s8 %v587
        %v1586 = vunpack.c.0.s8 %v588
        %v1587 = vunpack.c.1.s8 %v587
        %v1588 = vunpack.c.1.s8 %v588
        %v1589 = vunpack.c.2.s8 %v587
        %v1590 = vunpack.c.2.s8 %v588
        %v1591 = vunpack.c.3.s8 %v587
        %v1592 = vunpack.c.3.s8 %v588
        %v1593 = vunpack.c.0.s8 %v589
        %v1594 = vunpack.c.0.s8 %v590
        %v1595 = vunpack.c.1.s8 %v589
        %v1596 = vunpack.c.1.s8 %v590
        %v1597 = vunpack.c.2.s8 %v589
        %v1598 = vunpack.c.2.s8 %v590
        %v1599 = vunpack.c.3.s8 %v589
        %v1600 = vunpack.c.3.s8 %v590
        %v1601 = vunpack.c.0.s8 %v591
        %v1602 = vunpack.c.0.s8 %v592
        %v1603 = vunpack.c.1.s8 %v591
        %v1604 = vunpack.c.1.s8 %v592
        %v1605 = vunpack.c.2.s8 %v591
        %v1606 = vunpack.c.2.s8 %v592
        %v1607 = vunpack.c.3.s8 %v591
        %v1608 = vunpack.c.3.s8 %v592
        %v1609 = vunpack.c.0.s8 %v593
        %v1610 = vunpack.c.0.s8 %v594
        %v1611 = vunpack.c.1.s8 %v593
        %v1612 = vunpack.c.1.s8 %v594
        %v1613 = vunpack.c.2.s8 %v593
        %v1614 = vunpack.c.2.s8 %v594
        %v1615 = vunpack.c.3.s8 %v593
        %v1616 = vunpack.c.3.s8 %v594
        %v1617 = vunpack.c.0.s8 %v595
        %v1618 = vunpack.c.0.s8 %v596
        %v1619 = vunpack.c.1.s8 %v595
        %v1620 = vunpack.c.1.s8 %v596
        %v1621 = vunpack.c.2.s8 %v595
        %v1622 = vunpack.c.2.s8 %v596
        %v1623 = vunpack.c.3.s8 %v595
        %v1624 = vunpack.c.3.s8 %v596
        %v1625 = vunpack.c.0.s8 %v597
        %v1626 = vunpack.c.0.s8 %v598
        %v1627 = vunpack.c.1.s8 %v597
        %v1628 = vunpack.c.1.s8 %v598
        %v1629 = vunpack.c.2.s8 %v597
        %v1630 = vunpack.c.2.s8 %v598
        %v1631 = vunpack.c.3.s8 %v597
        %v1632 = vunpack.c.3.s8 %v598
        %v1633 = vunpack.c.0.s8 %v599
        %v1634 = vunpack.c.0.s8 %v600
        %v1635 = vunpack.c.1.s8 %v599
        %v1636 = vunpack.c.1.s8 %v600
        %v1637 = vunpack.c.2.s8 %v599
        %v1638 = vunpack.c.2.s8 %v600
        %v1639 = vunpack.c.3.s8 %v599
        %v1640 = vunpack.c.3.s8 %v600
        %v1641 = vunpack.c.0.s8 %v601
        %v1642 = vunpack.c.0.s8 %v602
        %v1643 = vunpack.c.1.s8 %v601
        %v1644 = vunpack.c.1.s8 %v602
        %v1645 = vunpack.c.2.s8 %v601
        %v1646 = vunpack.c.2.s8 %v602
        %v1647 = vunpack.c.3.s8 %v601
        %v1648 = vunpack.c.3.s8 %v602
        %v1649 = vunpack.c.0.s8 %v603
        %v1650 = vunpack.c.0.s8 %v604
        %v1651 = vunpack.c.1.s8 %v603
        %v1652 = vunpack.c.1.s8 %v604
        %v1653 = vunpack.c.2.s8 %v603
        %v1654 = vunpack.c.2.s8 %v604
        %v1655 = vunpack.c.3.s8 %v603
        %v1656 = vunpack.c.3.s8 %v604
        %v1657 = vunpack.c.0.s8 %v605
        %v1658 = vunpack.c.0.s8 %v606
        %v1659 = vunpack.c.1.s8 %v605
        %v1660 = vunpack.c.1.s8 %v606
        %v1661 = vunpack.c.2.s8 %v605
        %v1662 = vunpack.c.2.s8 %v606
        %v1663 = vunpack.c.3.s8 %v605
        %v1664 = vunpack.c.3.s8 %v606
        %v1665 = vunpack.c.0.s8 %v607
        %v1666 = vunpack.c.0.s8 %v608
        %v1667 = vunpack.c.1.s8 %v607
        %v1668 = vunpack.c.1.s8 %v608
        %v1669 = vunpack.c.2.s8 %v607
        %v1670 = vunpack.c.2.s8 %v608
        %v1671 = vunpack.c.3.s8 %v607
        %v1672 = vunpack.c.3.s8 %v608
        %v1673 = vunpack.c.0.s8 %v609
        %v1674 = vunpack.c.0.s8 %v610
        %v1675 = vunpack.c.1.s8 %v609
        %v1676 = vunpack.c.1.s8 %v610
        %v1677 = vunpack.c.2.s8 %v609
        %v1678 = vunpack.c.2.s8 %v610
        %v1679 = vunpack.c.3.s8 %v609
        %v1680 = vunpack.c.3.s8 %v610
        %v1681 = vunpack.c.0.s8 %v611
        %v1682 = vunpack.c.0.s8 %v612
        %v1683 = vunpack.c.1.s8 %v611
        %v1684 = vunpack.c.1.s8 %v612
        %v1685 = vunpack.c.2.s8 %v611
        %v1686 = vunpack.c.2.s8 %v612
        %v1687 = vunpack.c.3.s8 %v611
        %v1688 = vunpack.c.3.s8 %v612
        %v1689 = vunpack.c.0.s8 %v613
        %v1690 = vunpack.c.0.s8 %v614
        %v1691 = vunpack.c.1.s8 %v613
        %v1692 = vunpack.c.1.s8 %v614
        %v1693 = vunpack.c.2.s8 %v613
        %v1694 = vunpack.c.2.s8 %v614
        %v1695 = vunpack.c.3.s8 %v613
        %v1696 = vunpack.c.3.s8 %v614
        %v1697 = vunpack.c.0.s8 %v615
        %v1698 = vunpack.c.0.s8 %v616
        %v1699 = vunpack.c.1.s8 %v615
        %v1700 = vunpack.c.1.s8 %v616
        %v1701 = vunpack.c.2.s8 %v615
        %v1702 = vunpack.c.2.s8 %v616
        %v1703 = vunpack.c.3.s8 %v615
        %v1704 = vunpack.c.3.s8 %v616
        %v1705 = vunpack.c.0.s8 %v617
        %v1706 = vunpack.c.0.s8 %v618
        %v1707 = vunpack.c.1.s8 %v617
        %v1708 = vunpack.c.1.s8 %v618
        %v1709 = vunpack.c.2.s8 %v617
        %v1710 = vunpack.c.2.s8 %v618
        %v1711 = vunpack.c.3.s8 %v617
        %v1712 = vunpack.c.3.s8 %v618
        %v1713 = vunpack.c.0.s8 %v619
        %v1714 = vunpack.c.0.s8 %v620
        %v1715 = vunpack.c.1.s8 %v619
        %v1716 = vunpack.c.1.s8 %v620
        %v1717 = vunpack.c.2.s8 %v619
        %v1718 = vunpack.c.2.s8 %v620
        %v1719 = vunpack.c.3.s8 %v619
        %v1720 = vunpack.c.3.s8 %v620
        %v1721 = vunpack.c.0.s8 %v621
        %v1722 = vunpack.c.0.s8 %v622
        %v1723 = vunpack.c.1.s8 %v621
        %v1724 = vunpack.c.1.s8 %v622
        %v1725 = vunpack.c.2.s8 %v621
        %v1726 = vunpack.c.2.s8 %v622
        %v1727 = vunpack.c.3.s8 %v621
        %v1728 = vunpack.c.3.s8 %v622
        %v1729 = vunpack.c.0.s8 %v623
        %v1730 = vunpack.c.0.s8 %v624
        %v1731 = vunpack.c.1.s8 %v623
        %v1732 = vunpack.c.1.s8 %v624
        %v1733 = vunpack.c.2.s8 %v623
        %v1734 = vunpack.c.2.s8 %v624
        %v1735 = vunpack.c.3.s8 %v623
        %v1736 = vunpack.c.3.s8 %v624
        %v1737 = vunpack.c.0.s8 %v625
        %v1738 = vunpack.c.0.s8 %v626
        %v1739 = vunpack.c.1.s8 %v625
        %v1740 = vunpack.c.1.s8 %v626
        %v1741 = vunpack.c.2.s8 %v625
        %v1742 = vunpack.c.2.s8 %v626
        %v1743 = vunpack.c.3.s8 %v625
        %v1744 = vunpack.c.3.s8 %v626
        %v1745 = vunpack.c.0.s8 %v627
        %v1746 = vunpack.c.0.s8 %v628
        %v1747 = vunpack.c.1.s8 %v627
        %v1748 = vunpack.c.1.s8 %v628
        %v1749 = vunpack.c.2.s8 %v627
        %v1750 = vunpack.c.2.s8 %v628
        %v1751 = vunpack.c.3.s8 %v627
        %v1752 = vunpack.c.3.s8 %v628
        %v1753 = vunpack.c.0.s8 %v629
        %v1754 = vunpack.c.0.s8 %v630
        %v1755 = vunpack.c.1.s8 %v629
        %v1756 = vunpack.c.1.s8 %v630
        %v1757 = vunpack.c.2.s8 %v629
        %v1758 = vunpack.c.2.s8 %v630
        %v1759 = vunpack.c.3.s8 %v629
        %v1760 = vunpack.c.3.s8 %v630
        %v1761 = vunpack.c.0.s8 %v631
        %v1762 = vunpack.c.0.s8 %v632
        %v1763 = vunpack.c.1.s8 %v631
        %v1764 = vunpack.c.1.s8 %v632
        %v1765 = vunpack.c.2.s8 %v631
        %v1766 = vunpack.c.2.s8 %v632
        %v1767 = vunpack.c.3.s8 %v631
        %v1768 = vunpack.c.3.s8 %v632
        %v1769 = vunpack.c.0.s8 %v633
        %v1770 = vunpack.c.0.s8 %v634
        %v1771 = vunpack.c.1.s8 %v633
        %v1772 = vunpack.c.1.s8 %v634
        %v1773 = vunpack.c.2.s8 %v633
        %v1774 = vunpack.c.2.s8 %v634
        %v1775 = vunpack.c.3.s8 %v633
        %v1776 = vunpack.c.3.s8 %v634
        %v1777 = vunpack.c.0.s8 %v635
        %v1778 = vunpack.c.0.s8 %v636
        %v1779 = vunpack.c.1.s8 %v635
        %v1780 = vunpack.c.1.s8 %v636
        %v1781 = vunpack.c.2.s8 %v635
        %v1782 = vunpack.c.2.s8 %v636
        %v1783 = vunpack.c.3.s8 %v635
        %v1784 = vunpack.c.3.s8 %v636
        %v1785 = vunpack.c.0.s8 %v637
        %v1786 = vunpack.c.0.s8 %v638
        %v1787 = vunpack.c.1.s8 %v637
        %v1788 = vunpack.c.1.s8 %v638
        %v1789 = vunpack.c.2.s8 %v637
        %v1790 = vunpack.c.2.s8 %v638
        %v1791 = vunpack.c.3.s8 %v637
        %v1792 = vunpack.c.3.s8 %v638
        %v1793 = vunpack.c.0.s8 %v639
        %v1794 = vunpack.c.0.s8 %v640
        %v1795 = vunpack.c.1.s8 %v639
        %v1796 = vunpack.c.1.s8 %v640
        %v1797 = vunpack.c.2.s8 %v639
        %v1798 = vunpack.c.2.s8 %v640
        %v1799 = vunpack.c.3.s8 %v639
        %v1800 = vunpack.c.3.s8 %v640
        %v1801 = vunpack.c.0.s8 %v641
        %v1802 = vunpack.c.0.s8 %v642
        %v1803 = vunpack.c.1.s8 %v641
        %v1804 = vunpack.c.1.s8 %v642
        %v1805 = vunpack.c.2.s8 %v641
        %v1806 = vunpack.c.2.s8 %v642
        %v1807 = vunpack.c.3.s8 %v641
        %v1808 = vunpack.c.3.s8 %v642
        %v1809 = vunpack.c.0.s8 %v643
        %v1810 = vunpack.c.0.s8 %v644
        %v1811 = vunpack.c.1.s8 %v643
        %v1812 = vunpack.c.1.s8 %v644
        %v1813 = vunpack.c.2.s8 %v643
        %v1814 = vunpack.c.2.s8 %v644
        %v1815 = vunpack.c.3.s8 %v643
        %v1816 = vunpack.c.3.s8 %v644
        %v1817 = vunpack.c.0.s8 %v645
        %v1818 = vunpack.c.0.s8 %v646
        %v1819 = vunpack.c.1.s8 %v645
        %v1820 = vunpack.c.1.s8 %v646
        %v1821 = vunpack.c.2.s8 %v645
        %v1822 = vunpack.c.2.s8 %v646
        %v1823 = vunpack.c.3.s8 %v645
        %v1824 = vunpack.c.3.s8 %v646
        %v1825 = vunpack.c.0.s8 %v647
        %v1826 = vunpack.c.0.s8 %v648
        %v1827 = vunpack.c.1.s8 %v647
        %v1828 = vunpack.c.1.s8 %v648
        %v1829 = vunpack.c.2.s8 %v647
        %v1830 = vunpack.c.2.s8 %v648
        %v1831 = vunpack.c.3.s8 %v647
        %v1832 = vunpack.c.3.s8 %v648
        %v1833 = vunpack.c.0.s8 %v649
        %v1834 = vunpack.c.0.s8 %v650
        %v1835 = vunpack.c.1.s8 %v649
        %v1836 = vunpack.c.1.s8 %v650
        %v1837 = vunpack.c.2.s8 %v649
        %v1838 = vunpack.c.2.s8 %v650
        %v1839 = vunpack.c.3.s8 %v649
        %v1840 = vunpack.c.3.s8 %v650
        %v1841 = vunpack.c.0.s8 %v651
        %v1842 = vunpack.c.0.s8 %v652
        %v1843 = vunpack.c.1.s8 %v651
        %v1844 = vunpack.c.1.s8 %v652
        %v1845 = vunpack.c.2.s8 %v651
        %v1846 = vunpack.c.2.s8 %v652
        %v1847 = vunpack.c.3.s8 %v651
        %v1848 = vunpack.c.3.s8 %v652
        %v1849 = vunpack.c.0.s8 %v653
        %v1850 = vunpack.c.0.s8 %v654
        %v1851 = vunpack.c.1.s8 %v653
        %v1852 = vunpack.c.1.s8 %v654
        %v1853 = vunpack.c.2.s8 %v653
        %v1854 = vunpack.c.2.s8 %v654
        %v1855 = vunpack.c.3.s8 %v653
        %v1856 = vunpack.c.3.s8 %v654
        %v1857 = vunpack.c.0.s8 %v655
        %v1858 = vunpack.c.0.s8 %v656
        %v1859 = vunpack.c.1.s8 %v655
        %v1860 = vunpack.c.1.s8 %v656
        %v1861 = vunpack.c.2.s8 %v655
        %v1862 = vunpack.c.2.s8 %v656
        %v1863 = vunpack.c.3.s8 %v655
        %v1864 = vunpack.c.3.s8 %v656
        %v1865 = vunpack.c.0.s8 %v657
        %v1866 = vunpack.c.0.s8 %v658
        %v1867 = vunpack.c.1.s8 %v657
        %v1868 = vunpack.c.1.s8 %v658
        %v1869 = vunpack.c.2.s8 %v657
        %v1870 = vunpack.c.2.s8 %v658
        %v1871 = vunpack.c.3.s8 %v657
        %v1872 = vunpack.c.3.s8 %v658
        %v1873 = vunpack.c.0.s8 %v659
        %v1874 = vunpack.c.0.s8 %v660
        %v1875 = vunpack.c.1.s8 %v659
        %v1876 = vunpack.c.1.s8 %v660
        %v1877 = vunpack.c.2.s8 %v659
        %v1878 = vunpack.c.2.s8 %v660
        %v1879 = vunpack.c.3.s8 %v659
        %v1880 = vunpack.c.3.s8 %v660
        %v1881 = vunpack.c.0.s8 %v661
        %v1882 = vunpack.c.0.s8 %v662
        %v1883 = vunpack.c.1.s8 %v661
        %v1884 = vunpack.c.1.s8 %v662
        %v1885 = vunpack.c.2.s8 %v661
        %v1886 = vunpack.c.2.s8 %v662
        %v1887 = vunpack.c.3.s8 %v661
        %v1888 = vunpack.c.3.s8 %v662
        %v1889 = vunpack.c.0.s8 %v663
        %v1890 = vunpack.c.0.s8 %v664
        %v1891 = vunpack.c.1.s8 %v663
        %v1892 = vunpack.c.1.s8 %v664
        %v1893 = vunpack.c.2.s8 %v663
        %v1894 = vunpack.c.2.s8 %v664
        %v1895 = vunpack.c.3.s8 %v663
        %v1896 = vunpack.c.3.s8 %v664
        %v1897 = vunpack.c.0.s8 %v665
        %v1898 = vunpack.c.0.s8 %v666
        %v1899 = vunpack.c.1.s8 %v665
        %v1900 = vunpack.c.1.s8 %v666
        %v1901 = vunpack.c.2.s8 %v665
        %v1902 = vunpack.c.2.s8 %v666
        %v1903 = vunpack.c.3.s8 %v665
        %v1904 = vunpack.c.3.s8 %v666
        %v1905 = vunpack.c.0.s8 %v667
        %v1906 = vunpack.c.0.s8 %v668
        %v1907 = vunpack.c.1.s8 %v667
        %v1908 = vunpack.c.1.s8 %v668
        %v1909 = vunpack.c.2.s8 %v667
        %v1910 = vunpack.c.2.s8 %v668
        %v1911 = vunpack.c.3.s8 %v667
        %v1912 = vunpack.c.3.s8 %v668
        %v1913 = vunpack.c.0.s8 %v669
        %v1914 = vunpack.c.0.s8 %v670
        %v1915 = vunpack.c.1.s8 %v669
        %v1916 = vunpack.c.1.s8 %v670
        %v1917 = vunpack.c.2.s8 %v669
        %v1918 = vunpack.c.2.s8 %v670
        %v1919 = vunpack.c.3.s8 %v669
        %v1920 = vunpack.c.3.s8 %v670
        %v1921 = vunpack.c.0.s8 %v671
        %v1922 = vunpack.c.0.s8 %v672
        %v1923 = vunpack.c.1.s8 %v671
        %v1924 = vunpack.c.1.s8 %v672
        %v1925 = vunpack.c.2.s8 %v671
        %v1926 = vunpack.c.2.s8 %v672
        %v1927 = vunpack.c.3.s8 %v671
        %v1928 = vunpack.c.3.s8 %v672
        %v1929 = vunpack.c.0.s8 %v673
        %v1930 = vunpack.c.0.s8 %v674
        %v1931 = vunpack.c.1.s8 %v673
        %v1932 = vunpack.c.1.s8 %v674
        %v1933 = vunpack.c.2.s8 %v673
        %v1934 = vunpack.c.2.s8 %v674
        %v1935 = vunpack.c.3.s8 %v673
        %v1936 = vunpack.c.3.s8 %v674
        %v1937 = vunpack.c.0.s8 %v675
        %v1938 = vunpack.c.0.s8 %v676
        %v1939 = vunpack.c.1.s8 %v675
        %v1940 = vunpack.c.1.s8 %v676
        %v1941 = vunpack.c.2.s8 %v675
        %v1942 = vunpack.c.2.s8 %v676
        %v1943 = vunpack.c.3.s8 %v675
        %v1944 = vunpack.c.3.s8 %v676
        %v1945 = vunpack.c.0.s8 %v677
        %v1946 = vunpack.c.0.s8 %v678
        %v1947 = vunpack.c.1.s8 %v677
        %v1948 = vunpack.c.1.s8 %v678
        %v1949 = vunpack.c.2.s8 %v677
        %v1950 = vunpack.c.2.s8 %v678
        %v1951 = vunpack.c.3.s8 %v677
        %v1952 = vunpack.c.3.s8 %v678
        %v1953 = vunpack.c.0.s8 %v679
        %v1954 = vunpack.c.0.s8 %v680
        %v1955 = vunpack.c.1.s8 %v679
        %v1956 = vunpack.c.1.s8 %v680
        %v1957 = vunpack.c.2.s8 %v679
        %v1958 = vunpack.c.2.s8 %v680
        %v1959 = vunpack.c.3.s8 %v679
        %v1960 = vunpack.c.3.s8 %v680
        %v1961 = vunpack.c.0.s8 %v681
        %v1962 = vunpack.c.0.s8 %v682
        %v1963 = vunpack.c.1.s8 %v681
        %v1964 = vunpack.c.1.s8 %v682
        %v1965 = vunpack.c.2.s8 %v681
        %v1966 = vunpack.c.2.s8 %v682
        %v1967 = vunpack.c.3.s8 %v681
        %v1968 = vunpack.c.3.s8 %v682
        %v1969 = vunpack.c.0.s8 %v683
        %v1970 = vunpack.c.0.s8 %v684
        %v1971 = vunpack.c.1.s8 %v683
        %v1972 = vunpack.c.1.s8 %v684
        %v1973 = vunpack.c.2.s8 %v683
        %v1974 = vunpack.c.2.s8 %v684
        %v1975 = vunpack.c.3.s8 %v683
        %v1976 = vunpack.c.3.s8 %v684
        %v1977 = vunpack.c.0.s8 %v685
        %v1978 = vunpack.c.0.s8 %v686
        %v1979 = vunpack.c.1.s8 %v685
        %v1980 = vunpack.c.1.s8 %v686
        %v1981 = vunpack.c.2.s8 %v685
        %v1982 = vunpack.c.2.s8 %v686
        %v1983 = vunpack.c.3.s8 %v685
        %v1984 = vunpack.c.3.s8 %v686
        %v1985 = vunpack.c.0.s8 %v687
        %v1986 = vunpack.c.0.s8 %v688
        %v1987 = vunpack.c.1.s8 %v687
        %v1988 = vunpack.c.1.s8 %v688
        %v1989 = vunpack.c.2.s8 %v687
        %v1990 = vunpack.c.2.s8 %v688
        %v1991 = vunpack.c.3.s8 %v687
        %v1992 = vunpack.c.3.s8 %v688
        %v1993 = vunpack.c.0.s8 %v689
        %v1994 = vunpack.c.0.s8 %v690
        %v1995 = vunpack.c.1.s8 %v689
        %v1996 = vunpack.c.1.s8 %v690
        %v1997 = vunpack.c.2.s8 %v689
        %v1998 = vunpack.c.2.s8 %v690
        %v1999 = vunpack.c.3.s8 %v689
        %v2000 = vunpack.c.3.s8 %v690
        %v2001 = vunpack.c.0.s8 %v691
        %v2002 = vunpack.c.0.s8 %v692
        %v2003 = vunpack.c.1.s8 %v691
        %v2004 = vunpack.c.1.s8 %v692
        %v2005 = vunpack.c.2.s8 %v691
        %v2006 = vunpack.c.2.s8 %v692
        %v2007 = vunpack.c.3.s8 %v691
        %v2008 = vunpack.c.3.s8 %v692
        %v2009 = vunpack.c.0.s8 %v693
        %v2010 = vunpack.c.0.s8 %v694
        %v2011 = vunpack.c.1.s8 %v693
        %v2012 = vunpack.c.1.s8 %v694
        %v2013 = vunpack.c.2.s8 %v693
        %v2014 = vunpack.c.2.s8 %v694
        %v2015 = vunpack.c.3.s8 %v693
        %v2016 = vunpack.c.3.s8 %v694
        %v2017 = vunpack.c.0.s8 %v695
        %v2018 = vunpack.c.0.s8 %v696
        %v2019 = vunpack.c.1.s8 %v695
        %v2020 = vunpack.c.1.s8 %v696
        %v2021 = vunpack.c.2.s8 %v695
        %v2022 = vunpack.c.2.s8 %v696
        %v2023 = vunpack.c.3.s8 %v695
        %v2024 = vunpack.c.3.s8 %v696
        %v2025 = vunpack.c.0.s8 %v697
        %v2026 = vunpack.c.0.s8 %v698
        %v2027 = vunpack.c.1.s8 %v697
        %v2028 = vunpack.c.1.s8 %v698
        %v2029 = vunpack.c.2.s8 %v697
        %v2030 = vunpack.c.2.s8 %v698
        %v2031 = vunpack.c.3.s8 %v697
        %v2032 = vunpack.c.3.s8 %v698
        %v2033 = vunpack.c.0.s8 %v699
        %v2034 = vunpack.c.0.s8 %v700
        %v2035 = vunpack.c.1.s8 %v699
        %v2036 = vunpack.c.1.s8 %v700
        %v2037 = vunpack.c.2.s8 %v699
        %v2038 = vunpack.c.2.s8 %v700
        %v2039 = vunpack.c.3.s8 %v699
        %v2040 = vunpack.c.3.s8 %v700
        %v2041 = vunpack.c.0.s8 %v701
        %v2042 = vunpack.c.0.s8 %v702
        %v2043 = vunpack.c.1.s8 %v701
        %v2044 = vunpack.c.1.s8 %v702
        %v2045 = vunpack.c.2.s8 %v701
        %v2046 = vunpack.c.2.s8 %v702
        %v2047 = vunpack.c.3.s8 %v701
        %v2048 = vunpack.c.3.s8 %v702
        %v2049 = vunpack.c.0.s8 %v703
        %v2050 = vunpack.c.0.s8 %v704
        %v2051 = vunpack.c.1.s8 %v703
        %v2052 = vunpack.c.1.s8 %v704
        %v2053 = vunpack.c.2.s8 %v703
        %v2054 = vunpack.c.2.s8 %v704
        %v2055 = vunpack.c.3.s8 %v703
        %v2056 = vunpack.c.3.s8 %v704
        %v2057 = vcvt.s32.f32 %v705
        %v2058 = vcvt.s32.f32 %v706
        %v2059 = vcvt.s32.f32 %v707
        %v2060 = vcvt.s32.f32 %v708
        %v2061 = vcvt.s32.f32 %v709
        %v2062 = vcvt.s32.f32 %v710
        %v2063 = vcvt.s32.f32 %v711
        %v2064 = vcvt.s32.f32 %v712
        %v2065 = vcvt.s32.f32 %v713
        %v2066 = vcvt.s32.f32 %v714
        %v2067 = vcvt.s32.f32 %v715
        %v2068 = vcvt.s32.f32 %v716
        %v2069 = vcvt.s32.f32 %v717
        %v2070 = vcvt.s32.f32 %v718
        %v2071 = vcvt.s32.f32 %v719
        %v2072 = vcvt.s32.f32 %v720
        %v2073 = vcvt.s32.f32 %v721
        %v2074 = vcvt.s32.f32 %v722
        %v2075 = vcvt.s32.f32 %v723
        %v2076 = vcvt.s32.f32 %v724
        %v2077 = vcvt.s32.f32 %v725
        %v2078 = vcvt.s32.f32 %v726
        %v2079 = vcvt.s32.f32 %v727
        %v2080 = vcvt.s32.f32 %v728
        %v2081 = vcvt.s32.f32 %v729
        %v2082 = vcvt.s32.f32 %v730
        %v2083 = vcvt.s32.f32 %v731
        %v2084 = vcvt.s32.f32 %v732
        %v2085 = vcvt.s32.f32 %v733
        %v2086 = vcvt.s32.f32 %v734
        %v2087 = vcvt.s32.f32 %v735
        %v2088 = vcvt.s32.f32 %v736
        %v2089 = vcvt.s32.f32 %v737
        %v2090 = vcvt.s32.f32 %v738
        %v2091 = vcvt.s32.f32 %v739
        %v2092 = vcvt.s32.f32 %v740
        %v2093 = vcvt.s32.f32 %v741
        %v2094 = vcvt.s32.f32 %v742
        %v2095 = vcvt.s32.f32 %v743
        %v2096 = vcvt.s32.f32 %v744
        %v2097 = vcvt.s32.f32 %v745
        %v2098 = vcvt.s32.f32 %v746
        %v2099 = vcvt.s32.f32 %v747
        %v2100 = vcvt.s32.f32 %v748
        %v2101 = vcvt.s32.f32 %v749
        %v2102 = vcvt.s32.f32 %v750
        %v2103 = vcvt.s32.f32 %v751
        %v2104 = vcvt.s32.f32 %v752
        %v2105 = vcvt.s32.f32 %v753
        %v2106 = vcvt.s32.f32 %v754
        %v2107 = vcvt.s32.f32 %v755
        %v2108 = vcvt.s32.f32 %v756
        %v2109 = vcvt.s32.f32 %v757
        %v2110 = vcvt.s32.f32 %v758
        %v2111 = vcvt.s32.f32 %v759
        %v2112 = vcvt.s32.f32 %v760
        %v2113 = vcvt.s32.f32 %v761
        %v2114 = vcvt.s32.f32 %v762
        %v2115 = vcvt.s32.f32 %v763
        %v2116 = vcvt.s32.f32 %v764
        %v2117 = vcvt.s32.f32 %v765
        %v2118 = vcvt.s32.f32 %v766
        %v2119 = vcvt.s32.f32 %v767
        %v2120 = vcvt.s32.f32 %v768
        %v2121 = vcvt.s32.f32 %v769
        %v2122 = vcvt.s32.f32 %v770
        %v2123 = vcvt.s32.f32 %v771
        %v2124 = vcvt.s32.f32 %v772
        %v2125 = vcvt.s32.f32 %v773
        %v2126 = vcvt.s32.f32 %v774
        %v2127 = vcvt.s32.f32 %v775
        %v2128 = vcvt.s32.f32 %v776
        %v2129 = vcvt.s32.f32 %v777
        %v2130 = vcvt.s32.f32 %v778
        %v2131 = vcvt.s32.f32 %v779
        %v2132 = vcvt.s32.f32 %v780
        %v2133 = vcvt.s32.f32 %v781
        %v2134 = vcvt.s32.f32 %v782
        %v2135 = vcvt.s32.f32 %v783
        %v2136 = vcvt.s32.f32 %v784
        %v2137 = vcvt.s32.f32 %v785
        %v2138 = vcvt.s32.f32 %v786
        %v2139 = vcvt.s32.f32 %v787
        %v2140 = vcvt.s32.f32 %v788
        %v2141 = vcvt.s32.f32 %v789
        %v2142 = vcvt.s32.f32 %v790
        %v2143 = vcvt.s32.f32 %v791
        %v2144 = vcvt.s32.f32 %v792
        %v2145 = vcvt.s32.f32 %v793
        %v2146 = vcvt.s32.f32 %v794
        %v2147 = vcvt.s32.f32 %v795
        %v2148 = vcvt.s32.f32 %v796
        %v2149 = vcvt.s32.f32 %v797
        %v2150 = vcvt.s32.f32 %v798
        %v2151 = vcvt.s32.f32 %v799
        %v2152 = vcvt.s32.f32 %v800
        %v2153 = vcvt.s32.f32 %v801
        %v2154 = vcvt.s32.f32 %v802
        %v2155 = vcvt.s32.f32 %v803
        %v2156 = vcvt.s32.f32 %v804
        %v2157 = vcvt.s32.f32 %v805
        %v2158 = vcvt.s32.f32 %v806
        %v2159 = vcvt.s32.f32 %v807
        %v2160 = vcvt.s32.f32 %v808
        %v2161 = vcvt.s32.f32 %v809
        %v2162 = vcvt.s32.f32 %v810
        %v2163 = vcvt.s32.f32 %v811
        %v2164 = vcvt.s32.f32 %v812
        %v2165 = vcvt.s32.f32 %v813
        %v2166 = vcvt.s32.f32 %v814
        %v2167 = vcvt.s32.f32 %v815
        %v2168 = vcvt.s32.f32 %v816
        %v2169 = vcvt.s32.f32 %v817
        %v2170 = vcvt.s32.f32 %v818
        %v2171 = vcvt.s32.f32 %v819
        %v2172 = vcvt.s32.f32 %v820
        %v2173 = vcvt.s32.f32 %v821
        %v2174 = vcvt.s32.f32 %v822
        %v2175 = vcvt.s32.f32 %v823
        %v2176 = vcvt.s32.f32 %v824
        %v2177 = vcvt.s32.f32 %v825
        %v2178 = vcvt.s32.f32 %v826
        %v2179 = vcvt.s32.f32 %v827
        %v2180 = vcvt.s32.f32 %v828
        %v2181 = vcvt.s32.f32 %v829
        %v2182 = vcvt.s32.f32 %v830
        %v2183 = vcvt.s32.f32 %v831
        %v2184 = vcvt.s32.f32 %v832
        %v2185 = vcvt.s32.f32 %v833
        %v2186 = vcvt.s32.f32 %v834
        %v2187 = vcvt.s32.f32 %v835
        %v2188 = vcvt.s32.f32 %v836
        %v2189 = vcvt.s32.f32 %v837
        %v2190 = vcvt.s32.f32 %v838
        %v2191 = vcvt.s32.f32 %v839
        %v2192 = vcvt.s32.f32 %v840
        %v2193 = vcvt.s32.f32 %v841
        %v2194 = vcvt.s32.f32 %v842
        %v2195 = vcvt.s32.f32 %v843
        %v2196 = vcvt.s32.f32 %v844
        %v2197 = vcvt.s32.f32 %v845
        %v2198 = vcvt.s32.f32 %v846
        %v2199 = vcvt.s32.f32 %v847
        %v2200 = vcvt.s32.f32 %v848
        %v2201 = vcvt.s32.f32 %v849
        %v2202 = vcvt.s32.f32 %v850
        %v2203 = vcvt.s32.f32 %v851
        %v2204 = vcvt.s32.f32 %v852
        %v2205 = vcvt.s32.f32 %v853
        %v2206 = vcvt.s32.f32 %v854
        %v2207 = vcvt.s32.f32 %v855
        %v2208 = vcvt.s32.f32 %v856
        %v2209 = vcvt.s32.f32 %v857
        %v2210 = vcvt.s32.f32 %v858
        %v2211 = vcvt.s32.f32 %v859
        %v2212 = vcvt.s32.f32 %v860
        %v2213 = vcvt.s32.f32 %v861
        %v2214 = vcvt.s32.f32 %v862
        %v2215 = vcvt.s32.f32 %v863
        %v2216 = vcvt.s32.f32 %v864
        %v2217 = vcvt.s32.f32 %v865
        %v2218 = vcvt.s32.f32 %v866
        %v2219 = vcvt.s32.f32 %v867
        %v2220 = vcvt.s32.f32 %v868
        %v2221 = vcvt.s32.f32 %v869
        %v2222 = vcvt.s32.f32 %v870
        %v2223 = vcvt.s32.f32 %v871
        %v2224 = vcvt.s32.f32 %v872
        %v2225 = vcvt.s32.f32 %v873
        %v2226 = vcvt.s32.f32 %v874
        %v2227 = vcvt.s32.f32 %v875
        %v2228 = vcvt.s32.f32 %v876
        %v2229 = vcvt.s32.f32 %v877
        %v2230 = vcvt.s32.f32 %v878
        %v2231 = vcvt.s32.f32 %v879
        %v2232 = vcvt.s32.f32 %v880
        %v2233 = vcvt.s32.f32 %v881
        %v2234 = vcvt.s32.f32 %v882
        %v2235 = vcvt.s32.f32 %v883
        %v2236 = vcvt.s32.f32 %v884
        %v2237 = vcvt.s32.f32 %v885
        %v2238 = vcvt.s32.f32 %v886
        %v2239 = vcvt.s32.f32 %v887
        %v2240 = vcvt.s32.f32 %v888
        %v2241 = vcvt.s32.f32 %v889
        %v2242 = vcvt.s32.f32 %v890
        %v2243 = vcvt.s32.f32 %v891
        %v2244 = vcvt.s32.f32 %v892
        %v2245 = vcvt.s32.f32 %v893
        %v2246 = vcvt.s32.f32 %v894
        %v2247 = vcvt.s32.f32 %v895
        %v2248 = vcvt.s32.f32 %v896
        %v2249 = vcvt.s32.f32 %v897
        %v2250 = vcvt.s32.f32 %v898
        %v2251 = vcvt.s32.f32 %v899
        %v2252 = vcvt.s32.f32 %v900
        %v2253 = vcvt.s32.f32 %v901
        %v2254 = vcvt.s32.f32 %v902
        %v2255 = vcvt.s32.f32 %v903
        %v2256 = vcvt.s32.f32 %v904
        %v2257 = vcvt.s32.f32 %v905
        %v2258 = vcvt.s32.f32 %v906
        %v2259 = vcvt.s32.f32 %v907
        %v2260 = vcvt.s32.f32 %v908
        %v2261 = vcvt.s32.f32 %v909
        %v2262 = vcvt.s32.f32 %v910
        %v2263 = vcvt.s32.f32 %v911
        %v2264 = vcvt.s32.f32 %v912
        %v2265 = vcvt.s32.f32 %v913
        %v2266 = vcvt.s32.f32 %v914
        %v2267 = vcvt.s32.f32 %v915
        %v2268 = vcvt.s32.f32 %v916
        %v2269 = vcvt.s32.f32 %v917
        %v2270 = vcvt.s32.f32 %v918
        %v2271 = vcvt.s32.f32 %v919
        %v2272 = vcvt.s32.f32 %v920
        %v2273 = vcvt.s32.f32 %v921
        %v2274 = vcvt.s32.f32 %v922
        %v2275 = vcvt.s32.f32 %v923
        %v2276 = vcvt.s32.f32 %v924
        %v2277 = vcvt.s32.f32 %v925
        %v2278 = vcvt.s32.f32 %v926
        %v2279 = vcvt.s32.f32 %v927
        %v2280 = vcvt.s32.f32 %v928
        %v2281 = vcvt.s32.f32 %v929
        %v2282 = vcvt.s32.f32 %v930
        %v2283 = vcvt.s32.f32 %v931
        %v2284 = vcvt.s32.f32 %v932
        %v2285 = vcvt.s32.f32 %v933
        %v2286 = vcvt.s32.f32 %v934
        %v2287 = vcvt.s32.f32 %v935
        %v2288 = vcvt.s32.f32 %v936
        %v2289 = vcvt.s32.f32 %v937
        %v2290 = vcvt.s32.f32 %v938
        %v2291 = vcvt.s32.f32 %v939
        %v2292 = vcvt.s32.f32 %v940
        %v2293 = vcvt.s32.f32 %v941
        %v2294 = vcvt.s32.f32 %v942
        %v2295 = vcvt.s32.f32 %v943
        %v2296 = vcvt.s32.f32 %v944
        %v2297 = vcvt.s32.f32 %v945
        %v2298 = vcvt.s32.f32 %v946
        %v2299 = vcvt.s32.f32 %v947
        %v2300 = vcvt.s32.f32 %v948
        %v2301 = vcvt.s32.f32 %v949
        %v2302 = vcvt.s32.f32 %v950
        %v2303 = vcvt.s32.f32 %v951
        %v2304 = vcvt.s32.f32 %v952
        %v2305 = vcvt.s32.f32 %v953
        %v2306 = vcvt.s32.f32 %v954
        %v2307 = vcvt.s32.f32 %v955
        %v2308 = vcvt.s32.f32 %v956
        %v2309 = vcvt.s32.f32 %v957
        %v2310 = vcvt.s32.f32 %v958
        %v2311 = vcvt.s32.f32 %v959
        %v2312 = vcvt.s32.f32 %v960
        %v2313 = vcvt.s32.f32 %v961
        %v2314 = vcvt.s32.f32 %v962
        %v2315 = vcvt.s32.f32 %v963
        %v2316 = vcvt.s32.f32 %v964
        %v2317 = vcvt.s32.f32 %v965
        %v2318 = vcvt.s32.f32 %v966
        %v2319 = vcvt.s32.f32 %v967
        %v2320 = vcvt.s32.f32 %v968
        %v2321 = vcvt.s32.f32 %v969
        %v2322 = vcvt.s32.f32 %v970
        %v2323 = vcvt.s32.f32 %v971
        %v2324 = vcvt.s32.f32 %v972
        %v2325 = vcvt.s32.f32 %v973
        %v2326 = vcvt.s32.f32 %v974
        %v2327 = vcvt.s32.f32 %v975
        %v2328 = vcvt.s32.f32 %v976
        %v2329 = vcvt.s32.f32 %v977
        %v2330 = vcvt.s32.f32 %v978
        %v2331 = vcvt.s32.f32 %v979
        %v2332 = vcvt.s32.f32 %v980
        %v2333 = vcvt.s32.f32 %v981
        %v2334 = vcvt.s32.f32 %v982
        %v2335 = vcvt.s32.f32 %v983
        %v2336 = vcvt.s32.f32 %v984
        %v2337 = vcvt.s32.f32 %v985
        %v2338 = vcvt.s32.f32 %v986
        %v2339 = vcvt.s32.f32 %v987
        %v2340 = vcvt.s32.f32 %v988
        %v2341 = vcvt.s32.f32 %v989
        %v2342 = vcvt.s32.f32 %v990
        %v2343 = vcvt.s32.f32 %v991
        %v2344 = vcvt.s32.f32 %v992
        %v2345 = vcvt.s32.f32 %v993
        %v2346 = vcvt.s32.f32 %v994
        %v2347 = vcvt.s32.f32 %v995
        %v2348 = vcvt.s32.f32 %v996
        %v2349 = vcvt.s32.f32 %v997
        %v2350 = vcvt.s32.f32 %v998
        %v2351 = vcvt.s32.f32 %v999
        %v2352 = vcvt.s32.f32 %v1000
        %v2353 = vcvt.s32.f32 %v1001
        %v2354 = vcvt.s32.f32 %v1002
        %v2355 = vcvt.s32.f32 %v1003
        %v2356 = vcvt.s32.f32 %v1004
        %v2357 = vcvt.s32.f32 %v1005
        %v2358 = vcvt.s32.f32 %v1006
        %v2359 = vcvt.s32.f32 %v1007
        %v2360 = vcvt.s32.f32 %v1008
        %v2361 = vcvt.s32.f32 %v1009
        %v2362 = vcvt.s32.f32 %v1010
        %v2363 = vcvt.s32.f32 %v1011
        %v2364 = vcvt.s32.f32 %v1012
        %v2365 = vcvt.s32.f32 %v1013
        %v2366 = vcvt.s32.f32 %v1014
        %v2367 = vcvt.s32.f32 %v1015
        %v2368 = vcvt.s32.f32 %v1016
        %v2369 = vcvt.s32.f32 %v1017
        %v2370 = vcvt.s32.f32 %v1018
        %v2371 = vcvt.s32.f32 %v1019
        %v2372 = vcvt.s32.f32 %v1020
        %v2373 = vcvt.s32.f32 %v1021
        %v2374 = vcvt.s32.f32 %v1022
        %v2375 = vcvt.s32.f32 %v1023
        %v2376 = vcvt.s32.f32 %v1024
        %v2377 = vcvt.s32.f32 %v1025
        %v2378 = vcvt.s32.f32 %v1026
        %v2379 = vcvt.s32.f32 %v1027
        %v2380 = vcvt.s32.f32 %v1028
        %v2381 = vcvt.s32.f32 %v1029
        %v2382 = vcvt.s32.f32 %v1030
        %v2383 = vcvt.s32.f32 %v1031
        %v2384 = vcvt.s32.f32 %v1032
        %v2385 = vcvt.s32.f32 %v1033
        %v2386 = vcvt.s32.f32 %v1034
        %v2387 = vcvt.s32.f32 %v1035
        %v2388 = vcvt.s32.f32 %v1036
        %v2389 = vcvt.s32.f32 %v1037
        %v2390 = vcvt.s32.f32 %v1038
        %v2391 = vcvt.s32.f32 %v1039
        %v2392 = vcvt.s32.f32 %v1040
        %v2393 = vcvt.s32.f32 %v1041
        %v2394 = vcvt.s32.f32 %v1042
        %v2395 = vcvt.s32.f32 %v1043
        %v2396 = vcvt.s32.f32 %v1044
        %v2397 = vcvt.s32.f32 %v1045
        %v2398 = vcvt.s32.f32 %v1046
        %v2399 = vcvt.s32.f32 %v1047
        %v2400 = vcvt.s32.f32 %v1048
        %v2401 = vcvt.s32.f32 %v1049
        %v2402 = vcvt.s32.f32 %v1050
        %v2403 = vcvt.s32.f32 %v1051
        %v2404 = vcvt.s32.f32 %v1052
        %v2405 = vcvt.s32.f32 %v1053
        %v2406 = vcvt.s32.f32 %v1054
        %v2407 = vcvt.s32.f32 %v1055
        %v2408 = vcvt.s32.f32 %v1056
        %v2409 = vcvt.s32.f32 %v1057
        %v2410 = vcvt.s32.f32 %v1058
        %v2411 = vcvt.s32.f32 %v1059
        %v2412 = vcvt.s32.f32 %v1060
        %v2413 = vcvt.s32.f32 %v1061
        %v2414 = vcvt.s32.f32 %v1062
        %v2415 = vcvt.s32.f32 %v1063
        %v2416 = vcvt.s32.f32 %v1064
        %v2417 = vcvt.s32.f32 %v1065
        %v2418 = vcvt.s32.f32 %v1066
        %v2419 = vcvt.s32.f32 %v1067
        %v2420 = vcvt.s32.f32 %v1068
        %v2421 = vcvt.s32.f32 %v1069
        %v2422 = vcvt.s32.f32 %v1070
        %v2423 = vcvt.s32.f32 %v1071
        %v2424 = vcvt.s32.f32 %v1072
        %v2425 = vcvt.s32.f32 %v1073
        %v2426 = vcvt.s32.f32 %v1074
        %v2427 = vcvt.s32.f32 %v1075
        %v2428 = vcvt.s32.f32 %v1076
        %v2429 = vcvt.s32.f32 %v1077
        %v2430 = vcvt.s32.f32 %v1078
        %v2431 = vcvt.s32.f32 %v1079
        %v2432 = vcvt.s32.f32 %v1080
        %v2433 = vcvt.s32.f32 %v1081
        %v2434 = vcvt.s32.f32 %v1082
        %v2435 = vcvt.s32.f32 %v1083
        %v2436 = vcvt.s32.f32 %v1084
        %v2437 = vcvt.s32.f32 %v1085
        %v2438 = vcvt.s32.f32 %v1086
        %v2439 = vcvt.s32.f32 %v1087
        %v2440 = vcvt.s32.f32 %v1088
        %v2441 = vcvt.s32.f32 %v1089
        %v2442 = vcvt.s32.f32 %v1090
        %v2443 = vcvt.s32.f32 %v1091
        %v2444 = vcvt.s32.f32 %v1092
        %v2445 = vcvt.s32.f32 %v1093
        %v2446 = vcvt.s32.f32 %v1094
        %v2447 = vcvt.s32.f32 %v1095
        %v2448 = vcvt.s32.f32 %v1096
        %v2449 = vcvt.s32.f32 %v1097
        %v2450 = vcvt.s32.f32 %v1098
        %v2451 = vcvt.s32.f32 %v1099
        %v2452 = vcvt.s32.f32 %v1100
        %v2453 = vcvt.s32.f32 %v1101
        %v2454 = vcvt.s32.f32 %v1102
        %v2455 = vcvt.s32.f32 %v1103
        %v2456 = vcvt.s32.f32 %v1104
        %v2457 = vcvt.s32.f32 %v1105
        %v2458 = vcvt.s32.f32 %v1106
        %v2459 = vcvt.s32.f32 %v1107
        %v2460 = vcvt.s32.f32 %v1108
        %v2461 = vcvt.s32.f32 %v1109
        %v2462 = vcvt.s32.f32 %v1110
        %v2463 = vcvt.s32.f32 %v1111
        %v2464 = vcvt.s32.f32 %v1112
        %v2465 = vcvt.s32.f32 %v1113
        %v2466 = vcvt.s32.f32 %v1114
        %v2467 = vcvt.s32.f32 %v1115
        %v2468 = vcvt.s32.f32 %v1116
        %v2469 = vcvt.s32.f32 %v1117
        %v2470 = vcvt.s32.f32 %v1118
        %v2471 = vcvt.s32.f32 %v1119
        %v2472 = vcvt.s32.f32 %v1120
        %v2473 = vcvt.s32.f32 %v1121
        %v2474 = vcvt.s32.f32 %v1122
        %v2475 = vcvt.s32.f32 %v1123
        %v2476 = vcvt.s32.f32 %v1124
        %v2477 = vcvt.s32.f32 %v1125
        %v2478 = vcvt.s32.f32 %v1126
        %v2479 = vcvt.s32.f32 %v1127
        %v2480 = vcvt.s32.f32 %v1128
        %v2481 = vcvt.s32.f32 %v1129
        %v2482 = vcvt.s32.f32 %v1130
        %v2483 = vcvt.s32.f32 %v1131
        %v2484 = vcvt.s32.f32 %v1132
        %v2485 = vcvt.s32.f32 %v1133
        %v2486 = vcvt.s32.f32 %v1134
        %v2487 = vcvt.s32.f32 %v1135
        %v2488 = vcvt.s32.f32 %v1136
        %v2489 = vcvt.s32.f32 %v1137
        %v2490 = vcvt.s32.f32 %v1138
        %v2491 = vcvt.s32.f32 %v1139
        %v2492 = vcvt.s32.f32 %v1140
        %v2493 = vcvt.s32.f32 %v1141
        %v2494 = vcvt.s32.f32 %v1142
        %v2495 = vcvt.s32.f32 %v1143
        %v2496 = vcvt.s32.f32 %v1144
        %v2497 = vcvt.s32.f32 %v1145
        %v2498 = vcvt.s32.f32 %v1146
        %v2499 = vcvt.s32.f32 %v1147
        %v2500 = vcvt.s32.f32 %v1148
        %v2501 = vcvt.s32.f32 %v1149
        %v2502 = vcvt.s32.f32 %v1150
        %v2503 = vcvt.s32.f32 %v1151
        %v2504 = vcvt.s32.f32 %v1152
        %v2505 = vcvt.s32.f32 %v1153
        %v2506 = vcvt.s32.f32 %v1154
        %v2507 = vcvt.s32.f32 %v1155
        %v2508 = vcvt.s32.f32 %v1156
        %v2509 = vcvt.s32.f32 %v1157
        %v2510 = vcvt.s32.f32 %v1158
        %v2511 = vcvt.s32.f32 %v1159
        %v2512 = vcvt.s32.f32 %v1160
        %v2513 = vcvt.s32.f32 %v1161
        %v2514 = vcvt.s32.f32 %v1162
        %v2515 = vcvt.s32.f32 %v1163
        %v2516 = vcvt.s32.f32 %v1164
        %v2517 = vcvt.s32.f32 %v1165
        %v2518 = vcvt.s32.f32 %v1166
        %v2519 = vcvt.s32.f32 %v1167
        %v2520 = vcvt.s32.f32 %v1168
        %v2521 = vcvt.s32.f32 %v1169
        %v2522 = vcvt.s32.f32 %v1170
        %v2523 = vcvt.s32.f32 %v1171
        %v2524 = vcvt.s32.f32 %v1172
        %v2525 = vcvt.s32.f32 %v1173
        %v2526 = vcvt.s32.f32 %v1174
        %v2527 = vcvt.s32.f32 %v1175
        %v2528 = vcvt.s32.f32 %v1176
        %v2529 = vcvt.s32.f32 %v1177
        %v2530 = vcvt.s32.f32 %v1178
        %v2531 = vcvt.s32.f32 %v1179
        %v2532 = vcvt.s32.f32 %v1180
        %v2533 = vcvt.s32.f32 %v1181
        %v2534 = vcvt.s32.f32 %v1182
        %v2535 = vcvt.s32.f32 %v1183
        %v2536 = vcvt.s32.f32 %v1184
        %v2537 = vcvt.s32.f32 %v1185
        %v2538 = vcvt.s32.f32 %v1186
        %v2539 = vcvt.s32.f32 %v1187
        %v2540 = vcvt.s32.f32 %v1188
        %v2541 = vcvt.s32.f32 %v1189
        %v2542 = vcvt.s32.f32 %v1190
        %v2543 = vcvt.s32.f32 %v1191
        %v2544 = vcvt.s32.f32 %v1192
        %v2545 = vcvt.s32.f32 %v1193
        %v2546 = vcvt.s32.f32 %v1194
        %v2547 = vcvt.s32.f32 %v1195
        %v2548 = vcvt.s32.f32 %v1196
        %v2549 = vcvt.s32.f32 %v1197
        %v2550 = vcvt.s32.f32 %v1198
        %v2551 = vcvt.s32.f32 %v1199
        %v2552 = vcvt.s32.f32 %v1200
        %v2553 = vcvt.s32.f32 %v1201
        %v2554 = vcvt.s32.f32 %v1202
        %v2555 = vcvt.s32.f32 %v1203
        %v2556 = vcvt.s32.f32 %v1204
        %v2557 = vcvt.s32.f32 %v1205
        %v2558 = vcvt.s32.f32 %v1206
        %v2559 = vcvt.s32.f32 %v1207
        %v2560 = vcvt.s32.f32 %v1208
        %v2561 = vcvt.s32.f32 %v1209
        %v2562 = vcvt.s32.f32 %v1210
        %v2563 = vcvt.s32.f32 %v1211
        %v2564 = vcvt.s32.f32 %v1212
        %v2565 = vcvt.s32.f32 %v1213
        %v2566 = vcvt.s32.f32 %v1214
        %v2567 = vcvt.s32.f32 %v1215
        %v2568 = vcvt.s32.f32 %v1216
        %v2569 = vcvt.s32.f32 %v1217
        %v2570 = vcvt.s32.f32 %v1218
        %v2571 = vcvt.s32.f32 %v1219
        %v2572 = vcvt.s32.f32 %v1220
        %v2573 = vcvt.s32.f32 %v1221
        %v2574 = vcvt.s32.f32 %v1222
        %v2575 = vcvt.s32.f32 %v1223
        %v2576 = vcvt.s32.f32 %v1224
        %v2577 = vcvt.s32.f32 %v1225
        %v2578 = vcvt.s32.f32 %v1226
        %v2579 = vcvt.s32.f32 %v1227
        %v2580 = vcvt.s32.f32 %v1228
        %v2581 = vcvt.s32.f32 %v1229
        %v2582 = vcvt.s32.f32 %v1230
        %v2583 = vcvt.s32.f32 %v1231
        %v2584 = vcvt.s32.f32 %v1232
        %v2585 = vcvt.s32.f32 %v1233
        %v2586 = vcvt.s32.f32 %v1234
        %v2587 = vcvt.s32.f32 %v1235
        %v2588 = vcvt.s32.f32 %v1236
        %v2589 = vcvt.s32.f32 %v1237
        %v2590 = vcvt.s32.f32 %v1238
        %v2591 = vcvt.s32.f32 %v1239
        %v2592 = vcvt.s32.f32 %v1240
        %v2593 = vcvt.s32.f32 %v1241
        %v2594 = vcvt.s32.f32 %v1242
        %v2595 = vcvt.s32.f32 %v1243
        %v2596 = vcvt.s32.f32 %v1244
        %v2597 = vcvt.s32.f32 %v1245
        %v2598 = vcvt.s32.f32 %v1246
        %v2599 = vcvt.s32.f32 %v1247
        %v2600 = vcvt.s32.f32 %v1248
        %v2601 = vcvt.s32.f32 %v1249
        %v2602 = vcvt.s32.f32 %v1250
        %v2603 = vcvt.s32.f32 %v1251
        %v2604 = vcvt.s32.f32 %v1252
        %v2605 = vcvt.s32.f32 %v1253
        %v2606 = vcvt.s32.f32 %v1254
        %v2607 = vcvt.s32.f32 %v1255
        %v2608 = vcvt.s32.f32 %v1256
        %v2609 = vcvt.s32.f32 %v1257
        %v2610 = vcvt.s32.f32 %v1258
        %v2611 = vcvt.s32.f32 %v1259
        %v2612 = vcvt.s32.f32 %v1260
        %v2613 = vcvt.s32.f32 %v1261
        %v2614 = vcvt.s32.f32 %v1262
        %v2615 = vcvt.s32.f32 %v1263
        %v2616 = vcvt.s32.f32 %v1264
        %v2617 = vcvt.s32.f32 %v1265
        %v2618 = vcvt.s32.f32 %v1266
        %v2619 = vcvt.s32.f32 %v1267
        %v2620 = vcvt.s32.f32 %v1268
        %v2621 = vcvt.s32.f32 %v1269
        %v2622 = vcvt.s32.f32 %v1270
        %v2623 = vcvt.s32.f32 %v1271
        %v2624 = vcvt.s32.f32 %v1272
        %v2625 = vcvt.s32.f32 %v1273
        %v2626 = vcvt.s32.f32 %v1274
        %v2627 = vcvt.s32.f32 %v1275
        %v2628 = vcvt.s32.f32 %v1276
        %v2629 = vcvt.s32.f32 %v1277
        %v2630 = vcvt.s32.f32 %v1278
        %v2631 = vcvt.s32.f32 %v1279
        %v2632 = vcvt.s32.f32 %v1280
        %v2633 = vcvt.s32.f32 %v1281
        %v2634 = vcvt.s32.f32 %v1282
        %v2635 = vcvt.s32.f32 %v1283
        %v2636 = vcvt.s32.f32 %v1284
        %v2637 = vcvt.s32.f32 %v1285
        %v2638 = vcvt.s32.f32 %v1286
        %v2639 = vcvt.s32.f32 %v1287
        %v2640 = vcvt.s32.f32 %v1288
        %v2641 = vcvt.s32.f32 %v1289
        %v2642 = vcvt.s32.f32 %v1290
        %v2643 = vcvt.s32.f32 %v1291
        %v2644 = vcvt.s32.f32 %v1292
        %v2645 = vcvt.s32.f32 %v1293
        %v2646 = vcvt.s32.f32 %v1294
        %v2647 = vcvt.s32.f32 %v1295
        %v2648 = vcvt.s32.f32 %v1296
        %v2649 = vcvt.s32.f32 %v1297
        %v2650 = vcvt.s32.f32 %v1298
        %v2651 = vcvt.s32.f32 %v1299
        %v2652 = vcvt.s32.f32 %v1300
        %v2653 = vcvt.s32.f32 %v1301
        %v2654 = vcvt.s32.f32 %v1302
        %v2655 = vcvt.s32.f32 %v1303
        %v2656 = vcvt.s32.f32 %v1304
        %v2657 = vcvt.s32.f32 %v1305
        %v2658 = vcvt.s32.f32 %v1306
        %v2659 = vcvt.s32.f32 %v1307
        %v2660 = vcvt.s32.f32 %v1308
        %v2661 = vcvt.s32.f32 %v1309
        %v2662 = vcvt.s32.f32 %v1310
        %v2663 = vcvt.s32.f32 %v1311
        %v2664 = vcvt.s32.f32 %v1312
        %v2665 = vcvt.s32.f32 %v1313
        %v2666 = vcvt.s32.f32 %v1314
        %v2667 = vcvt.s32.f32 %v1315
        %v2668 = vcvt.s32.f32 %v1316
        %v2669 = vcvt.s32.f32 %v1317
        %v2670 = vcvt.s32.f32 %v1318
        %v2671 = vcvt.s32.f32 %v1319
        %v2672 = vcvt.s32.f32 %v1320
        %v2673 = vcvt.s32.f32 %v1321
        %v2674 = vcvt.s32.f32 %v1322
        %v2675 = vcvt.s32.f32 %v1323
        %v2676 = vcvt.s32.f32 %v1324
        %v2677 = vcvt.s32.f32 %v1325
        %v2678 = vcvt.s32.f32 %v1326
        %v2679 = vcvt.s32.f32 %v1327
        %v2680 = vcvt.s32.f32 %v1328
        %v2681 = vcvt.s32.f32 %v1329
        %v2682 = vcvt.s32.f32 %v1330
        %v2683 = vcvt.s32.f32 %v1331
        %v2684 = vcvt.s32.f32 %v1332
        %v2685 = vcvt.s32.f32 %v1333
        %v2686 = vcvt.s32.f32 %v1334
        %v2687 = vcvt.s32.f32 %v1335
        %v2688 = vcvt.s32.f32 %v1336
        %v2689 = vcvt.s32.f32 %v1337
        %v2690 = vcvt.s32.f32 %v1338
        %v2691 = vcvt.s32.f32 %v1339
        %v2692 = vcvt.s32.f32 %v1340
        %v2693 = vcvt.s32.f32 %v1341
        %v2694 = vcvt.s32.f32 %v1342
        %v2695 = vcvt.s32.f32 %v1343
        %v2696 = vcvt.s32.f32 %v1344
        %v2697 = vcvt.s32.f32 %v1345
        %v2698 = vcvt.s32.f32 %v1346
        %v2699 = vcvt.s32.f32 %v1347
        %v2700 = vcvt.s32.f32 %v1348
        %v2701 = vcvt.s32.f32 %v1349
        %v2702 = vcvt.s32.f32 %v1350
        %v2703 = vcvt.s32.f32 %v1351
        %v2704 = vcvt.s32.f32 %v1352
        %v2705 = vcvt.s32.f32 %v1353
        %v2706 = vcvt.s32.f32 %v1354
        %v2707 = vcvt.s32.f32 %v1355
        %v2708 = vcvt.s32.f32 %v1356
        %v2709 = vcvt.s32.f32 %v1357
        %v2710 = vcvt.s32.f32 %v1358
        %v2711 = vcvt.s32.f32 %v1359
        %v2712 = vcvt.s32.f32 %v1360
        %v2713 = vcvt.s32.f32 %v1361
        %v2714 = vcvt.s32.f32 %v1362
        %v2715 = vcvt.s32.f32 %v1363
        %v2716 = vcvt.s32.f32 %v1364
        %v2717 = vcvt.s32.f32 %v1365
        %v2718 = vcvt.s32.f32 %v1366
        %v2719 = vcvt.s32.f32 %v1367
        %v2720 = vcvt.s32.f32 %v1368
        %v2721 = vcvt.s32.f32 %v1369
        %v2722 = vcvt.s32.f32 %v1370
        %v2723 = vcvt.s32.f32 %v1371
        %v2724 = vcvt.s32.f32 %v1372
        %v2725 = vcvt.s32.f32 %v1373
        %v2726 = vcvt.s32.f32 %v1374
        %v2727 = vcvt.s32.f32 %v1375
        %v2728 = vcvt.s32.f32 %v1376
        %v2729 = vcvt.s32.f32 %v1377
        %v2730 = vcvt.s32.f32 %v1378
        %v2731 = vcvt.s32.f32 %v1379
        %v2732 = vcvt.s32.f32 %v1380
        %v2733 = vcvt.s32.f32 %v1381
        %v2734 = vcvt.s32.f32 %v1382
        %v2735 = vcvt.s32.f32 %v1383
        %v2736 = vcvt.s32.f32 %v1384
        %v2737 = vcvt.s32.f32 %v1385
        %v2738 = vcvt.s32.f32 %v1386
        %v2739 = vcvt.s32.f32 %v1387
        %v2740 = vcvt.s32.f32 %v1388
        %v2741 = vcvt.s32.f32 %v1389
        %v2742 = vcvt.s32.f32 %v1390
        %v2743 = vcvt.s32.f32 %v1391
        %v2744 = vcvt.s32.f32 %v1392
        %v2745 = vcvt.s32.f32 %v1393
        %v2746 = vcvt.s32.f32 %v1394
        %v2747 = vcvt.s32.f32 %v1395
        %v2748 = vcvt.s32.f32 %v1396
        %v2749 = vcvt.s32.f32 %v1397
        %v2750 = vcvt.s32.f32 %v1398
        %v2751 = vcvt.s32.f32 %v1399
        %v2752 = vcvt.s32.f32 %v1400
        %v2753 = vcvt.s32.f32 %v1401
        %v2754 = vcvt.s32.f32 %v1402
        %v2755 = vcvt.s32.f32 %v1403
        %v2756 = vcvt.s32.f32 %v1404
        %v2757 = vcvt.s32.f32 %v1405
        %v2758 = vcvt.s32.f32 %v1406
        %v2759 = vcvt.s32.f32 %v1407
        %v2760 = vcvt.s32.f32 %v1408
        %v2761 = vcvt.s32.f32 %v1409
        %v2762 = vcvt.s32.f32 %v1410
        %v2763 = vcvt.s32.f32 %v1411
        %v2764 = vcvt.s32.f32 %v1412
        %v2765 = vcvt.s32.f32 %v1413
        %v2766 = vcvt.s32.f32 %v1414
        %v2767 = vcvt.s32.f32 %v1415
        %v2768 = vcvt.s32.f32 %v1416
        %v2769 = vcvt.s32.f32 %v1417
        %v2770 = vcvt.s32.f32 %v1418
        %v2771 = vcvt.s32.f32 %v1419
        %v2772 = vcvt.s32.f32 %v1420
        %v2773 = vcvt.s32.f32 %v1421
        %v2774 = vcvt.s32.f32 %v1422
        %v2775 = vcvt.s32.f32 %v1423
        %v2776 = vcvt.s32.f32 %v1424
        %v2777 = vcvt.s32.f32 %v1425
        %v2778 = vcvt.s32.f32 %v1426
        %v2779 = vcvt.s32.f32 %v1427
        %v2780 = vcvt.s32.f32 %v1428
        %v2781 = vcvt.s32.f32 %v1429
        %v2782 = vcvt.s32.f32 %v1430
        %v2783 = vcvt.s32.f32 %v1431
        %v2784 = vcvt.s32.f32 %v1432
        %v2785 = vcvt.s32.f32 %v1433
        %v2786 = vcvt.s32.f32 %v1434
        %v2787 = vcvt.s32.f32 %v1435
        %v2788 = vcvt.s32.f32 %v1436
        %v2789 = vcvt.s32.f32 %v1437
        %v2790 = vcvt.s32.f32 %v1438
        %v2791 = vcvt.s32.f32 %v1439
        %v2792 = vcvt.s32.f32 %v1440
        %v2793 = vcvt.s32.f32 %v1441
        %v2794 = vcvt.s32.f32 %v1442
        %v2795 = vcvt.s32.f32 %v1443
        %v2796 = vcvt.s32.f32 %v1444
        %v2797 = vcvt.s32.f32 %v1445
        %v2798 = vcvt.s32.f32 %v1446
        %v2799 = vcvt.s32.f32 %v1447
        %v2800 = vcvt.s32.f32 %v1448
        %v2801 = vcvt.s32.f32 %v1449
        %v2802 = vcvt.s32.f32 %v1450
        %v2803 = vcvt.s32.f32 %v1451
        %v2804 = vcvt.s32.f32 %v1452
        %v2805 = vcvt.s32.f32 %v1453
        %v2806 = vcvt.s32.f32 %v1454
        %v2807 = vcvt.s32.f32 %v1455
        %v2808 = vcvt.s32.f32 %v1456
        %v2809 = vcvt.s32.f32 %v1457
        %v2810 = vcvt.s32.f32 %v1458
        %v2811 = vcvt.s32.f32 %v1459
        %v2812 = vcvt.s32.f32 %v1460
        %v2813 = vcvt.s32.f32 %v1461
        %v2814 = vcvt.s32.f32 %v1462
        %v2815 = vcvt.s32.f32 %v1463
        %v2816 = vcvt.s32.f32 %v1464
        %v2817 = vcvt.s32.f32 %v1465
        %v2818 = vcvt.s32.f32 %v1466
        %v2819 = vcvt.s32.f32 %v1467
        %v2820 = vcvt.s32.f32 %v1468
        %v2821 = vcvt.s32.f32 %v1469
        %v2822 = vcvt.s32.f32 %v1470
        %v2823 = vcvt.s32.f32 %v1471
        %v2824 = vcvt.s32.f32 %v1472
        %v2825 = vcvt.s32.f32 %v1473
        %v2826 = vcvt.s32.f32 %v1474
        %v2827 = vcvt.s32.f32 %v1475
        %v2828 = vcvt.s32.f32 %v1476
        %v2829 = vcvt.s32.f32 %v1477
        %v2830 = vcvt.s32.f32 %v1478
        %v2831 = vcvt.s32.f32 %v1479
        %v2832 = vcvt.s32.f32 %v1480
        %v2833 = vcvt.s32.f32 %v1481
        %v2834 = vcvt.s32.f32 %v1482
        %v2835 = vcvt.s32.f32 %v1483
        %v2836 = vcvt.s32.f32 %v1484
        %v2837 = vcvt.s32.f32 %v1485
        %v2838 = vcvt.s32.f32 %v1486
        %v2839 = vcvt.s32.f32 %v1487
        %v2840 = vcvt.s32.f32 %v1488
        %v2841 = vcvt.s32.f32 %v1489
        %v2842 = vcvt.s32.f32 %v1490
        %v2843 = vcvt.s32.f32 %v1491
        %v2844 = vcvt.s32.f32 %v1492
        %v2845 = vcvt.s32.f32 %v1493
        %v2846 = vcvt.s32.f32 %v1494
        %v2847 = vcvt.s32.f32 %v1495
        %v2848 = vcvt.s32.f32 %v1496
        %v2849 = vcvt.s32.f32 %v1497
        %v2850 = vcvt.s32.f32 %v1498
        %v2851 = vcvt.s32.f32 %v1499
        %v2852 = vcvt.s32.f32 %v1500
        %v2853 = vcvt.s32.f32 %v1501
        %v2854 = vcvt.s32.f32 %v1502
        %v2855 = vcvt.s32.f32 %v1503
        %v2856 = vcvt.s32.f32 %v1504
        %v2857 = vcvt.s32.f32 %v1505
        %v2858 = vcvt.s32.f32 %v1506
        %v2859 = vcvt.s32.f32 %v1507
        %v2860 = vcvt.s32.f32 %v1508
        %v2861 = vcvt.s32.f32 %v1509
        %v2862 = vcvt.s32.f32 %v1510
        %v2863 = vcvt.s32.f32 %v1511
        %v2864 = vcvt.s32.f32 %v1512
        %v2865 = vcvt.s32.f32 %v1513
        %v2866 = vcvt.s32.f32 %v1514
        %v2867 = vcvt.s32.f32 %v1515
        %v2868 = vcvt.s32.f32 %v1516
        %v2869 = vcvt.s32.f32 %v1517
        %v2870 = vcvt.s32.f32 %v1518
        %v2871 = vcvt.s32.f32 %v1519
        %v2872 = vcvt.s32.f32 %v1520
        %v2873 = vcvt.s32.f32 %v1521
        %v2874 = vcvt.s32.f32 %v1522
        %v2875 = vcvt.s32.f32 %v1523
        %v2876 = vcvt.s32.f32 %v1524
        %v2877 = vcvt.s32.f32 %v1525
        %v2878 = vcvt.s32.f32 %v1526
        %v2879 = vcvt.s32.f32 %v1527
        %v2880 = vcvt.s32.f32 %v1528
        %v2881 = vcvt.s32.f32 %v1529
        %v2882 = vcvt.s32.f32 %v1530
        %v2883 = vcvt.s32.f32 %v1531
        %v2884 = vcvt.s32.f32 %v1532
        %v2885 = vcvt.s32.f32 %v1533
        %v2886 = vcvt.s32.f32 %v1534
        %v2887 = vcvt.s32.f32 %v1535
        %v2888 = vcvt.s32.f32 %v1536
        %v2889 = vcvt.s32.f32 %v1537
        %v2890 = vcvt.s32.f32 %v1538
        %v2891 = vcvt.s32.f32 %v1539
        %v2892 = vcvt.s32.f32 %v1540
        %v2893 = vcvt.s32.f32 %v1541
        %v2894 = vcvt.s32.f32 %v1542
        %v2895 = vcvt.s32.f32 %v1543
        %v2896 = vcvt.s32.f32 %v1544
        %v2897 = vcvt.s32.f32 %v1545
        %v2898 = vcvt.s32.f32 %v1546
        %v2899 = vcvt.s32.f32 %v1547
        %v2900 = vcvt.s32.f32 %v1548
        %v2901 = vcvt.s32.f32 %v1549
        %v2902 = vcvt.s32.f32 %v1550
        %v2903 = vcvt.s32.f32 %v1551
        %v2904 = vcvt.s32.f32 %v1552
        %v2905 = vcvt.s32.f32 %v1553
        %v2906 = vcvt.s32.f32 %v1554
        %v2907 = vcvt.s32.f32 %v1555
        %v2908 = vcvt.s32.f32 %v1556
        %v2909 = vcvt.s32.f32 %v1557
        %v2910 = vcvt.s32.f32 %v1558
        %v2911 = vcvt.s32.f32 %v1559
        %v2912 = vcvt.s32.f32 %v1560
        %v2913 = vcvt.s32.f32 %v1561
        %v2914 = vcvt.s32.f32 %v1562
        %v2915 = vcvt.s32.f32 %v1563
        %v2916 = vcvt.s32.f32 %v1564
        %v2917 = vcvt.s32.f32 %v1565
        %v2918 = vcvt.s32.f32 %v1566
        %v2919 = vcvt.s32.f32 %v1567
        %v2920 = vcvt.s32.f32 %v1568
        %v2921 = vcvt.s32.f32 %v1569
        %v2922 = vcvt.s32.f32 %v1570
        %v2923 = vcvt.s32.f32 %v1571
        %v2924 = vcvt.s32.f32 %v1572
        %v2925 = vcvt.s32.f32 %v1573
        %v2926 = vcvt.s32.f32 %v1574
        %v2927 = vcvt.s32.f32 %v1575
        %v2928 = vcvt.s32.f32 %v1576
        %v2929 = vcvt.s32.f32 %v1577
        %v2930 = vcvt.s32.f32 %v1578
        %v2931 = vcvt.s32.f32 %v1579
        %v2932 = vcvt.s32.f32 %v1580
        %v2933 = vcvt.s32.f32 %v1581
        %v2934 = vcvt.s32.f32 %v1582
        %v2935 = vcvt.s32.f32 %v1583
        %v2936 = vcvt.s32.f32 %v1584
        %v2937 = vcvt.s32.f32 %v1585
        %v2938 = vcvt.s32.f32 %v1586
        %v2939 = vcvt.s32.f32 %v1587
        %v2940 = vcvt.s32.f32 %v1588
        %v2941 = vcvt.s32.f32 %v1589
        %v2942 = vcvt.s32.f32 %v1590
        %v2943 = vcvt.s32.f32 %v1591
        %v2944 = vcvt.s32.f32 %v1592
        %v2945 = vcvt.s32.f32 %v1593
        %v2946 = vcvt.s32.f32 %v1594
        %v2947 = vcvt.s32.f32 %v1595
        %v2948 = vcvt.s32.f32 %v1596
        %v2949 = vcvt.s32.f32 %v1597
        %v2950 = vcvt.s32.f32 %v1598
        %v2951 = vcvt.s32.f32 %v1599
        %v2952 = vcvt.s32.f32 %v1600
        %v2953 = vcvt.s32.f32 %v1601
        %v2954 = vcvt.s32.f32 %v1602
        %v2955 = vcvt.s32.f32 %v1603
        %v2956 = vcvt.s32.f32 %v1604
        %v2957 = vcvt.s32.f32 %v1605
        %v2958 = vcvt.s32.f32 %v1606
        %v2959 = vcvt.s32.f32 %v1607
        %v2960 = vcvt.s32.f32 %v1608
        %v2961 = vcvt.s32.f32 %v1609
        %v2962 = vcvt.s32.f32 %v1610
        %v2963 = vcvt.s32.f32 %v1611
        %v2964 = vcvt.s32.f32 %v1612
        %v2965 = vcvt.s32.f32 %v1613
        %v2966 = vcvt.s32.f32 %v1614
        %v2967 = vcvt.s32.f32 %v1615
        %v2968 = vcvt.s32.f32 %v1616
        %v2969 = vcvt.s32.f32 %v1617
        %v2970 = vcvt.s32.f32 %v1618
        %v2971 = vcvt.s32.f32 %v1619
        %v2972 = vcvt.s32.f32 %v1620
        %v2973 = vcvt.s32.f32 %v1621
        %v2974 = vcvt.s32.f32 %v1622
        %v2975 = vcvt.s32.f32 %v1623
        %v2976 = vcvt.s32.f32 %v1624
        %v2977 = vcvt.s32.f32 %v1625
        %v2978 = vcvt.s32.f32 %v1626
        %v2979 = vcvt.s32.f32 %v1627
        %v2980 = vcvt.s32.f32 %v1628
        %v2981 = vcvt.s32.f32 %v1629
        %v2982 = vcvt.s32.f32 %v1630
        %v2983 = vcvt.s32.f32 %v1631
        %v2984 = vcvt.s32.f32 %v1632
        %v2985 = vcvt.s32.f32 %v1633
        %v2986 = vcvt.s32.f32 %v1634
        %v2987 = vcvt.s32.f32 %v1635
        %v2988 = vcvt.s32.f32 %v1636
        %v2989 = vcvt.s32.f32 %v1637
        %v2990 = vcvt.s32.f32 %v1638
        %v2991 = vcvt.s32.f32 %v1639
        %v2992 = vcvt.s32.f32 %v1640
        %v2993 = vcvt.s32.f32 %v1641
        %v2994 = vcvt.s32.f32 %v1642
        %v2995 = vcvt.s32.f32 %v1643
        %v2996 = vcvt.s32.f32 %v1644
        %v2997 = vcvt.s32.f32 %v1645
        %v2998 = vcvt.s32.f32 %v1646
        %v2999 = vcvt.s32.f32 %v1647
        %v3000 = vcvt.s32.f32 %v1648
        %v3001 = vcvt.s32.f32 %v1649
        %v3002 = vcvt.s32.f32 %v1650
        %v3003 = vcvt.s32.f32 %v1651
        %v3004 = vcvt.s32.f32 %v1652
        %v3005 = vcvt.s32.f32 %v1653
        %v3006 = vcvt.s32.f32 %v1654
        %v3007 = vcvt.s32.f32 %v1655
        %v3008 = vcvt.s32.f32 %v1656
        %v3009 = vcvt.s32.f32 %v1657
        %v3010 = vcvt.s32.f32 %v1658
        %v3011 = vcvt.s32.f32 %v1659
        %v3012 = vcvt.s32.f32 %v1660
        %v3013 = vcvt.s32.f32 %v1661
        %v3014 = vcvt.s32.f32 %v1662
        %v3015 = vcvt.s32.f32 %v1663
        %v3016 = vcvt.s32.f32 %v1664
        %v3017 = vcvt.s32.f32 %v1665
        %v3018 = vcvt.s32.f32 %v1666
        %v3019 = vcvt.s32.f32 %v1667
        %v3020 = vcvt.s32.f32 %v1668
        %v3021 = vcvt.s32.f32 %v1669
        %v3022 = vcvt.s32.f32 %v1670
        %v3023 = vcvt.s32.f32 %v1671
        %v3024 = vcvt.s32.f32 %v1672
        %v3025 = vcvt.s32.f32 %v1673
        %v3026 = vcvt.s32.f32 %v1674
        %v3027 = vcvt.s32.f32 %v1675
        %v3028 = vcvt.s32.f32 %v1676
        %v3029 = vcvt.s32.f32 %v1677
        %v3030 = vcvt.s32.f32 %v1678
        %v3031 = vcvt.s32.f32 %v1679
        %v3032 = vcvt.s32.f32 %v1680
        %v3033 = vcvt.s32.f32 %v1681
        %v3034 = vcvt.s32.f32 %v1682
        %v3035 = vcvt.s32.f32 %v1683
        %v3036 = vcvt.s32.f32 %v1684
        %v3037 = vcvt.s32.f32 %v1685
        %v3038 = vcvt.s32.f32 %v1686
        %v3039 = vcvt.s32.f32 %v1687
        %v3040 = vcvt.s32.f32 %v1688
        %v3041 = vcvt.s32.f32 %v1689
        %v3042 = vcvt.s32.f32 %v1690
        %v3043 = vcvt.s32.f32 %v1691
        %v3044 = vcvt.s32.f32 %v1692
        %v3045 = vcvt.s32.f32 %v1693
        %v3046 = vcvt.s32.f32 %v1694
        %v3047 = vcvt.s32.f32 %v1695
        %v3048 = vcvt.s32.f32 %v1696
        %v3049 = vcvt.s32.f32 %v1697
        %v3050 = vcvt.s32.f32 %v1698
        %v3051 = vcvt.s32.f32 %v1699
        %v3052 = vcvt.s32.f32 %v1700
        %v3053 = vcvt.s32.f32 %v1701
        %v3054 = vcvt.s32.f32 %v1702
        %v3055 = vcvt.s32.f32 %v1703
        %v3056 = vcvt.s32.f32 %v1704
        %v3057 = vcvt.s32.f32 %v1705
        %v3058 = vcvt.s32.f32 %v1706
        %v3059 = vcvt.s32.f32 %v1707
        %v3060 = vcvt.s32.f32 %v1708
        %v3061 = vcvt.s32.f32 %v1709
        %v3062 = vcvt.s32.f32 %v1710
        %v3063 = vcvt.s32.f32 %v1711
        %v3064 = vcvt.s32.f32 %v1712
        %v3065 = vcvt.s32.f32 %v1713
        %v3066 = vcvt.s32.f32 %v1714
        %v3067 = vcvt.s32.f32 %v1715
        %v3068 = vcvt.s32.f32 %v1716
        %v3069 = vcvt.s32.f32 %v1717
        %v3070 = vcvt.s32.f32 %v1718
        %v3071 = vcvt.s32.f32 %v1719
        %v3072 = vcvt.s32.f32 %v1720
        %v3073 = vcvt.s32.f32 %v1721
        %v3074 = vcvt.s32.f32 %v1722
        %v3075 = vcvt.s32.f32 %v1723
        %v3076 = vcvt.s32.f32 %v1724
        %v3077 = vcvt.s32.f32 %v1725
        %v3078 = vcvt.s32.f32 %v1726
        %v3079 = vcvt.s32.f32 %v1727
        %v3080 = vcvt.s32.f32 %v1728
        %v3081 = vcvt.s32.f32 %v1729
        %v3082 = vcvt.s32.f32 %v1730
        %v3083 = vcvt.s32.f32 %v1731
        %v3084 = vcvt.s32.f32 %v1732
        %v3085 = vcvt.s32.f32 %v1733
        %v3086 = vcvt.s32.f32 %v1734
        %v3087 = vcvt.s32.f32 %v1735
        %v3088 = vcvt.s32.f32 %v1736
        %v3089 = vcvt.s32.f32 %v1737
        %v3090 = vcvt.s32.f32 %v1738
        %v3091 = vcvt.s32.f32 %v1739
        %v3092 = vcvt.s32.f32 %v1740
        %v3093 = vcvt.s32.f32 %v1741
        %v3094 = vcvt.s32.f32 %v1742
        %v3095 = vcvt.s32.f32 %v1743
        %v3096 = vcvt.s32.f32 %v1744
        %v3097 = vcvt.s32.f32 %v1745
        %v3098 = vcvt.s32.f32 %v1746
        %v3099 = vcvt.s32.f32 %v1747
        %v3100 = vcvt.s32.f32 %v1748
        %v3101 = vcvt.s32.f32 %v1749
        %v3102 = vcvt.s32.f32 %v1750
        %v3103 = vcvt.s32.f32 %v1751
        %v3104 = vcvt.s32.f32 %v1752
        %v3105 = vcvt.s32.f32 %v1753
        %v3106 = vcvt.s32.f32 %v1754
        %v3107 = vcvt.s32.f32 %v1755
        %v3108 = vcvt.s32.f32 %v1756
        %v3109 = vcvt.s32.f32 %v1757
        %v3110 = vcvt.s32.f32 %v1758
        %v3111 = vcvt.s32.f32 %v1759
        %v3112 = vcvt.s32.f32 %v1760
        %v3113 = vcvt.s32.f32 %v1761
        %v3114 = vcvt.s32.f32 %v1762
        %v3115 = vcvt.s32.f32 %v1763
        %v3116 = vcvt.s32.f32 %v1764
        %v3117 = vcvt.s32.f32 %v1765
        %v3118 = vcvt.s32.f32 %v1766
        %v3119 = vcvt.s32.f32 %v1767
        %v3120 = vcvt.s32.f32 %v1768
        %v3121 = vcvt.s32.f32 %v1769
        %v3122 = vcvt.s32.f32 %v1770
        %v3123 = vcvt.s32.f32 %v1771
        %v3124 = vcvt.s32.f32 %v1772
        %v3125 = vcvt.s32.f32 %v1773
        %v3126 = vcvt.s32.f32 %v1774
        %v3127 = vcvt.s32.f32 %v1775
        %v3128 = vcvt.s32.f32 %v1776
        %v3129 = vcvt.s32.f32 %v1777
        %v3130 = vcvt.s32.f32 %v1778
        %v3131 = vcvt.s32.f32 %v1779
        %v3132 = vcvt.s32.f32 %v1780
        %v3133 = vcvt.s32.f32 %v1781
        %v3134 = vcvt.s32.f32 %v1782
        %v3135 = vcvt.s32.f32 %v1783
        %v3136 = vcvt.s32.f32 %v1784
        %v3137 = vcvt.s32.f32 %v1785
        %v3138 = vcvt.s32.f32 %v1786
        %v3139 = vcvt.s32.f32 %v1787
        %v3140 = vcvt.s32.f32 %v1788
        %v3141 = vcvt.s32.f32 %v1789
        %v3142 = vcvt.s32.f32 %v1790
        %v3143 = vcvt.s32.f32 %v1791
        %v3144 = vcvt.s32.f32 %v1792
        %v3145 = vcvt.s32.f32 %v1793
        %v3146 = vcvt.s32.f32 %v1794
        %v3147 = vcvt.s32.f32 %v1795
        %v3148 = vcvt.s32.f32 %v1796
        %v3149 = vcvt.s32.f32 %v1797
        %v3150 = vcvt.s32.f32 %v1798
        %v3151 = vcvt.s32.f32 %v1799
        %v3152 = vcvt.s32.f32 %v1800
        %v3153 = vcvt.s32.f32 %v1801
        %v3154 = vcvt.s32.f32 %v1802
        %v3155 = vcvt.s32.f32 %v1803
        %v3156 = vcvt.s32.f32 %v1804
        %v3157 = vcvt.s32.f32 %v1805
        %v3158 = vcvt.s32.f32 %v1806
        %v3159 = vcvt.s32.f32 %v1807
        %v3160 = vcvt.s32.f32 %v1808
        %v3161 = vcvt.s32.f32 %v1809
        %v3162 = vcvt.s32.f32 %v1810
        %v3163 = vcvt.s32.f32 %v1811
        %v3164 = vcvt.s32.f32 %v1812
        %v3165 = vcvt.s32.f32 %v1813
        %v3166 = vcvt.s32.f32 %v1814
        %v3167 = vcvt.s32.f32 %v1815
        %v3168 = vcvt.s32.f32 %v1816
        %v3169 = vcvt.s32.f32 %v1817
        %v3170 = vcvt.s32.f32 %v1818
        %v3171 = vcvt.s32.f32 %v1819
        %v3172 = vcvt.s32.f32 %v1820
        %v3173 = vcvt.s32.f32 %v1821
        %v3174 = vcvt.s32.f32 %v1822
        %v3175 = vcvt.s32.f32 %v1823
        %v3176 = vcvt.s32.f32 %v1824
        %v3177 = vcvt.s32.f32 %v1825
        %v3178 = vcvt.s32.f32 %v1826
        %v3179 = vcvt.s32.f32 %v1827
        %v3180 = vcvt.s32.f32 %v1828
        %v3181 = vcvt.s32.f32 %v1829
        %v3182 = vcvt.s32.f32 %v1830
        %v3183 = vcvt.s32.f32 %v1831
        %v3184 = vcvt.s32.f32 %v1832
        %v3185 = vcvt.s32.f32 %v1833
        %v3186 = vcvt.s32.f32 %v1834
        %v3187 = vcvt.s32.f32 %v1835
        %v3188 = vcvt.s32.f32 %v1836
        %v3189 = vcvt.s32.f32 %v1837
        %v3190 = vcvt.s32.f32 %v1838
        %v3191 = vcvt.s32.f32 %v1839
        %v3192 = vcvt.s32.f32 %v1840
        %v3193 = vcvt.s32.f32 %v1841
        %v3194 = vcvt.s32.f32 %v1842
        %v3195 = vcvt.s32.f32 %v1843
        %v3196 = vcvt.s32.f32 %v1844
        %v3197 = vcvt.s32.f32 %v1845
        %v3198 = vcvt.s32.f32 %v1846
        %v3199 = vcvt.s32.f32 %v1847
        %v3200 = vcvt.s32.f32 %v1848
        %v3201 = vcvt.s32.f32 %v1849
        %v3202 = vcvt.s32.f32 %v1850
        %v3203 = vcvt.s32.f32 %v1851
        %v3204 = vcvt.s32.f32 %v1852
        %v3205 = vcvt.s32.f32 %v1853
        %v3206 = vcvt.s32.f32 %v1854
        %v3207 = vcvt.s32.f32 %v1855
        %v3208 = vcvt.s32.f32 %v1856
        %v3209 = vcvt.s32.f32 %v1857
        %v3210 = vcvt.s32.f32 %v1858
        %v3211 = vcvt.s32.f32 %v1859
        %v3212 = vcvt.s32.f32 %v1860
        %v3213 = vcvt.s32.f32 %v1861
        %v3214 = vcvt.s32.f32 %v1862
        %v3215 = vcvt.s32.f32 %v1863
        %v3216 = vcvt.s32.f32 %v1864
        %v3217 = vcvt.s32.f32 %v1865
        %v3218 = vcvt.s32.f32 %v1866
        %v3219 = vcvt.s32.f32 %v1867
        %v3220 = vcvt.s32.f32 %v1868
        %v3221 = vcvt.s32.f32 %v1869
        %v3222 = vcvt.s32.f32 %v1870
        %v3223 = vcvt.s32.f32 %v1871
        %v3224 = vcvt.s32.f32 %v1872
        %v3225 = vcvt.s32.f32 %v1873
        %v3226 = vcvt.s32.f32 %v1874
        %v3227 = vcvt.s32.f32 %v1875
        %v3228 = vcvt.s32.f32 %v1876
        %v3229 = vcvt.s32.f32 %v1877
        %v3230 = vcvt.s32.f32 %v1878
        %v3231 = vcvt.s32.f32 %v1879
        %v3232 = vcvt.s32.f32 %v1880
        %v3233 = vcvt.s32.f32 %v1881
        %v3234 = vcvt.s32.f32 %v1882
        %v3235 = vcvt.s32.f32 %v1883
        %v3236 = vcvt.s32.f32 %v1884
        %v3237 = vcvt.s32.f32 %v1885
        %v3238 = vcvt.s32.f32 %v1886
        %v3239 = vcvt.s32.f32 %v1887
        %v3240 = vcvt.s32.f32 %v1888
        %v3241 = vcvt.s32.f32 %v1889
        %v3242 = vcvt.s32.f32 %v1890
        %v3243 = vcvt.s32.f32 %v1891
        %v3244 = vcvt.s32.f32 %v1892
        %v3245 = vcvt.s32.f32 %v1893
        %v3246 = vcvt.s32.f32 %v1894
        %v3247 = vcvt.s32.f32 %v1895
        %v3248 = vcvt.s32.f32 %v1896
        %v3249 = vcvt.s32.f32 %v1897
        %v3250 = vcvt.s32.f32 %v1898
        %v3251 = vcvt.s32.f32 %v1899
        %v3252 = vcvt.s32.f32 %v1900
        %v3253 = vcvt.s32.f32 %v1901
        %v3254 = vcvt.s32.f32 %v1902
        %v3255 = vcvt.s32.f32 %v1903
        %v3256 = vcvt.s32.f32 %v1904
        %v3257 = vcvt.s32.f32 %v1905
        %v3258 = vcvt.s32.f32 %v1906
        %v3259 = vcvt.s32.f32 %v1907
        %v3260 = vcvt.s32.f32 %v1908
        %v3261 = vcvt.s32.f32 %v1909
        %v3262 = vcvt.s32.f32 %v1910
        %v3263 = vcvt.s32.f32 %v1911
        %v3264 = vcvt.s32.f32 %v1912
        %v3265 = vcvt.s32.f32 %v1913
        %v3266 = vcvt.s32.f32 %v1914
        %v3267 = vcvt.s32.f32 %v1915
        %v3268 = vcvt.s32.f32 %v1916
        %v3269 = vcvt.s32.f32 %v1917
        %v3270 = vcvt.s32.f32 %v1918
        %v3271 = vcvt.s32.f32 %v1919
        %v3272 = vcvt.s32.f32 %v1920
        %v3273 = vcvt.s32.f32 %v1921
        %v3274 = vcvt.s32.f32 %v1922
        %v3275 = vcvt.s32.f32 %v1923
        %v3276 = vcvt.s32.f32 %v1924
        %v3277 = vcvt.s32.f32 %v1925
        %v3278 = vcvt.s32.f32 %v1926
        %v3279 = vcvt.s32.f32 %v1927
        %v3280 = vcvt.s32.f32 %v1928
        %v3281 = vcvt.s32.f32 %v1929
        %v3282 = vcvt.s32.f32 %v1930
        %v3283 = vcvt.s32.f32 %v1931
        %v3284 = vcvt.s32.f32 %v1932
        %v3285 = vcvt.s32.f32 %v1933
        %v3286 = vcvt.s32.f32 %v1934
        %v3287 = vcvt.s32.f32 %v1935
        %v3288 = vcvt.s32.f32 %v1936
        %v3289 = vcvt.s32.f32 %v1937
        %v3290 = vcvt.s32.f32 %v1938
        %v3291 = vcvt.s32.f32 %v1939
        %v3292 = vcvt.s32.f32 %v1940
        %v3293 = vcvt.s32.f32 %v1941
        %v3294 = vcvt.s32.f32 %v1942
        %v3295 = vcvt.s32.f32 %v1943
        %v3296 = vcvt.s32.f32 %v1944
        %v3297 = vcvt.s32.f32 %v1945
        %v3298 = vcvt.s32.f32 %v1946
        %v3299 = vcvt.s32.f32 %v1947
        %v3300 = vcvt.s32.f32 %v1948
        %v3301 = vcvt.s32.f32 %v1949
        %v3302 = vcvt.s32.f32 %v1950
        %v3303 = vcvt.s32.f32 %v1951
        %v3304 = vcvt.s32.f32 %v1952
        %v3305 = vcvt.s32.f32 %v1953
        %v3306 = vcvt.s32.f32 %v1954
        %v3307 = vcvt.s32.f32 %v1955
        %v3308 = vcvt.s32.f32 %v1956
        %v3309 = vcvt.s32.f32 %v1957
        %v3310 = vcvt.s32.f32 %v1958
        %v3311 = vcvt.s32.f32 %v1959
        %v3312 = vcvt.s32.f32 %v1960
        %v3313 = vcvt.s32.f32 %v1961
        %v3314 = vcvt.s32.f32 %v1962
        %v3315 = vcvt.s32.f32 %v1963
        %v3316 = vcvt.s32.f32 %v1964
        %v3317 = vcvt.s32.f32 %v1965
        %v3318 = vcvt.s32.f32 %v1966
        %v3319 = vcvt.s32.f32 %v1967
        %v3320 = vcvt.s32.f32 %v1968
        %v3321 = vcvt.s32.f32 %v1969
        %v3322 = vcvt.s32.f32 %v1970
        %v3323 = vcvt.s32.f32 %v1971
        %v3324 = vcvt.s32.f32 %v1972
        %v3325 = vcvt.s32.f32 %v1973
        %v3326 = vcvt.s32.f32 %v1974
        %v3327 = vcvt.s32.f32 %v1975
        %v3328 = vcvt.s32.f32 %v1976
        %v3329 = vcvt.s32.f32 %v1977
        %v3330 = vcvt.s32.f32 %v1978
        %v3331 = vcvt.s32.f32 %v1979
        %v3332 = vcvt.s32.f32 %v1980
        %v3333 = vcvt.s32.f32 %v1981
        %v3334 = vcvt.s32.f32 %v1982
        %v3335 = vcvt.s32.f32 %v1983
        %v3336 = vcvt.s32.f32 %v1984
        %v3337 = vcvt.s32.f32 %v1985
        %v3338 = vcvt.s32.f32 %v1986
        %v3339 = vcvt.s32.f32 %v1987
        %v3340 = vcvt.s32.f32 %v1988
        %v3341 = vcvt.s32.f32 %v1989
        %v3342 = vcvt.s32.f32 %v1990
        %v3343 = vcvt.s32.f32 %v1991
        %v3344 = vcvt.s32.f32 %v1992
        %v3345 = vcvt.s32.f32 %v1993
        %v3346 = vcvt.s32.f32 %v1994
        %v3347 = vcvt.s32.f32 %v1995
        %v3348 = vcvt.s32.f32 %v1996
        %v3349 = vcvt.s32.f32 %v1997
        %v3350 = vcvt.s32.f32 %v1998
        %v3351 = vcvt.s32.f32 %v1999
        %v3352 = vcvt.s32.f32 %v2000
        %v3353 = vcvt.s32.f32 %v2001
        %v3354 = vcvt.s32.f32 %v2002
        %v3355 = vcvt.s32.f32 %v2003
        %v3356 = vcvt.s32.f32 %v2004
        %v3357 = vcvt.s32.f32 %v2005
        %v3358 = vcvt.s32.f32 %v2006
        %v3359 = vcvt.s32.f32 %v2007
        %v3360 = vcvt.s32.f32 %v2008
        %v3361 = vcvt.s32.f32 %v2009
        %v3362 = vcvt.s32.f32 %v2010
        %v3363 = vcvt.s32.f32 %v2011
        %v3364 = vcvt.s32.f32 %v2012
        %v3365 = vcvt.s32.f32 %v2013
        %v3366 = vcvt.s32.f32 %v2014
        %v3367 = vcvt.s32.f32 %v2015
        %v3368 = vcvt.s32.f32 %v2016
        %v3369 = vcvt.s32.f32 %v2017
        %v3370 = vcvt.s32.f32 %v2018
        %v3371 = vcvt.s32.f32 %v2019
        %v3372 = vcvt.s32.f32 %v2020
        %v3373 = vcvt.s32.f32 %v2021
        %v3374 = vcvt.s32.f32 %v2022
        %v3375 = vcvt.s32.f32 %v2023
        %v3376 = vcvt.s32.f32 %v2024
        %v3377 = vcvt.s32.f32 %v2025
        %v3378 = vcvt.s32.f32 %v2026
        %v3379 = vcvt.s32.f32 %v2027
        %v3380 = vcvt.s32.f32 %v2028
        %v3381 = vcvt.s32.f32 %v2029
        %v3382 = vcvt.s32.f32 %v2030
        %v3383 = vcvt.s32.f32 %v2031
        %v3384 = vcvt.s32.f32 %v2032
        %v3385 = vcvt.s32.f32 %v2033
        %v3386 = vcvt.s32.f32 %v2034
        %v3387 = vcvt.s32.f32 %v2035
        %v3388 = vcvt.s32.f32 %v2036
        %v3389 = vcvt.s32.f32 %v2037
        %v3390 = vcvt.s32.f32 %v2038
        %v3391 = vcvt.s32.f32 %v2039
        %v3392 = vcvt.s32.f32 %v2040
        %v3393 = vcvt.s32.f32 %v2041
        %v3394 = vcvt.s32.f32 %v2042
        %v3395 = vcvt.s32.f32 %v2043
        %v3396 = vcvt.s32.f32 %v2044
        %v3397 = vcvt.s32.f32 %v2045
        %v3398 = vcvt.s32.f32 %v2046
        %v3399 = vcvt.s32.f32 %v2047
        %v3400 = vcvt.s32.f32 %v2048
        %v3401 = vcvt.s32.f32 %v2049
        %v3402 = vcvt.s32.f32 %v2050
        %v3403 = vcvt.s32.f32 %v2051
        %v3404 = vcvt.s32.f32 %v2052
        %v3405 = vcvt.s32.f32 %v2053
        %v3406 = vcvt.s32.f32 %v2054
        %v3407 = vcvt.s32.f32 %v2055
        %v3408 = vcvt.s32.f32 %v2056
        %v3409 = vpack.c.bf16 %v2059, %v2057
        %v3410 = vpack.c.bf16 %v2060, %v2058
        %v3411 = vpack.c.bf16 %v2063, %v2061
        %v3412 = vpack.c.bf16 %v2064, %v2062
        %v3413 = vpack.c.bf16 %v2067, %v2065
        %v3414 = vpack.c.bf16 %v2068, %v2066
        %v3415 = vpack.c.bf16 %v2071, %v2069
        %v3416 = vpack.c.bf16 %v2072, %v2070
        %v3417 = vpack.c.bf16 %v2075, %v2073
        %v3418 = vpack.c.bf16 %v2076, %v2074
        %v3419 = vpack.c.bf16 %v2079, %v2077
        %v3420 = vpack.c.bf16 %v2080, %v2078
        %v3421 = vpack.c.bf16 %v2083, %v2081
        %v3422 = vpack.c.bf16 %v2084, %v2082
        %v3423 = vpack.c.bf16 %v2087, %v2085
        %v3424 = vpack.c.bf16 %v2088, %v2086
        %v3425 = vpack.c.bf16 %v2091, %v2089
        %v3426 = vpack.c.bf16 %v2092, %v2090
        %v3427 = vpack.c.bf16 %v2095, %v2093
        %v3428 = vpack.c.bf16 %v2096, %v2094
        %v3429 = vpack.c.bf16 %v2099, %v2097
        %v3430 = vpack.c.bf16 %v2100, %v2098
        %v3431 = vpack.c.bf16 %v2103, %v2101
        %v3432 = vpack.c.bf16 %v2104, %v2102
        %v3433 = vpack.c.bf16 %v2107, %v2105
        %v3434 = vpack.c.bf16 %v2108, %v2106
        %v3435 = vpack.c.bf16 %v2111, %v2109
        %v3436 = vpack.c.bf16 %v2112, %v2110
        %v3437 = vpack.c.bf16 %v2115, %v2113
        %v3438 = vpack.c.bf16 %v2116, %v2114
        %v3439 = vpack.c.bf16 %v2119, %v2117
        %v3440 = vpack.c.bf16 %v2120, %v2118
        %v3441 = vpack.c.bf16 %v2123, %v2121
        %v3442 = vpack.c.bf16 %v2124, %v2122
        %v3443 = vpack.c.bf16 %v2127, %v2125
        %v3444 = vpack.c.bf16 %v2128, %v2126
        %v3445 = vpack.c.bf16 %v2131, %v2129
        %v3446 = vpack.c.bf16 %v2132, %v2130
        %v3447 = vpack.c.bf16 %v2135, %v2133
        %v3448 = vpack.c.bf16 %v2136, %v2134
        %v3449 = vpack.c.bf16 %v2139, %v2137
        %v3450 = vpack.c.bf16 %v2140, %v2138
        %v3451 = vpack.c.bf16 %v2143, %v2141
        %v3452 = vpack.c.bf16 %v2144, %v2142
        %v3453 = vpack.c.bf16 %v2147, %v2145
        %v3454 = vpack.c.bf16 %v2148, %v2146
        %v3455 = vpack.c.bf16 %v2151, %v2149
        %v3456 = vpack.c.bf16 %v2152, %v2150
        %v3457 = vpack.c.bf16 %v2155, %v2153
        %v3458 = vpack.c.bf16 %v2156, %v2154
        %v3459 = vpack.c.bf16 %v2159, %v2157
        %v3460 = vpack.c.bf16 %v2160, %v2158
        %v3461 = vpack.c.bf16 %v2163, %v2161
        %v3462 = vpack.c.bf16 %v2164, %v2162
        %v3463 = vpack.c.bf16 %v2167, %v2165
        %v3464 = vpack.c.bf16 %v2168, %v2166
        %v3465 = vpack.c.bf16 %v2171, %v2169
        %v3466 = vpack.c.bf16 %v2172, %v2170
        %v3467 = vpack.c.bf16 %v2175, %v2173
        %v3468 = vpack.c.bf16 %v2176, %v2174
        %v3469 = vpack.c.bf16 %v2179, %v2177
        %v3470 = vpack.c.bf16 %v2180, %v2178
        %v3471 = vpack.c.bf16 %v2183, %v2181
        %v3472 = vpack.c.bf16 %v2184, %v2182
        %v3473 = vpack.c.bf16 %v2187, %v2185
        %v3474 = vpack.c.bf16 %v2188, %v2186
        %v3475 = vpack.c.bf16 %v2191, %v2189
        %v3476 = vpack.c.bf16 %v2192, %v2190
        %v3477 = vpack.c.bf16 %v2195, %v2193
        %v3478 = vpack.c.bf16 %v2196, %v2194
        %v3479 = vpack.c.bf16 %v2199, %v2197
        %v3480 = vpack.c.bf16 %v2200, %v2198
        %v3481 = vpack.c.bf16 %v2203, %v2201
        %v3482 = vpack.c.bf16 %v2204, %v2202
        %v3483 = vpack.c.bf16 %v2207, %v2205
        %v3484 = vpack.c.bf16 %v2208, %v2206
        %v3485 = vpack.c.bf16 %v2211, %v2209
        %v3486 = vpack.c.bf16 %v2212, %v2210
        %v3487 = vpack.c.bf16 %v2215, %v2213
        %v3488 = vpack.c.bf16 %v2216, %v2214
        %v3489 = vpack.c.bf16 %v2219, %v2217
        %v3490 = vpack.c.bf16 %v2220, %v2218
        %v3491 = vpack.c.bf16 %v2223, %v2221
        %v3492 = vpack.c.bf16 %v2224, %v2222
        %v3493 = vpack.c.bf16 %v2227, %v2225
        %v3494 = vpack.c.bf16 %v2228, %v2226
        %v3495 = vpack.c.bf16 %v2231, %v2229
        %v3496 = vpack.c.bf16 %v2232, %v2230
        %v3497 = vpack.c.bf16 %v2235, %v2233
        %v3498 = vpack.c.bf16 %v2236, %v2234
        %v3499 = vpack.c.bf16 %v2239, %v2237
        %v3500 = vpack.c.bf16 %v2240, %v2238
        %v3501 = vpack.c.bf16 %v2243, %v2241
        %v3502 = vpack.c.bf16 %v2244, %v2242
        %v3503 = vpack.c.bf16 %v2247, %v2245
        %v3504 = vpack.c.bf16 %v2248, %v2246
        %v3505 = vpack.c.bf16 %v2251, %v2249
        %v3506 = vpack.c.bf16 %v2252, %v2250
        %v3507 = vpack.c.bf16 %v2255, %v2253
        %v3508 = vpack.c.bf16 %v2256, %v2254
        %v3509 = vpack.c.bf16 %v2259, %v2257
        %v3510 = vpack.c.bf16 %v2260, %v2258
        %v3511 = vpack.c.bf16 %v2263, %v2261
        %v3512 = vpack.c.bf16 %v2264, %v2262
        %v3513 = vpack.c.bf16 %v2267, %v2265
        %v3514 = vpack.c.bf16 %v2268, %v2266
        %v3515 = vpack.c.bf16 %v2271, %v2269
        %v3516 = vpack.c.bf16 %v2272, %v2270
        %v3517 = vpack.c.bf16 %v2275, %v2273
        %v3518 = vpack.c.bf16 %v2276, %v2274
        %v3519 = vpack.c.bf16 %v2279, %v2277
        %v3520 = vpack.c.bf16 %v2280, %v2278
        %v3521 = vpack.c.bf16 %v2283, %v2281
        %v3522 = vpack.c.bf16 %v2284, %v2282
        %v3523 = vpack.c.bf16 %v2287, %v2285
        %v3524 = vpack.c.bf16 %v2288, %v2286
        %v3525 = vpack.c.bf16 %v2291, %v2289
        %v3526 = vpack.c.bf16 %v2292, %v2290
        %v3527 = vpack.c.bf16 %v2295, %v2293
        %v3528 = vpack.c.bf16 %v2296, %v2294
        %v3529 = vpack.c.bf16 %v2299, %v2297
        %v3530 = vpack.c.bf16 %v2300, %v2298
        %v3531 = vpack.c.bf16 %v2303, %v2301
        %v3532 = vpack.c.bf16 %v2304, %v2302
        %v3533 = vpack.c.bf16 %v2307, %v2305
        %v3534 = vpack.c.bf16 %v2308, %v2306
        %v3535 = vpack.c.bf16 %v2311, %v2309
        %v3536 = vpack.c.bf16 %v2312, %v2310
        %v3537 = vpack.c.bf16 %v2315, %v2313
        %v3538 = vpack.c.bf16 %v2316, %v2314
        %v3539 = vpack.c.bf16 %v2319, %v2317
        %v3540 = vpack.c.bf16 %v2320, %v2318
        %v3541 = vpack.c.bf16 %v2323, %v2321
        %v3542 = vpack.c.bf16 %v2324, %v2322
        %v3543 = vpack.c.bf16 %v2327, %v2325
        %v3544 = vpack.c.bf16 %v2328, %v2326
        %v3545 = vpack.c.bf16 %v2331, %v2329
        %v3546 = vpack.c.bf16 %v2332, %v2330
        %v3547 = vpack.c.bf16 %v2335, %v2333
        %v3548 = vpack.c.bf16 %v2336, %v2334
        %v3549 = vpack.c.bf16 %v2339, %v2337
        %v3550 = vpack.c.bf16 %v2340, %v2338
        %v3551 = vpack.c.bf16 %v2343, %v2341
        %v3552 = vpack.c.bf16 %v2344, %v2342
        %v3553 = vpack.c.bf16 %v2347, %v2345
        %v3554 = vpack.c.bf16 %v2348, %v2346
        %v3555 = vpack.c.bf16 %v2351, %v2349
        %v3556 = vpack.c.bf16 %v2352, %v2350
        %v3557 = vpack.c.bf16 %v2355, %v2353
        %v3558 = vpack.c.bf16 %v2356, %v2354
        %v3559 = vpack.c.bf16 %v2359, %v2357
        %v3560 = vpack.c.bf16 %v2360, %v2358
        %v3561 = vpack.c.bf16 %v2363, %v2361
        %v3562 = vpack.c.bf16 %v2364, %v2362
        %v3563 = vpack.c.bf16 %v2367, %v2365
        %v3564 = vpack.c.bf16 %v2368, %v2366
        %v3565 = vpack.c.bf16 %v2371, %v2369
        %v3566 = vpack.c.bf16 %v2372, %v2370
        %v3567 = vpack.c.bf16 %v2375, %v2373
        %v3568 = vpack.c.bf16 %v2376, %v2374
        %v3569 = vpack.c.bf16 %v2379, %v2377
        %v3570 = vpack.c.bf16 %v2380, %v2378
        %v3571 = vpack.c.bf16 %v2383, %v2381
        %v3572 = vpack.c.bf16 %v2384, %v2382
        %v3573 = vpack.c.bf16 %v2387, %v2385
        %v3574 = vpack.c.bf16 %v2388, %v2386
        %v3575 = vpack.c.bf16 %v2391, %v2389
        %v3576 = vpack.c.bf16 %v2392, %v2390
        %v3577 = vpack.c.bf16 %v2395, %v2393
        %v3578 = vpack.c.bf16 %v2396, %v2394
        %v3579 = vpack.c.bf16 %v2399, %v2397
        %v3580 = vpack.c.bf16 %v2400, %v2398
        %v3581 = vpack.c.bf16 %v2403, %v2401
        %v3582 = vpack.c.bf16 %v2404, %v2402
        %v3583 = vpack.c.bf16 %v2407, %v2405
        %v3584 = vpack.c.bf16 %v2408, %v2406
        %v3585 = vpack.c.bf16 %v2411, %v2409
        %v3586 = vpack.c.bf16 %v2412, %v2410
        %v3587 = vpack.c.bf16 %v2415, %v2413
        %v3588 = vpack.c.bf16 %v2416, %v2414
        %v3589 = vpack.c.bf16 %v2419, %v2417
        %v3590 = vpack.c.bf16 %v2420, %v2418
        %v3591 = vpack.c.bf16 %v2423, %v2421
        %v3592 = vpack.c.bf16 %v2424, %v2422
        %v3593 = vpack.c.bf16 %v2427, %v2425
        %v3594 = vpack.c.bf16 %v2428, %v2426
        %v3595 = vpack.c.bf16 %v2431, %v2429
        %v3596 = vpack.c.bf16 %v2432, %v2430
        %v3597 = vpack.c.bf16 %v2435, %v2433
        %v3598 = vpack.c.bf16 %v2436, %v2434
        %v3599 = vpack.c.bf16 %v2439, %v2437
        %v3600 = vpack.c.bf16 %v2440, %v2438
        %v3601 = vpack.c.bf16 %v2443, %v2441
        %v3602 = vpack.c.bf16 %v2444, %v2442
        %v3603 = vpack.c.bf16 %v2447, %v2445
        %v3604 = vpack.c.bf16 %v2448, %v2446
        %v3605 = vpack.c.bf16 %v2451, %v2449
        %v3606 = vpack.c.bf16 %v2452, %v2450
        %v3607 = vpack.c.bf16 %v2455, %v2453
        %v3608 = vpack.c.bf16 %v2456, %v2454
        %v3609 = vpack.c.bf16 %v2459, %v2457
        %v3610 = vpack.c.bf16 %v2460, %v2458
        %v3611 = vpack.c.bf16 %v2463, %v2461
        %v3612 = vpack.c.bf16 %v2464, %v2462
        %v3613 = vpack.c.bf16 %v2467, %v2465
        %v3614 = vpack.c.bf16 %v2468, %v2466
        %v3615 = vpack.c.bf16 %v2471, %v2469
        %v3616 = vpack.c.bf16 %v2472, %v2470
        %v3617 = vpack.c.bf16 %v2475, %v2473
        %v3618 = vpack.c.bf16 %v2476, %v2474
        %v3619 = vpack.c.bf16 %v2479, %v2477
        %v3620 = vpack.c.bf16 %v2480, %v2478
        %v3621 = vpack.c.bf16 %v2483, %v2481
        %v3622 = vpack.c.bf16 %v2484, %v2482
        %v3623 = vpack.c.bf16 %v2487, %v2485
        %v3624 = vpack.c.bf16 %v2488, %v2486
        %v3625 = vpack.c.bf16 %v2491, %v2489
        %v3626 = vpack.c.bf16 %v2492, %v2490
        %v3627 = vpack.c.bf16 %v2495, %v2493
        %v3628 = vpack.c.bf16 %v2496, %v2494
        %v3629 = vpack.c.bf16 %v2499, %v2497
        %v3630 = vpack.c.bf16 %v2500, %v2498
        %v3631 = vpack.c.bf16 %v2503, %v2501
        %v3632 = vpack.c.bf16 %v2504, %v2502
        %v3633 = vpack.c.bf16 %v2507, %v2505
        %v3634 = vpack.c.bf16 %v2508, %v2506
        %v3635 = vpack.c.bf16 %v2511, %v2509
        %v3636 = vpack.c.bf16 %v2512, %v2510
        %v3637 = vpack.c.bf16 %v2515, %v2513
        %v3638 = vpack.c.bf16 %v2516, %v2514
        %v3639 = vpack.c.bf16 %v2519, %v2517
        %v3640 = vpack.c.bf16 %v2520, %v2518
        %v3641 = vpack.c.bf16 %v2523, %v2521
        %v3642 = vpack.c.bf16 %v2524, %v2522
        %v3643 = vpack.c.bf16 %v2527, %v2525
        %v3644 = vpack.c.bf16 %v2528, %v2526
        %v3645 = vpack.c.bf16 %v2531, %v2529
        %v3646 = vpack.c.bf16 %v2532, %v2530
        %v3647 = vpack.c.bf16 %v2535, %v2533
        %v3648 = vpack.c.bf16 %v2536, %v2534
        %v3649 = vpack.c.bf16 %v2539, %v2537
        %v3650 = vpack.c.bf16 %v2540, %v2538
        %v3651 = vpack.c.bf16 %v2543, %v2541
        %v3652 = vpack.c.bf16 %v2544, %v2542
        %v3653 = vpack.c.bf16 %v2547, %v2545
        %v3654 = vpack.c.bf16 %v2548, %v2546
        %v3655 = vpack.c.bf16 %v2551, %v2549
        %v3656 = vpack.c.bf16 %v2552, %v2550
        %v3657 = vpack.c.bf16 %v2555, %v2553
        %v3658 = vpack.c.bf16 %v2556, %v2554
        %v3659 = vpack.c.bf16 %v2559, %v2557
        %v3660 = vpack.c.bf16 %v2560, %v2558
        %v3661 = vpack.c.bf16 %v2563, %v2561
        %v3662 = vpack.c.bf16 %v2564, %v2562
        %v3663 = vpack.c.bf16 %v2567, %v2565
        %v3664 = vpack.c.bf16 %v2568, %v2566
        %v3665 = vpack.c.bf16 %v2571, %v2569
        %v3666 = vpack.c.bf16 %v2572, %v2570
        %v3667 = vpack.c.bf16 %v2575, %v2573
        %v3668 = vpack.c.bf16 %v2576, %v2574
        %v3669 = vpack.c.bf16 %v2579, %v2577
        %v3670 = vpack.c.bf16 %v2580, %v2578
        %v3671 = vpack.c.bf16 %v2583, %v2581
        %v3672 = vpack.c.bf16 %v2584, %v2582
        %v3673 = vpack.c.bf16 %v2587, %v2585
        %v3674 = vpack.c.bf16 %v2588, %v2586
        %v3675 = vpack.c.bf16 %v2591, %v2589
        %v3676 = vpack.c.bf16 %v2592, %v2590
        %v3677 = vpack.c.bf16 %v2595, %v2593
        %v3678 = vpack.c.bf16 %v2596, %v2594
        %v3679 = vpack.c.bf16 %v2599, %v2597
        %v3680 = vpack.c.bf16 %v2600, %v2598
        %v3681 = vpack.c.bf16 %v2603, %v2601
        %v3682 = vpack.c.bf16 %v2604, %v2602
        %v3683 = vpack.c.bf16 %v2607, %v2605
        %v3684 = vpack.c.bf16 %v2608, %v2606
        %v3685 = vpack.c.bf16 %v2611, %v2609
        %v3686 = vpack.c.bf16 %v2612, %v2610
        %v3687 = vpack.c.bf16 %v2615, %v2613
        %v3688 = vpack.c.bf16 %v2616, %v2614
        %v3689 = vpack.c.bf16 %v2619, %v2617
        %v3690 = vpack.c.bf16 %v2620, %v2618
        %v3691 = vpack.c.bf16 %v2623, %v2621
        %v3692 = vpack.c.bf16 %v2624, %v2622
        %v3693 = vpack.c.bf16 %v2627, %v2625
        %v3694 = vpack.c.bf16 %v2628, %v2626
        %v3695 = vpack.c.bf16 %v2631, %v2629
        %v3696 = vpack.c.bf16 %v2632, %v2630
        %v3697 = vpack.c.bf16 %v2635, %v2633
        %v3698 = vpack.c.bf16 %v2636, %v2634
        %v3699 = vpack.c.bf16 %v2639, %v2637
        %v3700 = vpack.c.bf16 %v2640, %v2638
        %v3701 = vpack.c.bf16 %v2643, %v2641
        %v3702 = vpack.c.bf16 %v2644, %v2642
        %v3703 = vpack.c.bf16 %v2647, %v2645
        %v3704 = vpack.c.bf16 %v2648, %v2646
        %v3705 = vpack.c.bf16 %v2651, %v2649
        %v3706 = vpack.c.bf16 %v2652, %v2650
        %v3707 = vpack.c.bf16 %v2655, %v2653
        %v3708 = vpack.c.bf16 %v2656, %v2654
        %v3709 = vpack.c.bf16 %v2659, %v2657
        %v3710 = vpack.c.bf16 %v2660, %v2658
        %v3711 = vpack.c.bf16 %v2663, %v2661
        %v3712 = vpack.c.bf16 %v2664, %v2662
        %v3713 = vpack.c.bf16 %v2667, %v2665
        %v3714 = vpack.c.bf16 %v2668, %v2666
        %v3715 = vpack.c.bf16 %v2671, %v2669
        %v3716 = vpack.c.bf16 %v2672, %v2670
        %v3717 = vpack.c.bf16 %v2675, %v2673
        %v3718 = vpack.c.bf16 %v2676, %v2674
        %v3719 = vpack.c.bf16 %v2679, %v2677
        %v3720 = vpack.c.bf16 %v2680, %v2678
        %v3721 = vpack.c.bf16 %v2683, %v2681
        %v3722 = vpack.c.bf16 %v2684, %v2682
        %v3723 = vpack.c.bf16 %v2687, %v2685
        %v3724 = vpack.c.bf16 %v2688, %v2686
        %v3725 = vpack.c.bf16 %v2691, %v2689
        %v3726 = vpack.c.bf16 %v2692, %v2690
        %v3727 = vpack.c.bf16 %v2695, %v2693
        %v3728 = vpack.c.bf16 %v2696, %v2694
        %v3729 = vpack.c.bf16 %v2699, %v2697
        %v3730 = vpack.c.bf16 %v2700, %v2698
        %v3731 = vpack.c.bf16 %v2703, %v2701
        %v3732 = vpack.c.bf16 %v2704, %v2702
        %v3733 = vpack.c.bf16 %v2707, %v2705
        %v3734 = vpack.c.bf16 %v2708, %v2706
        %v3735 = vpack.c.bf16 %v2711, %v2709
        %v3736 = vpack.c.bf16 %v2712, %v2710
        %v3737 = vpack.c.bf16 %v2715, %v2713
        %v3738 = vpack.c.bf16 %v2716, %v2714
        %v3739 = vpack.c.bf16 %v2719, %v2717
        %v3740 = vpack.c.bf16 %v2720, %v2718
        %v3741 = vpack.c.bf16 %v2723, %v2721
        %v3742 = vpack.c.bf16 %v2724, %v2722
        %v3743 = vpack.c.bf16 %v2727, %v2725
        %v3744 = vpack.c.bf16 %v2728, %v2726
        %v3745 = vpack.c.bf16 %v2731, %v2729
        %v3746 = vpack.c.bf16 %v2732, %v2730
        %v3747 = vpack.c.bf16 %v2735, %v2733
        %v3748 = vpack.c.bf16 %v2736, %v2734
        %v3749 = vpack.c.bf16 %v2739, %v2737
        %v3750 = vpack.c.bf16 %v2740, %v2738
        %v3751 = vpack.c.bf16 %v2743, %v2741
        %v3752 = vpack.c.bf16 %v2744, %v2742
        %v3753 = vpack.c.bf16 %v2747, %v2745
        %v3754 = vpack.c.bf16 %v2748, %v2746
        %v3755 = vpack.c.bf16 %v2751, %v2749
        %v3756 = vpack.c.bf16 %v2752, %v2750
        %v3757 = vpack.c.bf16 %v2755, %v2753
        %v3758 = vpack.c.bf16 %v2756, %v2754
        %v3759 = vpack.c.bf16 %v2759, %v2757
        %v3760 = vpack.c.bf16 %v2760, %v2758
        %v3761 = vpack.c.bf16 %v2763, %v2761
        %v3762 = vpack.c.bf16 %v2764, %v2762
        %v3763 = vpack.c.bf16 %v2767, %v2765
        %v3764 = vpack.c.bf16 %v2768, %v2766
        %v3765 = vpack.c.bf16 %v2771, %v2769
        %v3766 = vpack.c.bf16 %v2772, %v2770
        %v3767 = vpack.c.bf16 %v2775, %v2773
        %v3768 = vpack.c.bf16 %v2776, %v2774
        %v3769 = vpack.c.bf16 %v2779, %v2777
        %v3770 = vpack.c.bf16 %v2780, %v2778
        %v3771 = vpack.c.bf16 %v2783, %v2781
        %v3772 = vpack.c.bf16 %v2784, %v2782
        %v3773 = vpack.c.bf16 %v2787, %v2785
        %v3774 = vpack.c.bf16 %v2788, %v2786
        %v3775 = vpack.c.bf16 %v2791, %v2789
        %v3776 = vpack.c.bf16 %v2792, %v2790
        %v3777 = vpack.c.bf16 %v2795, %v2793
        %v3778 = vpack.c.bf16 %v2796, %v2794
        %v3779 = vpack.c.bf16 %v2799, %v2797
        %v3780 = vpack.c.bf16 %v2800, %v2798
        %v3781 = vpack.c.bf16 %v2803, %v2801
        %v3782 = vpack.c.bf16 %v2804, %v2802
        %v3783 = vpack.c.bf16 %v2807, %v2805
        %v3784 = vpack.c.bf16 %v2808, %v2806
        %v3785 = vpack.c.bf16 %v2811, %v2809
        %v3786 = vpack.c.bf16 %v2812, %v2810
        %v3787 = vpack.c.bf16 %v2815, %v2813
        %v3788 = vpack.c.bf16 %v2816, %v2814
        %v3789 = vpack.c.bf16 %v2819, %v2817
        %v3790 = vpack.c.bf16 %v2820, %v2818
        %v3791 = vpack.c.bf16 %v2823, %v2821
        %v3792 = vpack.c.bf16 %v2824, %v2822
        %v3793 = vpack.c.bf16 %v2827, %v2825
        %v3794 = vpack.c.bf16 %v2828, %v2826
        %v3795 = vpack.c.bf16 %v2831, %v2829
        %v3796 = vpack.c.bf16 %v2832, %v2830
        %v3797 = vpack.c.bf16 %v2835, %v2833
        %v3798 = vpack.c.bf16 %v2836, %v2834
        %v3799 = vpack.c.bf16 %v2839, %v2837
        %v3800 = vpack.c.bf16 %v2840, %v2838
        %v3801 = vpack.c.bf16 %v2843, %v2841
        %v3802 = vpack.c.bf16 %v2844, %v2842
        %v3803 = vpack.c.bf16 %v2847, %v2845
        %v3804 = vpack.c.bf16 %v2848, %v2846
        %v3805 = vpack.c.bf16 %v2851, %v2849
        %v3806 = vpack.c.bf16 %v2852, %v2850
        %v3807 = vpack.c.bf16 %v2855, %v2853
        %v3808 = vpack.c.bf16 %v2856, %v2854
        %v3809 = vpack.c.bf16 %v2859, %v2857
        %v3810 = vpack.c.bf16 %v2860, %v2858
        %v3811 = vpack.c.bf16 %v2863, %v2861
        %v3812 = vpack.c.bf16 %v2864, %v2862
        %v3813 = vpack.c.bf16 %v2867, %v2865
        %v3814 = vpack.c.bf16 %v2868, %v2866
        %v3815 = vpack.c.bf16 %v2871, %v2869
        %v3816 = vpack.c.bf16 %v2872, %v2870
        %v3817 = vpack.c.bf16 %v2875, %v2873
        %v3818 = vpack.c.bf16 %v2876, %v2874
        %v3819 = vpack.c.bf16 %v2879, %v2877
        %v3820 = vpack.c.bf16 %v2880, %v2878
        %v3821 = vpack.c.bf16 %v2883, %v2881
        %v3822 = vpack.c.bf16 %v2884, %v2882
        %v3823 = vpack.c.bf16 %v2887, %v2885
        %v3824 = vpack.c.bf16 %v2888, %v2886
        %v3825 = vpack.c.bf16 %v2891, %v2889
        %v3826 = vpack.c.bf16 %v2892, %v2890
        %v3827 = vpack.c.bf16 %v2895, %v2893
        %v3828 = vpack.c.bf16 %v2896, %v2894
        %v3829 = vpack.c.bf16 %v2899, %v2897
        %v3830 = vpack.c.bf16 %v2900, %v2898
        %v3831 = vpack.c.bf16 %v2903, %v2901
        %v3832 = vpack.c.bf16 %v2904, %v2902
        %v3833 = vpack.c.bf16 %v2907, %v2905
        %v3834 = vpack.c.bf16 %v2908, %v2906
        %v3835 = vpack.c.bf16 %v2911, %v2909
        %v3836 = vpack.c.bf16 %v2912, %v2910
        %v3837 = vpack.c.bf16 %v2915, %v2913
        %v3838 = vpack.c.bf16 %v2916, %v2914
        %v3839 = vpack.c.bf16 %v2919, %v2917
        %v3840 = vpack.c.bf16 %v2920, %v2918
        %v3841 = vpack.c.bf16 %v2923, %v2921
        %v3842 = vpack.c.bf16 %v2924, %v2922
        %v3843 = vpack.c.bf16 %v2927, %v2925
        %v3844 = vpack.c.bf16 %v2928, %v2926
        %v3845 = vpack.c.bf16 %v2931, %v2929
        %v3846 = vpack.c.bf16 %v2932, %v2930
        %v3847 = vpack.c.bf16 %v2935, %v2933
        %v3848 = vpack.c.bf16 %v2936, %v2934
        %v3849 = vpack.c.bf16 %v2939, %v2937
        %v3850 = vpack.c.bf16 %v2940, %v2938
        %v3851 = vpack.c.bf16 %v2943, %v2941
        %v3852 = vpack.c.bf16 %v2944, %v2942
        %v3853 = vpack.c.bf16 %v2947, %v2945
        %v3854 = vpack.c.bf16 %v2948, %v2946
        %v3855 = vpack.c.bf16 %v2951, %v2949
        %v3856 = vpack.c.bf16 %v2952, %v2950
        %v3857 = vpack.c.bf16 %v2955, %v2953
        %v3858 = vpack.c.bf16 %v2956, %v2954
        %v3859 = vpack.c.bf16 %v2959, %v2957
        %v3860 = vpack.c.bf16 %v2960, %v2958
        %v3861 = vpack.c.bf16 %v2963, %v2961
        %v3862 = vpack.c.bf16 %v2964, %v2962
        %v3863 = vpack.c.bf16 %v2967, %v2965
        %v3864 = vpack.c.bf16 %v2968, %v2966
        %v3865 = vpack.c.bf16 %v2971, %v2969
        %v3866 = vpack.c.bf16 %v2972, %v2970
        %v3867 = vpack.c.bf16 %v2975, %v2973
        %v3868 = vpack.c.bf16 %v2976, %v2974
        %v3869 = vpack.c.bf16 %v2979, %v2977
        %v3870 = vpack.c.bf16 %v2980, %v2978
        %v3871 = vpack.c.bf16 %v2983, %v2981
        %v3872 = vpack.c.bf16 %v2984, %v2982
        %v3873 = vpack.c.bf16 %v2987, %v2985
        %v3874 = vpack.c.bf16 %v2988, %v2986
        %v3875 = vpack.c.bf16 %v2991, %v2989
        %v3876 = vpack.c.bf16 %v2992, %v2990
        %v3877 = vpack.c.bf16 %v2995, %v2993
        %v3878 = vpack.c.bf16 %v2996, %v2994
        %v3879 = vpack.c.bf16 %v2999, %v2997
        %v3880 = vpack.c.bf16 %v3000, %v2998
        %v3881 = vpack.c.bf16 %v3003, %v3001
        %v3882 = vpack.c.bf16 %v3004, %v3002
        %v3883 = vpack.c.bf16 %v3007, %v3005
        %v3884 = vpack.c.bf16 %v3008, %v3006
        %v3885 = vpack.c.bf16 %v3011, %v3009
        %v3886 = vpack.c.bf16 %v3012, %v3010
        %v3887 = vpack.c.bf16 %v3015, %v3013
        %v3888 = vpack.c.bf16 %v3016, %v3014
        %v3889 = vpack.c.bf16 %v3019, %v3017
        %v3890 = vpack.c.bf16 %v3020, %v3018
        %v3891 = vpack.c.bf16 %v3023, %v3021
        %v3892 = vpack.c.bf16 %v3024, %v3022
        %v3893 = vpack.c.bf16 %v3027, %v3025
        %v3894 = vpack.c.bf16 %v3028, %v3026
        %v3895 = vpack.c.bf16 %v3031, %v3029
        %v3896 = vpack.c.bf16 %v3032, %v3030
        %v3897 = vpack.c.bf16 %v3035, %v3033
        %v3898 = vpack.c.bf16 %v3036, %v3034
        %v3899 = vpack.c.bf16 %v3039, %v3037
        %v3900 = vpack.c.bf16 %v3040, %v3038
        %v3901 = vpack.c.bf16 %v3043, %v3041
        %v3902 = vpack.c.bf16 %v3044, %v3042
        %v3903 = vpack.c.bf16 %v3047, %v3045
        %v3904 = vpack.c.bf16 %v3048, %v3046
        %v3905 = vpack.c.bf16 %v3051, %v3049
        %v3906 = vpack.c.bf16 %v3052, %v3050
        %v3907 = vpack.c.bf16 %v3055, %v3053
        %v3908 = vpack.c.bf16 %v3056, %v3054
        %v3909 = vpack.c.bf16 %v3059, %v3057
        %v3910 = vpack.c.bf16 %v3060, %v3058
        %v3911 = vpack.c.bf16 %v3063, %v3061
        %v3912 = vpack.c.bf16 %v3064, %v3062
        %v3913 = vpack.c.bf16 %v3067, %v3065
        %v3914 = vpack.c.bf16 %v3068, %v3066
        %v3915 = vpack.c.bf16 %v3071, %v3069
        %v3916 = vpack.c.bf16 %v3072, %v3070
        %v3917 = vpack.c.bf16 %v3075, %v3073
        %v3918 = vpack.c.bf16 %v3076, %v3074
        %v3919 = vpack.c.bf16 %v3079, %v3077
        %v3920 = vpack.c.bf16 %v3080, %v3078
        %v3921 = vpack.c.bf16 %v3083, %v3081
        %v3922 = vpack.c.bf16 %v3084, %v3082
        %v3923 = vpack.c.bf16 %v3087, %v3085
        %v3924 = vpack.c.bf16 %v3088, %v3086
        %v3925 = vpack.c.bf16 %v3091, %v3089
        %v3926 = vpack.c.bf16 %v3092, %v3090
        %v3927 = vpack.c.bf16 %v3095, %v3093
        %v3928 = vpack.c.bf16 %v3096, %v3094
        %v3929 = vpack.c.bf16 %v3099, %v3097
        %v3930 = vpack.c.bf16 %v3100, %v3098
        %v3931 = vpack.c.bf16 %v3103, %v3101
        %v3932 = vpack.c.bf16 %v3104, %v3102
        %v3933 = vpack.c.bf16 %v3107, %v3105
        %v3934 = vpack.c.bf16 %v3108, %v3106
        %v3935 = vpack.c.bf16 %v3111, %v3109
        %v3936 = vpack.c.bf16 %v3112, %v3110
        %v3937 = vpack.c.bf16 %v3115, %v3113
        %v3938 = vpack.c.bf16 %v3116, %v3114
        %v3939 = vpack.c.bf16 %v3119, %v3117
        %v3940 = vpack.c.bf16 %v3120, %v3118
        %v3941 = vpack.c.bf16 %v3123, %v3121
        %v3942 = vpack.c.bf16 %v3124, %v3122
        %v3943 = vpack.c.bf16 %v3127, %v3125
        %v3944 = vpack.c.bf16 %v3128, %v3126
        %v3945 = vpack.c.bf16 %v3131, %v3129
        %v3946 = vpack.c.bf16 %v3132, %v3130
        %v3947 = vpack.c.bf16 %v3135, %v3133
        %v3948 = vpack.c.bf16 %v3136, %v3134
        %v3949 = vpack.c.bf16 %v3139, %v3137
        %v3950 = vpack.c.bf16 %v3140, %v3138
        %v3951 = vpack.c.bf16 %v3143, %v3141
        %v3952 = vpack.c.bf16 %v3144, %v3142
        %v3953 = vpack.c.bf16 %v3147, %v3145
        %v3954 = vpack.c.bf16 %v3148, %v3146
        %v3955 = vpack.c.bf16 %v3151, %v3149
        %v3956 = vpack.c.bf16 %v3152, %v3150
        %v3957 = vpack.c.bf16 %v3155, %v3153
        %v3958 = vpack.c.bf16 %v3156, %v3154
        %v3959 = vpack.c.bf16 %v3159, %v3157
        %v3960 = vpack.c.bf16 %v3160, %v3158
        %v3961 = vpack.c.bf16 %v3163, %v3161
        %v3962 = vpack.c.bf16 %v3164, %v3162
        %v3963 = vpack.c.bf16 %v3167, %v3165
        %v3964 = vpack.c.bf16 %v3168, %v3166
        %v3965 = vpack.c.bf16 %v3171, %v3169
        %v3966 = vpack.c.bf16 %v3172, %v3170
        %v3967 = vpack.c.bf16 %v3175, %v3173
        %v3968 = vpack.c.bf16 %v3176, %v3174
        %v3969 = vpack.c.bf16 %v3179, %v3177
        %v3970 = vpack.c.bf16 %v3180, %v3178
        %v3971 = vpack.c.bf16 %v3183, %v3181
        %v3972 = vpack.c.bf16 %v3184, %v3182
        %v3973 = vpack.c.bf16 %v3187, %v3185
        %v3974 = vpack.c.bf16 %v3188, %v3186
        %v3975 = vpack.c.bf16 %v3191, %v3189
        %v3976 = vpack.c.bf16 %v3192, %v3190
        %v3977 = vpack.c.bf16 %v3195, %v3193
        %v3978 = vpack.c.bf16 %v3196, %v3194
        %v3979 = vpack.c.bf16 %v3199, %v3197
        %v3980 = vpack.c.bf16 %v3200, %v3198
        %v3981 = vpack.c.bf16 %v3203, %v3201
        %v3982 = vpack.c.bf16 %v3204, %v3202
        %v3983 = vpack.c.bf16 %v3207, %v3205
        %v3984 = vpack.c.bf16 %v3208, %v3206
        %v3985 = vpack.c.bf16 %v3211, %v3209
        %v3986 = vpack.c.bf16 %v3212, %v3210
        %v3987 = vpack.c.bf16 %v3215, %v3213
        %v3988 = vpack.c.bf16 %v3216, %v3214
        %v3989 = vpack.c.bf16 %v3219, %v3217
        %v3990 = vpack.c.bf16 %v3220, %v3218
        %v3991 = vpack.c.bf16 %v3223, %v3221
        %v3992 = vpack.c.bf16 %v3224, %v3222
        %v3993 = vpack.c.bf16 %v3227, %v3225
        %v3994 = vpack.c.bf16 %v3228, %v3226
        %v3995 = vpack.c.bf16 %v3231, %v3229
        %v3996 = vpack.c.bf16 %v3232, %v3230
        %v3997 = vpack.c.bf16 %v3235, %v3233
        %v3998 = vpack.c.bf16 %v3236, %v3234
        %v3999 = vpack.c.bf16 %v3239, %v3237
        %v4000 = vpack.c.bf16 %v3240, %v3238
        %v4001 = vpack.c.bf16 %v3243, %v3241
        %v4002 = vpack.c.bf16 %v3244, %v3242
        %v4003 = vpack.c.bf16 %v3247, %v3245
        %v4004 = vpack.c.bf16 %v3248, %v3246
        %v4005 = vpack.c.bf16 %v3251, %v3249
        %v4006 = vpack.c.bf16 %v3252, %v3250
        %v4007 = vpack.c.bf16 %v3255, %v3253
        %v4008 = vpack.c.bf16 %v3256, %v3254
        %v4009 = vpack.c.bf16 %v3259, %v3257
        %v4010 = vpack.c.bf16 %v3260, %v3258
        %v4011 = vpack.c.bf16 %v3263, %v3261
        %v4012 = vpack.c.bf16 %v3264, %v3262
        %v4013 = vpack.c.bf16 %v3267, %v3265
        %v4014 = vpack.c.bf16 %v3268, %v3266
        %v4015 = vpack.c.bf16 %v3271, %v3269
        %v4016 = vpack.c.bf16 %v3272, %v3270
        %v4017 = vpack.c.bf16 %v3275, %v3273
        %v4018 = vpack.c.bf16 %v3276, %v3274
        %v4019 = vpack.c.bf16 %v3279, %v3277
        %v4020 = vpack.c.bf16 %v3280, %v3278
        %v4021 = vpack.c.bf16 %v3283, %v3281
        %v4022 = vpack.c.bf16 %v3284, %v3282
        %v4023 = vpack.c.bf16 %v3287, %v3285
        %v4024 = vpack.c.bf16 %v3288, %v3286
        %v4025 = vpack.c.bf16 %v3291, %v3289
        %v4026 = vpack.c.bf16 %v3292, %v3290
        %v4027 = vpack.c.bf16 %v3295, %v3293
        %v4028 = vpack.c.bf16 %v3296, %v3294
        %v4029 = vpack.c.bf16 %v3299, %v3297
        %v4030 = vpack.c.bf16 %v3300, %v3298
        %v4031 = vpack.c.bf16 %v3303, %v3301
        %v4032 = vpack.c.bf16 %v3304, %v3302
        %v4033 = vpack.c.bf16 %v3307, %v3305
        %v4034 = vpack.c.bf16 %v3308, %v3306
        %v4035 = vpack.c.bf16 %v3311, %v3309
        %v4036 = vpack.c.bf16 %v3312, %v3310
        %v4037 = vpack.c.bf16 %v3315, %v3313
        %v4038 = vpack.c.bf16 %v3316, %v3314
        %v4039 = vpack.c.bf16 %v3319, %v3317
        %v4040 = vpack.c.bf16 %v3320, %v3318
        %v4041 = vpack.c.bf16 %v3323, %v3321
        %v4042 = vpack.c.bf16 %v3324, %v3322
        %v4043 = vpack.c.bf16 %v3327, %v3325
        %v4044 = vpack.c.bf16 %v3328, %v3326
        %v4045 = vpack.c.bf16 %v3331, %v3329
        %v4046 = vpack.c.bf16 %v3332, %v3330
        %v4047 = vpack.c.bf16 %v3335, %v3333
        %v4048 = vpack.c.bf16 %v3336, %v3334
        %v4049 = vpack.c.bf16 %v3339, %v3337
        %v4050 = vpack.c.bf16 %v3340, %v3338
        %v4051 = vpack.c.bf16 %v3343, %v3341
        %v4052 = vpack.c.bf16 %v3344, %v3342
        %v4053 = vpack.c.bf16 %v3347, %v3345
        %v4054 = vpack.c.bf16 %v3348, %v3346
        %v4055 = vpack.c.bf16 %v3351, %v3349
        %v4056 = vpack.c.bf16 %v3352, %v3350
        %v4057 = vpack.c.bf16 %v3355, %v3353
        %v4058 = vpack.c.bf16 %v3356, %v3354
        %v4059 = vpack.c.bf16 %v3359, %v3357
        %v4060 = vpack.c.bf16 %v3360, %v3358
        %v4061 = vpack.c.bf16 %v3363, %v3361
        %v4062 = vpack.c.bf16 %v3364, %v3362
        %v4063 = vpack.c.bf16 %v3367, %v3365
        %v4064 = vpack.c.bf16 %v3368, %v3366
        %v4065 = vpack.c.bf16 %v3371, %v3369
        %v4066 = vpack.c.bf16 %v3372, %v3370
        %v4067 = vpack.c.bf16 %v3375, %v3373
        %v4068 = vpack.c.bf16 %v3376, %v3374
        %v4069 = vpack.c.bf16 %v3379, %v3377
        %v4070 = vpack.c.bf16 %v3380, %v3378
        %v4071 = vpack.c.bf16 %v3383, %v3381
        %v4072 = vpack.c.bf16 %v3384, %v3382
        %v4073 = vpack.c.bf16 %v3387, %v3385
        %v4074 = vpack.c.bf16 %v3388, %v3386
        %v4075 = vpack.c.bf16 %v3391, %v3389
        %v4076 = vpack.c.bf16 %v3392, %v3390
        %v4077 = vpack.c.bf16 %v3395, %v3393
        %v4078 = vpack.c.bf16 %v3396, %v3394
        %v4079 = vpack.c.bf16 %v3399, %v3397
        %v4080 = vpack.c.bf16 %v3400, %v3398
        %v4081 = vpack.c.bf16 %v3403, %v3401
        %v4082 = vpack.c.bf16 %v3404, %v3402
        %v4083 = vpack.c.bf16 %v3407, %v3405
        %v4084 = vpack.c.bf16 %v3408, %v3406
        %v4085 = vld [vmem:[%s0] sm:$0xff]
        %v4086 = vld [vmem:[%s0 + $0x8] sm:$0xff]
        %v4087 = vld [vmem:[%s0 + $0x10] sm:$0xff]
        %v4088 = vld [vmem:[%s0 + $0x18] sm:$0xff]
        %v4089 = vld [vmem:[%s0 + $0x20] sm:$0xff]
        %v4090 = vld [vmem:[%s0 + $0x28] sm:$0x7]
        %4092 = vst [vmem:[#allocation1] ss:$9 sm:$0xff] %v4085
        %v4093 = vld [vmem:[#allocation1] sm:$0xff]
        %v4094 = vld [vmem:[#allocation1 + $0x9] sm:$0xff]
        %v4095 = vld [vmem:[#allocation1 + $0x12] sm:$0xff]
        %v4096 = vld [vmem:[#allocation1 + $0x1b] sm:$0xff]
        %v4097 = vld [vmem:[#allocation1 + $0x24] sm:$0xff]
        %v4098 = vld [vmem:[#allocation1 + $0x2d] sm:$0xff]
        %v4099 = vld [vmem:[#allocation1 + $0x36] sm:$0xff]
        %v4100 = vld [vmem:[#allocation1 + $0x3f] sm:$0xff]
        %4102 = vst [vmem:[#allocation1] ss:$9 sm:$0xff] %v4086
        %v4103 = vld [vmem:[#allocation1] sm:$0xff]
        %v4104 = vld [vmem:[#allocation1 + $0x9] sm:$0xff]
        %v4105 = vld [vmem:[#allocation1 + $0x12] sm:$0xff]
        %v4106 = vld [vmem:[#allocation1 + $0x1b] sm:$0xff]
        %v4107 = vld [vmem:[#allocation1 + $0x24] sm:$0xff]
        %v4108 = vld [vmem:[#allocation1 + $0x2d] sm:$0xff]
        %v4109 = vld [vmem:[#allocation1 + $0x36] sm:$0xff]
        %v4110 = vld [vmem:[#allocation1 + $0x3f] sm:$0xff]
        %4112 = vst [vmem:[#allocation1] ss:$9 sm:$0xff] %v4087
        %v4113 = vld [vmem:[#allocation1] sm:$0xff]
        %v4114 = vld [vmem:[#allocation1 + $0x9] sm:$0xff]
        %v4115 = vld [vmem:[#allocation1 + $0x12] sm:$0xff]
        %v4116 = vld [vmem:[#allocation1 + $0x1b] sm:$0xff]
        %v4117 = vld [vmem:[#allocation1 + $0x24] sm:$0xff]
        %v4118 = vld [vmem:[#allocation1 + $0x2d] sm:$0xff]
        %v4119 = vld [vmem:[#allocation1 + $0x36] sm:$0xff]
        %v4120 = vld [vmem:[#allocation1 + $0x3f] sm:$0xff]
        %4122 = vst [vmem:[#allocation1] ss:$9 sm:$0xff] %v4088
        %v4123 = vld [vmem:[#allocation1] sm:$0xff]
        %v4124 = vld [vmem:[#allocation1 + $0x9] sm:$0xff]
        %v4125 = vld [vmem:[#allocation1 + $0x12] sm:$0xff]
        %v4126 = vld [vmem:[#allocation1 + $0x1b] sm:$0xff]
        %v4127 = vld [vmem:[#allocation1 + $0x24] sm:$0xff]
        %v4128 = vld [vmem:[#allocation1 + $0x2d] sm:$0xff]
        %v4129 = vld [vmem:[#allocation1 + $0x36] sm:$0xff]
        %v4130 = vld [vmem:[#allocation1 + $0x3f] sm:$0xff]
        %4132 = vst [vmem:[#allocation1] ss:$9 sm:$0xff] %v4089
        %v4133 = vld [vmem:[#allocation1] sm:$0xff]
        %v4134 = vld [vmem:[#allocation1 + $0x9] sm:$0xff]
        %v4135 = vld [vmem:[#allocation1 + $0x12] sm:$0xff]
        %v4136 = vld [vmem:[#allocation1 + $0x1b] sm:$0xff]
        %v4137 = vld [vmem:[#allocation1 + $0x24] sm:$0xff]
        %v4138 = vld [vmem:[#allocation1 + $0x2d] sm:$0xff]
        %v4139 = vld [vmem:[#allocation1 + $0x36] sm:$0xff]
        %v4140 = vld [vmem:[#allocation1 + $0x3f] sm:$0xff]
        %4142 = vst [vmem:[#allocation1] ss:$9 sm:$0xff] %v4090
        %v4143 = vld [vmem:[#allocation1] sm:$0xff]
        %v4144 = vld [vmem:[#allocation1 + $0x9] sm:$0xff]
        %v4145 = vld [vmem:[#allocation1 + $0x12] sm:$0xff]
        %vm4188 = vcmask 261120
        %v4189 = vsel %vm4188, %v4145, 0
        %4191 = vmatpush.bf16.msra.mxu0 %v3423
        %4192 = vmatpush.bf16.msra.mxu0 %v3421
        %4193 = vmatpush.bf16.msra.mxu0 %v3419
        %4194 = vmatpush.bf16.msra.mxu0 %v3417
        %4195 = vmatpush.bf16.msra.mxu0 %v3415
        %4196 = vmatpush.bf16.msra.mxu0 %v3413
        %4197 = vmatpush.bf16.msra.mxu0 %v3411
        %4198 = vmatpush.bf16.msra.mxu0 %v3409
        %4199 = vmatmul.bf16.gmra.mxu0 %v4093
        %v4200 = vpop.f32.mrf.mxu0
        %v4201 = vadd.f32 0.0, %v4200
        %v4202 = vpop.f32.mrf.mxu0
        %4203 = vdwg.mxu0
        %4204 = vmatpush.bf16.msra.mxu0 %v3439
        %4205 = vmatpush.bf16.msra.mxu0 %v3437
        %4206 = vmatpush.bf16.msra.mxu0 %v3435
        %4207 = vmatpush.bf16.msra.mxu0 %v3433
        %4208 = vmatpush.bf16.msra.mxu0 %v3431
        %4209 = vmatpush.bf16.msra.mxu0 %v3429
        %4210 = vmatpush.bf16.msra.mxu0 %v3427
        %4211 = vmatpush.bf16.msra.mxu0 %v3425
        %4212 = vmatmul.bf16.gmra.mxu0 %v4094
        %v4213 = vpop.f32.mrf.mxu0
        %v4214 = vadd.f32 %v4201, %v4213
        %v4215 = vpop.f32.mrf.mxu0
        %4216 = vdwg.mxu0
        %4217 = vmatpush.bf16.msra.mxu0 %v3455
        %4218 = vmatpush.bf16.msra.mxu0 %v3453
        %4219 = vmatpush.bf16.msra.mxu0 %v3451
        %4220 = vmatpush.bf16.msra.mxu0 %v3449
        %4221 = vmatpush.bf16.msra.mxu0 %v3447
        %4222 = vmatpush.bf16.msra.mxu0 %v3445
        %4223 = vmatpush.bf16.msra.mxu0 %v3443
        %4224 = vmatpush.bf16.msra.mxu0 %v3441
        %4225 = vmatmul.bf16.gmra.mxu0 %v4095
        %v4226 = vpop.f32.mrf.mxu0
        %v4227 = vadd.f32 %v4214, %v4226
        %v4228 = vpop.f32.mrf.mxu0
        %4229 = vdwg.mxu0
        %4230 = vmatpush.bf16.msra.mxu0 %v3471
        %4231 = vmatpush.bf16.msra.mxu0 %v3469
        %4232 = vmatpush.bf16.msra.mxu0 %v3467
        %4233 = vmatpush.bf16.msra.mxu0 %v3465
        %4234 = vmatpush.bf16.msra.mxu0 %v3463
        %4235 = vmatpush.bf16.msra.mxu0 %v3461
        %4236 = vmatpush.bf16.msra.mxu0 %v3459
        %4237 = vmatpush.bf16.msra.mxu0 %v3457
        %4238 = vmatmul.bf16.gmra.mxu0 %v4096
        %v4239 = vpop.f32.mrf.mxu0
        %v4240 = vadd.f32 %v4227, %v4239
        %v4241 = vpop.f32.mrf.mxu0
        %4242 = vdwg.mxu0
        %4243 = vmatpush.bf16.msra.mxu0 %v3487
        %4244 = vmatpush.bf16.msra.mxu0 %v3485
        %4245 = vmatpush.bf16.msra.mxu0 %v3483
        %4246 = vmatpush.bf16.msra.mxu0 %v3481
        %4247 = vmatpush.bf16.msra.mxu0 %v3479
        %4248 = vmatpush.bf16.msra.mxu0 %v3477
        %4249 = vmatpush.bf16.msra.mxu0 %v3475
        %4250 = vmatpush.bf16.msra.mxu0 %v3473
        %4251 = vmatmul.bf16.gmra.mxu0 %v4097
        %v4252 = vpop.f32.mrf.mxu0
        %v4253 = vadd.f32 %v4240, %v4252
        %v4254 = vpop.f32.mrf.mxu0
        %4255 = vdwg.mxu0
        %4256 = vmatpush.bf16.msra.mxu0 %v3503
        %4257 = vmatpush.bf16.msra.mxu0 %v3501
        %4258 = vmatpush.bf16.msra.mxu0 %v3499
        %4259 = vmatpush.bf16.msra.mxu0 %v3497
        %4260 = vmatpush.bf16.msra.mxu0 %v3495
        %4261 = vmatpush.bf16.msra.mxu0 %v3493
        %4262 = vmatpush.bf16.msra.mxu0 %v3491
        %4263 = vmatpush.bf16.msra.mxu0 %v3489
        %4264 = vmatmul.bf16.gmra.mxu0 %v4098
        %v4265 = vpop.f32.mrf.mxu0
        %v4266 = vadd.f32 %v4253, %v4265
        %v4267 = vpop.f32.mrf.mxu0
        %4268 = vdwg.mxu0
        %4269 = vmatpush.bf16.msra.mxu0 %v3519
        %4270 = vmatpush.bf16.msra.mxu0 %v3517
        %4271 = vmatpush.bf16.msra.mxu0 %v3515
        %4272 = vmatpush.bf16.msra.mxu0 %v3513
        %4273 = vmatpush.bf16.msra.mxu0 %v3511
        %4274 = vmatpush.bf16.msra.mxu0 %v3509
        %4275 = vmatpush.bf16.msra.mxu0 %v3507
        %4276 = vmatpush.bf16.msra.mxu0 %v3505
        %4277 = vmatmul.bf16.gmra.mxu0 %v4099
        %v4278 = vpop.f32.mrf.mxu0
        %v4279 = vadd.f32 %v4266, %v4278
        %v4280 = vpop.f32.mrf.mxu0
        %4281 = vdwg.mxu0
        %4282 = vmatpush.bf16.msra.mxu0 %v3535
        %4283 = vmatpush.bf16.msra.mxu0 %v3533
        %4284 = vmatpush.bf16.msra.mxu0 %v3531
        %4285 = vmatpush.bf16.msra.mxu0 %v3529
        %4286 = vmatpush.bf16.msra.mxu0 %v3527
        %4287 = vmatpush.bf16.msra.mxu0 %v3525
        %4288 = vmatpush.bf16.msra.mxu0 %v3523
        %4289 = vmatpush.bf16.msra.mxu0 %v3521
        %4290 = vmatmul.bf16.gmra.mxu0 %v4100
        %v4291 = vpop.f32.mrf.mxu0
        %v4292 = vadd.f32 %v4279, %v4291
        %v4293 = vpop.f32.mrf.mxu0
        %4294 = vdwg.mxu0
        %4295 = vmatpush.bf16.msra.mxu0 %v3551
        %4296 = vmatpush.bf16.msra.mxu0 %v3549
        %4297 = vmatpush.bf16.msra.mxu0 %v3547
        %4298 = vmatpush.bf16.msra.mxu0 %v3545
        %4299 = vmatpush.bf16.msra.mxu0 %v3543
        %4300 = vmatpush.bf16.msra.mxu0 %v3541
        %4301 = vmatpush.bf16.msra.mxu0 %v3539
        %4302 = vmatpush.bf16.msra.mxu0 %v3537
        %4303 = vmatmul.bf16.gmra.mxu0 %v4103
        %v4304 = vpop.f32.mrf.mxu0
        %v4305 = vadd.f32 %v4292, %v4304
        %v4306 = vpop.f32.mrf.mxu0
        %4307 = vdwg.mxu0
        %4308 = vmatpush.bf16.msra.mxu0 %v3567
        %4309 = vmatpush.bf16.msra.mxu0 %v3565
        %4310 = vmatpush.bf16.msra.mxu0 %v3563
        %4311 = vmatpush.bf16.msra.mxu0 %v3561
        %4312 = vmatpush.bf16.msra.mxu0 %v3559
        %4313 = vmatpush.bf16.msra.mxu0 %v3557
        %4314 = vmatpush.bf16.msra.mxu0 %v3555
        %4315 = vmatpush.bf16.msra.mxu0 %v3553
        %4316 = vmatmul.bf16.gmra.mxu0 %v4104
        %v4317 = vpop.f32.mrf.mxu0
        %v4318 = vadd.f32 %v4305, %v4317
        %v4319 = vpop.f32.mrf.mxu0
        %4320 = vdwg.mxu0
        %4321 = vmatpush.bf16.msra.mxu0 %v3583
        %4322 = vmatpush.bf16.msra.mxu0 %v3581
        %4323 = vmatpush.bf16.msra.mxu0 %v3579
        %4324 = vmatpush.bf16.msra.mxu0 %v3577
        %4325 = vmatpush.bf16.msra.mxu0 %v3575
        %4326 = vmatpush.bf16.msra.mxu0 %v3573
        %4327 = vmatpush.bf16.msra.mxu0 %v3571
        %4328 = vmatpush.bf16.msra.mxu0 %v3569
        %4329 = vmatmul.bf16.gmra.mxu0 %v4105
        %v4330 = vpop.f32.mrf.mxu0
        %v4331 = vadd.f32 %v4318, %v4330
        %v4332 = vpop.f32.mrf.mxu0
        %4333 = vdwg.mxu0
        %4334 = vmatpush.bf16.msra.mxu0 %v3599
        %4335 = vmatpush.bf16.msra.mxu0 %v3597
        %4336 = vmatpush.bf16.msra.mxu0 %v3595
        %4337 = vmatpush.bf16.msra.mxu0 %v3593
        %4338 = vmatpush.bf16.msra.mxu0 %v3591
        %4339 = vmatpush.bf16.msra.mxu0 %v3589
        %4340 = vmatpush.bf16.msra.mxu0 %v3587
        %4341 = vmatpush.bf16.msra.mxu0 %v3585
        %4342 = vmatmul.bf16.gmra.mxu0 %v4106
        %v4343 = vpop.f32.mrf.mxu0
        %v4344 = vadd.f32 %v4331, %v4343
        %v4345 = vpop.f32.mrf.mxu0
        %4346 = vdwg.mxu0
        %4347 = vmatpush.bf16.msra.mxu0 %v3615
        %4348 = vmatpush.bf16.msra.mxu0 %v3613
        %4349 = vmatpush.bf16.msra.mxu0 %v3611
        %4350 = vmatpush.bf16.msra.mxu0 %v3609
        %4351 = vmatpush.bf16.msra.mxu0 %v3607
        %4352 = vmatpush.bf16.msra.mxu0 %v3605
        %4353 = vmatpush.bf16.msra.mxu0 %v3603
        %4354 = vmatpush.bf16.msra.mxu0 %v3601
        %4355 = vmatmul.bf16.gmra.mxu0 %v4107
        %v4356 = vpop.f32.mrf.mxu0
        %v4357 = vadd.f32 %v4344, %v4356
        %v4358 = vpop.f32.mrf.mxu0
        %4359 = vdwg.mxu0
        %4360 = vmatpush.bf16.msra.mxu0 %v3631
        %4361 = vmatpush.bf16.msra.mxu0 %v3629
        %4362 = vmatpush.bf16.msra.mxu0 %v3627
        %4363 = vmatpush.bf16.msra.mxu0 %v3625
        %4364 = vmatpush.bf16.msra.mxu0 %v3623
        %4365 = vmatpush.bf16.msra.mxu0 %v3621
        %4366 = vmatpush.bf16.msra.mxu0 %v3619
        %4367 = vmatpush.bf16.msra.mxu0 %v3617
        %4368 = vmatmul.bf16.gmra.mxu0 %v4108
        %v4369 = vpop.f32.mrf.mxu0
        %v4370 = vadd.f32 %v4357, %v4369
        %v4371 = vpop.f32.mrf.mxu0
        %4372 = vdwg.mxu0
        %4373 = vmatpush.bf16.msra.mxu0 %v3647
        %4374 = vmatpush.bf16.msra.mxu0 %v3645
        %4375 = vmatpush.bf16.msra.mxu0 %v3643
        %4376 = vmatpush.bf16.msra.mxu0 %v3641
        %4377 = vmatpush.bf16.msra.mxu0 %v3639
        %4378 = vmatpush.bf16.msra.mxu0 %v3637
        %4379 = vmatpush.bf16.msra.mxu0 %v3635
        %4380 = vmatpush.bf16.msra.mxu0 %v3633
        %4381 = vmatmul.bf16.gmra.mxu0 %v4109
        %v4382 = vpop.f32.mrf.mxu0
        %v4383 = vadd.f32 %v4370, %v4382
        %v4384 = vpop.f32.mrf.mxu0
        %4385 = vdwg.mxu0
        %4386 = vmatpush.bf16.msra.mxu0 %v3663
        %4387 = vmatpush.bf16.msra.mxu0 %v3661
        %4388 = vmatpush.bf16.msra.mxu0 %v3659
        %4389 = vmatpush.bf16.msra.mxu0 %v3657
        %4390 = vmatpush.bf16.msra.mxu0 %v3655
        %4391 = vmatpush.bf16.msra.mxu0 %v3653
        %4392 = vmatpush.bf16.msra.mxu0 %v3651
        %4393 = vmatpush.bf16.msra.mxu0 %v3649
        %4394 = vmatmul.bf16.gmra.mxu0 %v4110
        %v4395 = vpop.f32.mrf.mxu0
        %v4396 = vadd.f32 %v4383, %v4395
        %v4397 = vpop.f32.mrf.mxu0
        %4398 = vdwg.mxu0
        %4399 = vmatpush.bf16.msra.mxu0 %v3679
        %4400 = vmatpush.bf16.msra.mxu0 %v3677
        %4401 = vmatpush.bf16.msra.mxu0 %v3675
        %4402 = vmatpush.bf16.msra.mxu0 %v3673
        %4403 = vmatpush.bf16.msra.mxu0 %v3671
        %4404 = vmatpush.bf16.msra.mxu0 %v3669
        %4405 = vmatpush.bf16.msra.mxu0 %v3667
        %4406 = vmatpush.bf16.msra.mxu0 %v3665
        %4407 = vmatmul.bf16.gmra.mxu0 %v4113
        %v4408 = vpop.f32.mrf.mxu0
        %v4409 = vadd.f32 %v4396, %v4408
        %v4410 = vpop.f32.mrf.mxu0
        %4411 = vdwg.mxu0
        %4412 = vmatpush.bf16.msra.mxu0 %v3695
        %4413 = vmatpush.bf16.msra.mxu0 %v3693
        %4414 = vmatpush.bf16.msra.mxu0 %v3691
        %4415 = vmatpush.bf16.msra.mxu0 %v3689
        %4416 = vmatpush.bf16.msra.mxu0 %v3687
        %4417 = vmatpush.bf16.msra.mxu0 %v3685
        %4418 = vmatpush.bf16.msra.mxu0 %v3683
        %4419 = vmatpush.bf16.msra.mxu0 %v3681
        %4420 = vmatmul.bf16.gmra.mxu0 %v4114
        %v4421 = vpop.f32.mrf.mxu0
        %v4422 = vadd.f32 %v4409, %v4421
        %v4423 = vpop.f32.mrf.mxu0
        %4424 = vdwg.mxu0
        %4425 = vmatpush.bf16.msra.mxu0 %v3711
        %4426 = vmatpush.bf16.msra.mxu0 %v3709
        %4427 = vmatpush.bf16.msra.mxu0 %v3707
        %4428 = vmatpush.bf16.msra.mxu0 %v3705
        %4429 = vmatpush.bf16.msra.mxu0 %v3703
        %4430 = vmatpush.bf16.msra.mxu0 %v3701
        %4431 = vmatpush.bf16.msra.mxu0 %v3699
        %4432 = vmatpush.bf16.msra.mxu0 %v3697
        %4433 = vmatmul.bf16.gmra.mxu0 %v4115
        %v4434 = vpop.f32.mrf.mxu0
        %v4435 = vadd.f32 %v4422, %v4434
        %v4436 = vpop.f32.mrf.mxu0
        %4437 = vdwg.mxu0
        %4438 = vmatpush.bf16.msra.mxu0 %v3727
        %4439 = vmatpush.bf16.msra.mxu0 %v3725
        %4440 = vmatpush.bf16.msra.mxu0 %v3723
        %4441 = vmatpush.bf16.msra.mxu0 %v3721
        %4442 = vmatpush.bf16.msra.mxu0 %v3719
        %4443 = vmatpush.bf16.msra.mxu0 %v3717
        %4444 = vmatpush.bf16.msra.mxu0 %v3715
        %4445 = vmatpush.bf16.msra.mxu0 %v3713
        %4446 = vmatmul.bf16.gmra.mxu0 %v4116
        %v4447 = vpop.f32.mrf.mxu0
        %v4448 = vadd.f32 %v4435, %v4447
        %v4449 = vpop.f32.mrf.mxu0
        %4450 = vdwg.mxu0
        %4451 = vmatpush.bf16.msra.mxu0 %v3743
        %4452 = vmatpush.bf16.msra.mxu0 %v3741
        %4453 = vmatpush.bf16.msra.mxu0 %v3739
        %4454 = vmatpush.bf16.msra.mxu0 %v3737
        %4455 = vmatpush.bf16.msra.mxu0 %v3735
        %4456 = vmatpush.bf16.msra.mxu0 %v3733
        %4457 = vmatpush.bf16.msra.mxu0 %v3731
        %4458 = vmatpush.bf16.msra.mxu0 %v3729
        %4459 = vmatmul.bf16.gmra.mxu0 %v4117
        %v4460 = vpop.f32.mrf.mxu0
        %v4461 = vadd.f32 %v4448, %v4460
        %v4462 = vpop.f32.mrf.mxu0
        %4463 = vdwg.mxu0
        %4464 = vmatpush.bf16.msra.mxu0 %v3759
        %4465 = vmatpush.bf16.msra.mxu0 %v3757
        %4466 = vmatpush.bf16.msra.mxu0 %v3755
        %4467 = vmatpush.bf16.msra.mxu0 %v3753
        %4468 = vmatpush.bf16.msra.mxu0 %v3751
        %4469 = vmatpush.bf16.msra.mxu0 %v3749
        %4470 = vmatpush.bf16.msra.mxu0 %v3747
        %4471 = vmatpush.bf16.msra.mxu0 %v3745
        %4472 = vmatmul.bf16.gmra.mxu0 %v4118
        %v4473 = vpop.f32.mrf.mxu0
        %v4474 = vadd.f32 %v4461, %v4473
        %v4475 = vpop.f32.mrf.mxu0
        %4476 = vdwg.mxu0
        %4477 = vmatpush.bf16.msra.mxu0 %v3775
        %4478 = vmatpush.bf16.msra.mxu0 %v3773
        %4479 = vmatpush.bf16.msra.mxu0 %v3771
        %4480 = vmatpush.bf16.msra.mxu0 %v3769
        %4481 = vmatpush.bf16.msra.mxu0 %v3767
        %4482 = vmatpush.bf16.msra.mxu0 %v3765
        %4483 = vmatpush.bf16.msra.mxu0 %v3763
        %4484 = vmatpush.bf16.msra.mxu0 %v3761
        %4485 = vmatmul.bf16.gmra.mxu0 %v4119
        %v4486 = vpop.f32.mrf.mxu0
        %v4487 = vadd.f32 %v4474, %v4486
        %v4488 = vpop.f32.mrf.mxu0
        %4489 = vdwg.mxu0
        %4490 = vmatpush.bf16.msra.mxu0 %v3791
        %4491 = vmatpush.bf16.msra.mxu0 %v3789
        %4492 = vmatpush.bf16.msra.mxu0 %v3787
        %4493 = vmatpush.bf16.msra.mxu0 %v3785
        %4494 = vmatpush.bf16.msra.mxu0 %v3783
        %4495 = vmatpush.bf16.msra.mxu0 %v3781
        %4496 = vmatpush.bf16.msra.mxu0 %v3779
        %4497 = vmatpush.bf16.msra.mxu0 %v3777
        %4498 = vmatmul.bf16.gmra.mxu0 %v4120
        %v4499 = vpop.f32.mrf.mxu0
        %v4500 = vadd.f32 %v4487, %v4499
        %v4501 = vpop.f32.mrf.mxu0
        %4502 = vdwg.mxu0
        %4503 = vmatpush.bf16.msra.mxu0 %v3807
        %4504 = vmatpush.bf16.msra.mxu0 %v3805
        %4505 = vmatpush.bf16.msra.mxu0 %v3803
        %4506 = vmatpush.bf16.msra.mxu0 %v3801
        %4507 = vmatpush.bf16.msra.mxu0 %v3799
        %4508 = vmatpush.bf16.msra.mxu0 %v3797
        %4509 = vmatpush.bf16.msra.mxu0 %v3795
        %4510 = vmatpush.bf16.msra.mxu0 %v3793
        %4511 = vmatmul.bf16.gmra.mxu0 %v4123
        %v4512 = vpop.f32.mrf.mxu0
        %v4513 = vadd.f32 %v4500, %v4512
        %v4514 = vpop.f32.mrf.mxu0
        %4515 = vdwg.mxu0
        %4516 = vmatpush.bf16.msra.mxu0 %v3823
        %4517 = vmatpush.bf16.msra.mxu0 %v3821
        %4518 = vmatpush.bf16.msra.mxu0 %v3819
        %4519 = vmatpush.bf16.msra.mxu0 %v3817
        %4520 = vmatpush.bf16.msra.mxu0 %v3815
        %4521 = vmatpush.bf16.msra.mxu0 %v3813
        %4522 = vmatpush.bf16.msra.mxu0 %v3811
        %4523 = vmatpush.bf16.msra.mxu0 %v3809
        %4524 = vmatmul.bf16.gmra.mxu0 %v4124
        %v4525 = vpop.f32.mrf.mxu0
        %v4526 = vadd.f32 %v4513, %v4525
        %v4527 = vpop.f32.mrf.mxu0
        %4528 = vdwg.mxu0
        %4529 = vmatpush.bf16.msra.mxu0 %v3839
        %4530 = vmatpush.bf16.msra.mxu0 %v3837
        %4531 = vmatpush.bf16.msra.mxu0 %v3835
        %4532 = vmatpush.bf16.msra.mxu0 %v3833
        %4533 = vmatpush.bf16.msra.mxu0 %v3831
        %4534 = vmatpush.bf16.msra.mxu0 %v3829
        %4535 = vmatpush.bf16.msra.mxu0 %v3827
        %4536 = vmatpush.bf16.msra.mxu0 %v3825
        %4537 = vmatmul.bf16.gmra.mxu0 %v4125
        %v4538 = vpop.f32.mrf.mxu0
        %v4539 = vadd.f32 %v4526, %v4538
        %v4540 = vpop.f32.mrf.mxu0
        %4541 = vdwg.mxu0
        %4542 = vmatpush.bf16.msra.mxu0 %v3855
        %4543 = vmatpush.bf16.msra.mxu0 %v3853
        %4544 = vmatpush.bf16.msra.mxu0 %v3851
        %4545 = vmatpush.bf16.msra.mxu0 %v3849
        %4546 = vmatpush.bf16.msra.mxu0 %v3847
        %4547 = vmatpush.bf16.msra.mxu0 %v3845
        %4548 = vmatpush.bf16.msra.mxu0 %v3843
        %4549 = vmatpush.bf16.msra.mxu0 %v3841
        %4550 = vmatmul.bf16.gmra.mxu0 %v4126
        %v4551 = vpop.f32.mrf.mxu0
        %v4552 = vadd.f32 %v4539, %v4551
        %v4553 = vpop.f32.mrf.mxu0
        %4554 = vdwg.mxu0
        %4555 = vmatpush.bf16.msra.mxu0 %v3871
        %4556 = vmatpush.bf16.msra.mxu0 %v3869
        %4557 = vmatpush.bf16.msra.mxu0 %v3867
        %4558 = vmatpush.bf16.msra.mxu0 %v3865
        %4559 = vmatpush.bf16.msra.mxu0 %v3863
        %4560 = vmatpush.bf16.msra.mxu0 %v3861
        %4561 = vmatpush.bf16.msra.mxu0 %v3859
        %4562 = vmatpush.bf16.msra.mxu0 %v3857
        %4563 = vmatmul.bf16.gmra.mxu0 %v4127
        %v4564 = vpop.f32.mrf.mxu0
        %v4565 = vadd.f32 %v4552, %v4564
        %v4566 = vpop.f32.mrf.mxu0
        %4567 = vdwg.mxu0
        %4568 = vmatpush.bf16.msra.mxu0 %v3887
        %4569 = vmatpush.bf16.msra.mxu0 %v3885
        %4570 = vmatpush.bf16.msra.mxu0 %v3883
        %4571 = vmatpush.bf16.msra.mxu0 %v3881
        %4572 = vmatpush.bf16.msra.mxu0 %v3879
        %4573 = vmatpush.bf16.msra.mxu0 %v3877
        %4574 = vmatpush.bf16.msra.mxu0 %v3875
        %4575 = vmatpush.bf16.msra.mxu0 %v3873
        %4576 = vmatmul.bf16.gmra.mxu0 %v4128
        %v4577 = vpop.f32.mrf.mxu0
        %v4578 = vadd.f32 %v4565, %v4577
        %v4579 = vpop.f32.mrf.mxu0
        %4580 = vdwg.mxu0
        %4581 = vmatpush.bf16.msra.mxu0 %v3903
        %4582 = vmatpush.bf16.msra.mxu0 %v3901
        %4583 = vmatpush.bf16.msra.mxu0 %v3899
        %4584 = vmatpush.bf16.msra.mxu0 %v3897
        %4585 = vmatpush.bf16.msra.mxu0 %v3895
        %4586 = vmatpush.bf16.msra.mxu0 %v3893
        %4587 = vmatpush.bf16.msra.mxu0 %v3891
        %4588 = vmatpush.bf16.msra.mxu0 %v3889
        %4589 = vmatmul.bf16.gmra.mxu0 %v4129
        %v4590 = vpop.f32.mrf.mxu0
        %v4591 = vadd.f32 %v4578, %v4590
        %v4592 = vpop.f32.mrf.mxu0
        %4593 = vdwg.mxu0
        %4594 = vmatpush.bf16.msra.mxu0 %v3919
        %4595 = vmatpush.bf16.msra.mxu0 %v3917
        %4596 = vmatpush.bf16.msra.mxu0 %v3915
        %4597 = vmatpush.bf16.msra.mxu0 %v3913
        %4598 = vmatpush.bf16.msra.mxu0 %v3911
        %4599 = vmatpush.bf16.msra.mxu0 %v3909
        %4600 = vmatpush.bf16.msra.mxu0 %v3907
        %4601 = vmatpush.bf16.msra.mxu0 %v3905
        %4602 = vmatmul.bf16.gmra.mxu0 %v4130
        %v4603 = vpop.f32.mrf.mxu0
        %v4604 = vadd.f32 %v4591, %v4603
        %v4605 = vpop.f32.mrf.mxu0
        %4606 = vdwg.mxu0
        %4607 = vmatpush.bf16.msra.mxu0 %v3935
        %4608 = vmatpush.bf16.msra.mxu0 %v3933
        %4609 = vmatpush.bf16.msra.mxu0 %v3931
        %4610 = vmatpush.bf16.msra.mxu0 %v3929
        %4611 = vmatpush.bf16.msra.mxu0 %v3927
        %4612 = vmatpush.bf16.msra.mxu0 %v3925
        %4613 = vmatpush.bf16.msra.mxu0 %v3923
        %4614 = vmatpush.bf16.msra.mxu0 %v3921
        %4615 = vmatmul.bf16.gmra.mxu0 %v4133
        %v4616 = vpop.f32.mrf.mxu0
        %v4617 = vadd.f32 %v4604, %v4616
        %v4618 = vpop.f32.mrf.mxu0
        %4619 = vdwg.mxu0
        %4620 = vmatpush.bf16.msra.mxu0 %v3951
        %4621 = vmatpush.bf16.msra.mxu0 %v3949
        %4622 = vmatpush.bf16.msra.mxu0 %v3947
        %4623 = vmatpush.bf16.msra.mxu0 %v3945
        %4624 = vmatpush.bf16.msra.mxu0 %v3943
        %4625 = vmatpush.bf16.msra.mxu0 %v3941
        %4626 = vmatpush.bf16.msra.mxu0 %v3939
        %4627 = vmatpush.bf16.msra.mxu0 %v3937
        %4628 = vmatmul.bf16.gmra.mxu0 %v4134
        %v4629 = vpop.f32.mrf.mxu0
        %v4630 = vadd.f32 %v4617, %v4629
        %v4631 = vpop.f32.mrf.mxu0
        %4632 = vdwg.mxu0
        %4633 = vmatpush.bf16.msra.mxu0 %v3967
        %4634 = vmatpush.bf16.msra.mxu0 %v3965
        %4635 = vmatpush.bf16.msra.mxu0 %v3963
        %4636 = vmatpush.bf16.msra.mxu0 %v3961
        %4637 = vmatpush.bf16.msra.mxu0 %v3959
        %4638 = vmatpush.bf16.msra.mxu0 %v3957
        %4639 = vmatpush.bf16.msra.mxu0 %v3955
        %4640 = vmatpush.bf16.msra.mxu0 %v3953
        %4641 = vmatmul.bf16.gmra.mxu0 %v4135
        %v4642 = vpop.f32.mrf.mxu0
        %v4643 = vadd.f32 %v4630, %v4642
        %v4644 = vpop.f32.mrf.mxu0
        %4645 = vdwg.mxu0
        %4646 = vmatpush.bf16.msra.mxu0 %v3983
        %4647 = vmatpush.bf16.msra.mxu0 %v3981
        %4648 = vmatpush.bf16.msra.mxu0 %v3979
        %4649 = vmatpush.bf16.msra.mxu0 %v3977
        %4650 = vmatpush.bf16.msra.mxu0 %v3975
        %4651 = vmatpush.bf16.msra.mxu0 %v3973
        %4652 = vmatpush.bf16.msra.mxu0 %v3971
        %4653 = vmatpush.bf16.msra.mxu0 %v3969
        %4654 = vmatmul.bf16.gmra.mxu0 %v4136
        %v4655 = vpop.f32.mrf.mxu0
        %v4656 = vadd.f32 %v4643, %v4655
        %v4657 = vpop.f32.mrf.mxu0
        %4658 = vdwg.mxu0
        %4659 = vmatpush.bf16.msra.mxu0 %v3999
        %4660 = vmatpush.bf16.msra.mxu0 %v3997
        %4661 = vmatpush.bf16.msra.mxu0 %v3995
        %4662 = vmatpush.bf16.msra.mxu0 %v3993
        %4663 = vmatpush.bf16.msra.mxu0 %v3991
        %4664 = vmatpush.bf16.msra.mxu0 %v3989
        %4665 = vmatpush.bf16.msra.mxu0 %v3987
        %4666 = vmatpush.bf16.msra.mxu0 %v3985
        %4667 = vmatmul.bf16.gmra.mxu0 %v4137
        %v4668 = vpop.f32.mrf.mxu0
        %v4669 = vadd.f32 %v4656, %v4668
        %v4670 = vpop.f32.mrf.mxu0
        %4671 = vdwg.mxu0
        %4672 = vmatpush.bf16.msra.mxu0 %v4015
        %4673 = vmatpush.bf16.msra.mxu0 %v4013
        %4674 = vmatpush.bf16.msra.mxu0 %v4011
        %4675 = vmatpush.bf16.msra.mxu0 %v4009
        %4676 = vmatpush.bf16.msra.mxu0 %v4007
        %4677 = vmatpush.bf16.msra.mxu0 %v4005
        %4678 = vmatpush.bf16.msra.mxu0 %v4003
        %4679 = vmatpush.bf16.msra.mxu0 %v4001
        %4680 = vmatmul.bf16.gmra.mxu0 %v4138
        %v4681 = vpop.f32.mrf.mxu0
        %v4682 = vadd.f32 %v4669, %v4681
        %v4683 = vpop.f32.mrf.mxu0
        %4684 = vdwg.mxu0
        %4685 = vmatpush.bf16.msra.mxu0 %v4031
        %4686 = vmatpush.bf16.msra.mxu0 %v4029
        %4687 = vmatpush.bf16.msra.mxu0 %v4027
        %4688 = vmatpush.bf16.msra.mxu0 %v4025
        %4689 = vmatpush.bf16.msra.mxu0 %v4023
        %4690 = vmatpush.bf16.msra.mxu0 %v4021
        %4691 = vmatpush.bf16.msra.mxu0 %v4019
        %4692 = vmatpush.bf16.msra.mxu0 %v4017
        %4693 = vmatmul.bf16.gmra.mxu0 %v4139
        %v4694 = vpop.f32.mrf.mxu0
        %v4695 = vadd.f32 %v4682, %v4694
        %v4696 = vpop.f32.mrf.mxu0
        %4697 = vdwg.mxu0
        %4698 = vmatpush.bf16.msra.mxu0 %v4047
        %4699 = vmatpush.bf16.msra.mxu0 %v4045
        %4700 = vmatpush.bf16.msra.mxu0 %v4043
        %4701 = vmatpush.bf16.msra.mxu0 %v4041
        %4702 = vmatpush.bf16.msra.mxu0 %v4039
        %4703 = vmatpush.bf16.msra.mxu0 %v4037
        %4704 = vmatpush.bf16.msra.mxu0 %v4035
        %4705 = vmatpush.bf16.msra.mxu0 %v4033
        %4706 = vmatmul.bf16.gmra.mxu0 %v4140
        %v4707 = vpop.f32.mrf.mxu0
        %v4708 = vadd.f32 %v4695, %v4707
        %v4709 = vpop.f32.mrf.mxu0
        %4710 = vdwg.mxu0
        %4711 = vmatpush.bf16.msra.mxu0 %v4063
        %4712 = vmatpush.bf16.msra.mxu0 %v4061
        %4713 = vmatpush.bf16.msra.mxu0 %v4059
        %4714 = vmatpush.bf16.msra.mxu0 %v4057
        %4715 = vmatpush.bf16.msra.mxu0 %v4055
        %4716 = vmatpush.bf16.msra.mxu0 %v4053
        %4717 = vmatpush.bf16.msra.mxu0 %v4051
        %4718 = vmatpush.bf16.msra.mxu0 %v4049
        %4719 = vmatmul.bf16.gmra.mxu0 %v4143
        %v4720 = vpop.f32.mrf.mxu0
        %v4721 = vadd.f32 %v4708, %v4720
        %v4722 = vpop.f32.mrf.mxu0
        %4723 = vdwg.mxu0
        %4724 = vmatpush.bf16.msra.mxu0 %v4079
        %4725 = vmatpush.bf16.msra.mxu0 %v4077
        %4726 = vmatpush.bf16.msra.mxu0 %v4075
        %4727 = vmatpush.bf16.msra.mxu0 %v4073
        %4728 = vmatpush.bf16.msra.mxu0 %v4071
        %4729 = vmatpush.bf16.msra.mxu0 %v4069
        %4730 = vmatpush.bf16.msra.mxu0 %v4067
        %4731 = vmatpush.bf16.msra.mxu0 %v4065
        %4732 = vmatmul.bf16.gmra.mxu0 %v4144
        %v4733 = vpop.f32.mrf.mxu0
        %v4734 = vadd.f32 %v4721, %v4733
        %v4735 = vpop.f32.mrf.mxu0
        %4736 = vdwg.mxu0
        %4737 = vmatpush.bf16.msra.mxu0 0
        %4738 = vmatpush.bf16.msra.mxu0 0
        %4739 = vmatpush.bf16.msra.mxu0 0
        %4740 = vmatpush.bf16.msra.mxu0 0
        %4741 = vmatpush.bf16.msra.mxu0 0
        %4742 = vmatpush.bf16.msra.mxu0 0
        %4743 = vmatpush.bf16.msra.mxu0 %v4083
        %4744 = vmatpush.bf16.msra.mxu0 %v4081
        %4745 = vmatmul.bf16.gmra.mxu0 %v4189
        %v4746 = vpop.f32.mrf.mxu0
        %v4747 = vadd.f32 %v4734, %v4746
        %v4748 = vpop.f32.mrf.mxu0
        %4749 = vdwg.mxu0
        %4750 = vmatpush.bf16.msra.mxu0 %v3424
        %4751 = vmatpush.bf16.msra.mxu0 %v3422
        %4752 = vmatpush.bf16.msra.mxu0 %v3420
        %4753 = vmatpush.bf16.msra.mxu0 %v3418
        %4754 = vmatpush.bf16.msra.mxu0 %v3416
        %4755 = vmatpush.bf16.msra.mxu0 %v3414
        %4756 = vmatpush.bf16.msra.mxu0 %v3412
        %4757 = vmatpush.bf16.msra.mxu0 %v3410
        %4758 = vmatmul.bf16.gmra.mxu0 %v4093
        %v4759 = vpop.f32.mrf.mxu0
        %v4760 = vadd.f32 0.0, %v4759
        %v4761 = vpop.f32.mrf.mxu0
        %4762 = vdwg.mxu0
        %4763 = vmatpush.bf16.msra.mxu0 %v3440
        %4764 = vmatpush.bf16.msra.mxu0 %v3438
        %4765 = vmatpush.bf16.msra.mxu0 %v3436
        %4766 = vmatpush.bf16.msra.mxu0 %v3434
        %4767 = vmatpush.bf16.msra.mxu0 %v3432
        %4768 = vmatpush.bf16.msra.mxu0 %v3430
        %4769 = vmatpush.bf16.msra.mxu0 %v3428
        %4770 = vmatpush.bf16.msra.mxu0 %v3426
        %4771 = vmatmul.bf16.gmra.mxu0 %v4094
        %v4772 = vpop.f32.mrf.mxu0
        %v4773 = vadd.f32 %v4760, %v4772
        %v4774 = vpop.f32.mrf.mxu0
        %4775 = vdwg.mxu0
        %4776 = vmatpush.bf16.msra.mxu0 %v3456
        %4777 = vmatpush.bf16.msra.mxu0 %v3454
        %4778 = vmatpush.bf16.msra.mxu0 %v3452
        %4779 = vmatpush.bf16.msra.mxu0 %v3450
        %4780 = vmatpush.bf16.msra.mxu0 %v3448
        %4781 = vmatpush.bf16.msra.mxu0 %v3446
        %4782 = vmatpush.bf16.msra.mxu0 %v3444
        %4783 = vmatpush.bf16.msra.mxu0 %v3442
        %4784 = vmatmul.bf16.gmra.mxu0 %v4095
        %v4785 = vpop.f32.mrf.mxu0
        %v4786 = vadd.f32 %v4773, %v4785
        %v4787 = vpop.f32.mrf.mxu0
        %4788 = vdwg.mxu0
        %4789 = vmatpush.bf16.msra.mxu0 %v3472
        %4790 = vmatpush.bf16.msra.mxu0 %v3470
        %4791 = vmatpush.bf16.msra.mxu0 %v3468
        %4792 = vmatpush.bf16.msra.mxu0 %v3466
        %4793 = vmatpush.bf16.msra.mxu0 %v3464
        %4794 = vmatpush.bf16.msra.mxu0 %v3462
        %4795 = vmatpush.bf16.msra.mxu0 %v3460
        %4796 = vmatpush.bf16.msra.mxu0 %v3458
        %4797 = vmatmul.bf16.gmra.mxu0 %v4096
        %v4798 = vpop.f32.mrf.mxu0
        %v4799 = vadd.f32 %v4786, %v4798
        %v4800 = vpop.f32.mrf.mxu0
        %4801 = vdwg.mxu0
        %4802 = vmatpush.bf16.msra.mxu0 %v3488
        %4803 = vmatpush.bf16.msra.mxu0 %v3486
        %4804 = vmatpush.bf16.msra.mxu0 %v3484
        %4805 = vmatpush.bf16.msra.mxu0 %v3482
        %4806 = vmatpush.bf16.msra.mxu0 %v3480
        %4807 = vmatpush.bf16.msra.mxu0 %v3478
        %4808 = vmatpush.bf16.msra.mxu0 %v3476
        %4809 = vmatpush.bf16.msra.mxu0 %v3474
        %4810 = vmatmul.bf16.gmra.mxu0 %v4097
        %v4811 = vpop.f32.mrf.mxu0
        %v4812 = vadd.f32 %v4799, %v4811
        %v4813 = vpop.f32.mrf.mxu0
        %4814 = vdwg.mxu0
        %4815 = vmatpush.bf16.msra.mxu0 %v3504
        %4816 = vmatpush.bf16.msra.mxu0 %v3502
        %4817 = vmatpush.bf16.msra.mxu0 %v3500
        %4818 = vmatpush.bf16.msra.mxu0 %v3498
        %4819 = vmatpush.bf16.msra.mxu0 %v3496
        %4820 = vmatpush.bf16.msra.mxu0 %v3494
        %4821 = vmatpush.bf16.msra.mxu0 %v3492
        %4822 = vmatpush.bf16.msra.mxu0 %v3490
        %4823 = vmatmul.bf16.gmra.mxu0 %v4098
        %v4824 = vpop.f32.mrf.mxu0
        %v4825 = vadd.f32 %v4812, %v4824
        %v4826 = vpop.f32.mrf.mxu0
        %4827 = vdwg.mxu0
        %4828 = vmatpush.bf16.msra.mxu0 %v3520
        %4829 = vmatpush.bf16.msra.mxu0 %v3518
        %4830 = vmatpush.bf16.msra.mxu0 %v3516
        %4831 = vmatpush.bf16.msra.mxu0 %v3514
        %4832 = vmatpush.bf16.msra.mxu0 %v3512
        %4833 = vmatpush.bf16.msra.mxu0 %v3510
        %4834 = vmatpush.bf16.msra.mxu0 %v3508
        %4835 = vmatpush.bf16.msra.mxu0 %v3506
        %4836 = vmatmul.bf16.gmra.mxu0 %v4099
        %v4837 = vpop.f32.mrf.mxu0
        %v4838 = vadd.f32 %v4825, %v4837
        %v4839 = vpop.f32.mrf.mxu0
        %4840 = vdwg.mxu0
        %4841 = vmatpush.bf16.msra.mxu0 %v3536
        %4842 = vmatpush.bf16.msra.mxu0 %v3534
        %4843 = vmatpush.bf16.msra.mxu0 %v3532
        %4844 = vmatpush.bf16.msra.mxu0 %v3530
        %4845 = vmatpush.bf16.msra.mxu0 %v3528
        %4846 = vmatpush.bf16.msra.mxu0 %v3526
        %4847 = vmatpush.bf16.msra.mxu0 %v3524
        %4848 = vmatpush.bf16.msra.mxu0 %v3522
        %4849 = vmatmul.bf16.gmra.mxu0 %v4100
        %v4850 = vpop.f32.mrf.mxu0
        %v4851 = vadd.f32 %v4838, %v4850
        %v4852 = vpop.f32.mrf.mxu0
        %4853 = vdwg.mxu0
        %4854 = vmatpush.bf16.msra.mxu0 %v3552
        %4855 = vmatpush.bf16.msra.mxu0 %v3550
        %4856 = vmatpush.bf16.msra.mxu0 %v3548
        %4857 = vmatpush.bf16.msra.mxu0 %v3546
        %4858 = vmatpush.bf16.msra.mxu0 %v3544
        %4859 = vmatpush.bf16.msra.mxu0 %v3542
        %4860 = vmatpush.bf16.msra.mxu0 %v3540
        %4861 = vmatpush.bf16.msra.mxu0 %v3538
        %4862 = vmatmul.bf16.gmra.mxu0 %v4103
        %v4863 = vpop.f32.mrf.mxu0
        %v4864 = vadd.f32 %v4851, %v4863
        %v4865 = vpop.f32.mrf.mxu0
        %4866 = vdwg.mxu0
        %4867 = vmatpush.bf16.msra.mxu0 %v3568
        %4868 = vmatpush.bf16.msra.mxu0 %v3566
        %4869 = vmatpush.bf16.msra.mxu0 %v3564
        %4870 = vmatpush.bf16.msra.mxu0 %v3562
        %4871 = vmatpush.bf16.msra.mxu0 %v3560
        %4872 = vmatpush.bf16.msra.mxu0 %v3558
        %4873 = vmatpush.bf16.msra.mxu0 %v3556
        %4874 = vmatpush.bf16.msra.mxu0 %v3554
        %4875 = vmatmul.bf16.gmra.mxu0 %v4104
        %v4876 = vpop.f32.mrf.mxu0
        %v4877 = vadd.f32 %v4864, %v4876
        %v4878 = vpop.f32.mrf.mxu0
        %4879 = vdwg.mxu0
        %4880 = vmatpush.bf16.msra.mxu0 %v3584
        %4881 = vmatpush.bf16.msra.mxu0 %v3582
        %4882 = vmatpush.bf16.msra.mxu0 %v3580
        %4883 = vmatpush.bf16.msra.mxu0 %v3578
        %4884 = vmatpush.bf16.msra.mxu0 %v3576
        %4885 = vmatpush.bf16.msra.mxu0 %v3574
        %4886 = vmatpush.bf16.msra.mxu0 %v3572
        %4887 = vmatpush.bf16.msra.mxu0 %v3570
        %4888 = vmatmul.bf16.gmra.mxu0 %v4105
        %v4889 = vpop.f32.mrf.mxu0
        %v4890 = vadd.f32 %v4877, %v4889
        %v4891 = vpop.f32.mrf.mxu0
        %4892 = vdwg.mxu0
        %4893 = vmatpush.bf16.msra.mxu0 %v3600
        %4894 = vmatpush.bf16.msra.mxu0 %v3598
        %4895 = vmatpush.bf16.msra.mxu0 %v3596
        %4896 = vmatpush.bf16.msra.mxu0 %v3594
        %4897 = vmatpush.bf16.msra.mxu0 %v3592
        %4898 = vmatpush.bf16.msra.mxu0 %v3590
        %4899 = vmatpush.bf16.msra.mxu0 %v3588
        %4900 = vmatpush.bf16.msra.mxu0 %v3586
        %4901 = vmatmul.bf16.gmra.mxu0 %v4106
        %v4902 = vpop.f32.mrf.mxu0
        %v4903 = vadd.f32 %v4890, %v4902
        %v4904 = vpop.f32.mrf.mxu0
        %4905 = vdwg.mxu0
        %4906 = vmatpush.bf16.msra.mxu0 %v3616
        %4907 = vmatpush.bf16.msra.mxu0 %v3614
        %4908 = vmatpush.bf16.msra.mxu0 %v3612
        %4909 = vmatpush.bf16.msra.mxu0 %v3610
        %4910 = vmatpush.bf16.msra.mxu0 %v3608
        %4911 = vmatpush.bf16.msra.mxu0 %v3606
        %4912 = vmatpush.bf16.msra.mxu0 %v3604
        %4913 = vmatpush.bf16.msra.mxu0 %v3602
        %4914 = vmatmul.bf16.gmra.mxu0 %v4107
        %v4915 = vpop.f32.mrf.mxu0
        %v4916 = vadd.f32 %v4903, %v4915
        %v4917 = vpop.f32.mrf.mxu0
        %4918 = vdwg.mxu0
        %4919 = vmatpush.bf16.msra.mxu0 %v3632
        %4920 = vmatpush.bf16.msra.mxu0 %v3630
        %4921 = vmatpush.bf16.msra.mxu0 %v3628
        %4922 = vmatpush.bf16.msra.mxu0 %v3626
        %4923 = vmatpush.bf16.msra.mxu0 %v3624
        %4924 = vmatpush.bf16.msra.mxu0 %v3622
        %4925 = vmatpush.bf16.msra.mxu0 %v3620
        %4926 = vmatpush.bf16.msra.mxu0 %v3618
        %4927 = vmatmul.bf16.gmra.mxu0 %v4108
        %v4928 = vpop.f32.mrf.mxu0
        %v4929 = vadd.f32 %v4916, %v4928
        %v4930 = vpop.f32.mrf.mxu0
        %4931 = vdwg.mxu0
        %4932 = vmatpush.bf16.msra.mxu0 %v3648
        %4933 = vmatpush.bf16.msra.mxu0 %v3646
        %4934 = vmatpush.bf16.msra.mxu0 %v3644
        %4935 = vmatpush.bf16.msra.mxu0 %v3642
        %4936 = vmatpush.bf16.msra.mxu0 %v3640
        %4937 = vmatpush.bf16.msra.mxu0 %v3638
        %4938 = vmatpush.bf16.msra.mxu0 %v3636
        %4939 = vmatpush.bf16.msra.mxu0 %v3634
        %4940 = vmatmul.bf16.gmra.mxu0 %v4109
        %v4941 = vpop.f32.mrf.mxu0
        %v4942 = vadd.f32 %v4929, %v4941
        %v4943 = vpop.f32.mrf.mxu0
        %4944 = vdwg.mxu0
        %4945 = vmatpush.bf16.msra.mxu0 %v3664
        %4946 = vmatpush.bf16.msra.mxu0 %v3662
        %4947 = vmatpush.bf16.msra.mxu0 %v3660
        %4948 = vmatpush.bf16.msra.mxu0 %v3658
        %4949 = vmatpush.bf16.msra.mxu0 %v3656
        %4950 = vmatpush.bf16.msra.mxu0 %v3654
        %4951 = vmatpush.bf16.msra.mxu0 %v3652
        %4952 = vmatpush.bf16.msra.mxu0 %v3650
        %4953 = vmatmul.bf16.gmra.mxu0 %v4110
        %v4954 = vpop.f32.mrf.mxu0
        %v4955 = vadd.f32 %v4942, %v4954
        %v4956 = vpop.f32.mrf.mxu0
        %4957 = vdwg.mxu0
        %4958 = vmatpush.bf16.msra.mxu0 %v3680
        %4959 = vmatpush.bf16.msra.mxu0 %v3678
        %4960 = vmatpush.bf16.msra.mxu0 %v3676
        %4961 = vmatpush.bf16.msra.mxu0 %v3674
        %4962 = vmatpush.bf16.msra.mxu0 %v3672
        %4963 = vmatpush.bf16.msra.mxu0 %v3670
        %4964 = vmatpush.bf16.msra.mxu0 %v3668
        %4965 = vmatpush.bf16.msra.mxu0 %v3666
        %4966 = vmatmul.bf16.gmra.mxu0 %v4113
        %v4967 = vpop.f32.mrf.mxu0
        %v4968 = vadd.f32 %v4955, %v4967
        %v4969 = vpop.f32.mrf.mxu0
        %4970 = vdwg.mxu0
        %4971 = vmatpush.bf16.msra.mxu0 %v3696
        %4972 = vmatpush.bf16.msra.mxu0 %v3694
        %4973 = vmatpush.bf16.msra.mxu0 %v3692
        %4974 = vmatpush.bf16.msra.mxu0 %v3690
        %4975 = vmatpush.bf16.msra.mxu0 %v3688
        %4976 = vmatpush.bf16.msra.mxu0 %v3686
        %4977 = vmatpush.bf16.msra.mxu0 %v3684
        %4978 = vmatpush.bf16.msra.mxu0 %v3682
        %4979 = vmatmul.bf16.gmra.mxu0 %v4114
        %v4980 = vpop.f32.mrf.mxu0
        %v4981 = vadd.f32 %v4968, %v4980
        %v4982 = vpop.f32.mrf.mxu0
        %4983 = vdwg.mxu0
        %4984 = vmatpush.bf16.msra.mxu0 %v3712
        %4985 = vmatpush.bf16.msra.mxu0 %v3710
        %4986 = vmatpush.bf16.msra.mxu0 %v3708
        %4987 = vmatpush.bf16.msra.mxu0 %v3706
        %4988 = vmatpush.bf16.msra.mxu0 %v3704
        %4989 = vmatpush.bf16.msra.mxu0 %v3702
        %4990 = vmatpush.bf16.msra.mxu0 %v3700
        %4991 = vmatpush.bf16.msra.mxu0 %v3698
        %4992 = vmatmul.bf16.gmra.mxu0 %v4115
        %v4993 = vpop.f32.mrf.mxu0
        %v4994 = vadd.f32 %v4981, %v4993
        %v4995 = vpop.f32.mrf.mxu0
        %4996 = vdwg.mxu0
        %4997 = vmatpush.bf16.msra.mxu0 %v3728
        %4998 = vmatpush.bf16.msra.mxu0 %v3726
        %4999 = vmatpush.bf16.msra.mxu0 %v3724
        %5000 = vmatpush.bf16.msra.mxu0 %v3722
        %5001 = vmatpush.bf16.msra.mxu0 %v3720
        %5002 = vmatpush.bf16.msra.mxu0 %v3718
        %5003 = vmatpush.bf16.msra.mxu0 %v3716
        %5004 = vmatpush.bf16.msra.mxu0 %v3714
        %5005 = vmatmul.bf16.gmra.mxu0 %v4116
        %v5006 = vpop.f32.mrf.mxu0
        %v5007 = vadd.f32 %v4994, %v5006
        %v5008 = vpop.f32.mrf.mxu0
        %5009 = vdwg.mxu0
        %5010 = vmatpush.bf16.msra.mxu0 %v3744
        %5011 = vmatpush.bf16.msra.mxu0 %v3742
        %5012 = vmatpush.bf16.msra.mxu0 %v3740
        %5013 = vmatpush.bf16.msra.mxu0 %v3738
        %5014 = vmatpush.bf16.msra.mxu0 %v3736
        %5015 = vmatpush.bf16.msra.mxu0 %v3734
        %5016 = vmatpush.bf16.msra.mxu0 %v3732
        %5017 = vmatpush.bf16.msra.mxu0 %v3730
        %5018 = vmatmul.bf16.gmra.mxu0 %v4117
        %v5019 = vpop.f32.mrf.mxu0
        %v5020 = vadd.f32 %v5007, %v5019
        %v5021 = vpop.f32.mrf.mxu0
        %5022 = vdwg.mxu0
        %5023 = vmatpush.bf16.msra.mxu0 %v3760
        %5024 = vmatpush.bf16.msra.mxu0 %v3758
        %5025 = vmatpush.bf16.msra.mxu0 %v3756
        %5026 = vmatpush.bf16.msra.mxu0 %v3754
        %5027 = vmatpush.bf16.msra.mxu0 %v3752
        %5028 = vmatpush.bf16.msra.mxu0 %v3750
        %5029 = vmatpush.bf16.msra.mxu0 %v3748
        %5030 = vmatpush.bf16.msra.mxu0 %v3746
        %5031 = vmatmul.bf16.gmra.mxu0 %v4118
        %v5032 = vpop.f32.mrf.mxu0
        %v5033 = vadd.f32 %v5020, %v5032
        %v5034 = vpop.f32.mrf.mxu0
        %5035 = vdwg.mxu0
        %5036 = vmatpush.bf16.msra.mxu0 %v3776
        %5037 = vmatpush.bf16.msra.mxu0 %v3774
        %5038 = vmatpush.bf16.msra.mxu0 %v3772
        %5039 = vmatpush.bf16.msra.mxu0 %v3770
        %5040 = vmatpush.bf16.msra.mxu0 %v3768
        %5041 = vmatpush.bf16.msra.mxu0 %v3766
        %5042 = vmatpush.bf16.msra.mxu0 %v3764
        %5043 = vmatpush.bf16.msra.mxu0 %v3762
        %5044 = vmatmul.bf16.gmra.mxu0 %v4119
        %v5045 = vpop.f32.mrf.mxu0
        %v5046 = vadd.f32 %v5033, %v5045
        %v5047 = vpop.f32.mrf.mxu0
        %5048 = vdwg.mxu0
        %5049 = vmatpush.bf16.msra.mxu0 %v3792
        %5050 = vmatpush.bf16.msra.mxu0 %v3790
        %5051 = vmatpush.bf16.msra.mxu0 %v3788
        %5052 = vmatpush.bf16.msra.mxu0 %v3786
        %5053 = vmatpush.bf16.msra.mxu0 %v3784
        %5054 = vmatpush.bf16.msra.mxu0 %v3782
        %5055 = vmatpush.bf16.msra.mxu0 %v3780
        %5056 = vmatpush.bf16.msra.mxu0 %v3778
        %5057 = vmatmul.bf16.gmra.mxu0 %v4120
        %v5058 = vpop.f32.mrf.mxu0
        %v5059 = vadd.f32 %v5046, %v5058
        %v5060 = vpop.f32.mrf.mxu0
        %5061 = vdwg.mxu0
        %5062 = vmatpush.bf16.msra.mxu0 %v3808
        %5063 = vmatpush.bf16.msra.mxu0 %v3806
        %5064 = vmatpush.bf16.msra.mxu0 %v3804
        %5065 = vmatpush.bf16.msra.mxu0 %v3802
        %5066 = vmatpush.bf16.msra.mxu0 %v3800
        %5067 = vmatpush.bf16.msra.mxu0 %v3798
        %5068 = vmatpush.bf16.msra.mxu0 %v3796
        %5069 = vmatpush.bf16.msra.mxu0 %v3794
        %5070 = vmatmul.bf16.gmra.mxu0 %v4123
        %v5071 = vpop.f32.mrf.mxu0
        %v5072 = vadd.f32 %v5059, %v5071
        %v5073 = vpop.f32.mrf.mxu0
        %5074 = vdwg.mxu0
        %5075 = vmatpush.bf16.msra.mxu0 %v3824
        %5076 = vmatpush.bf16.msra.mxu0 %v3822
        %5077 = vmatpush.bf16.msra.mxu0 %v3820
        %5078 = vmatpush.bf16.msra.mxu0 %v3818
        %5079 = vmatpush.bf16.msra.mxu0 %v3816
        %5080 = vmatpush.bf16.msra.mxu0 %v3814
        %5081 = vmatpush.bf16.msra.mxu0 %v3812
        %5082 = vmatpush.bf16.msra.mxu0 %v3810
        %5083 = vmatmul.bf16.gmra.mxu0 %v4124
        %v5084 = vpop.f32.mrf.mxu0
        %v5085 = vadd.f32 %v5072, %v5084
        %v5086 = vpop.f32.mrf.mxu0
        %5087 = vdwg.mxu0
        %5088 = vmatpush.bf16.msra.mxu0 %v3840
        %5089 = vmatpush.bf16.msra.mxu0 %v3838
        %5090 = vmatpush.bf16.msra.mxu0 %v3836
        %5091 = vmatpush.bf16.msra.mxu0 %v3834
        %5092 = vmatpush.bf16.msra.mxu0 %v3832
        %5093 = vmatpush.bf16.msra.mxu0 %v3830
        %5094 = vmatpush.bf16.msra.mxu0 %v3828
        %5095 = vmatpush.bf16.msra.mxu0 %v3826
        %5096 = vmatmul.bf16.gmra.mxu0 %v4125
        %v5097 = vpop.f32.mrf.mxu0
        %v5098 = vadd.f32 %v5085, %v5097
        %v5099 = vpop.f32.mrf.mxu0
        %5100 = vdwg.mxu0
        %5101 = vmatpush.bf16.msra.mxu0 %v3856
        %5102 = vmatpush.bf16.msra.mxu0 %v3854
        %5103 = vmatpush.bf16.msra.mxu0 %v3852
        %5104 = vmatpush.bf16.msra.mxu0 %v3850
        %5105 = vmatpush.bf16.msra.mxu0 %v3848
        %5106 = vmatpush.bf16.msra.mxu0 %v3846
        %5107 = vmatpush.bf16.msra.mxu0 %v3844
        %5108 = vmatpush.bf16.msra.mxu0 %v3842
        %5109 = vmatmul.bf16.gmra.mxu0 %v4126
        %v5110 = vpop.f32.mrf.mxu0
        %v5111 = vadd.f32 %v5098, %v5110
        %v5112 = vpop.f32.mrf.mxu0
        %5113 = vdwg.mxu0
        %5114 = vmatpush.bf16.msra.mxu0 %v3872
        %5115 = vmatpush.bf16.msra.mxu0 %v3870
        %5116 = vmatpush.bf16.msra.mxu0 %v3868
        %5117 = vmatpush.bf16.msra.mxu0 %v3866
        %5118 = vmatpush.bf16.msra.mxu0 %v3864
        %5119 = vmatpush.bf16.msra.mxu0 %v3862
        %5120 = vmatpush.bf16.msra.mxu0 %v3860
        %5121 = vmatpush.bf16.msra.mxu0 %v3858
        %5122 = vmatmul.bf16.gmra.mxu0 %v4127
        %v5123 = vpop.f32.mrf.mxu0
        %v5124 = vadd.f32 %v5111, %v5123
        %v5125 = vpop.f32.mrf.mxu0
        %5126 = vdwg.mxu0
        %5127 = vmatpush.bf16.msra.mxu0 %v3888
        %5128 = vmatpush.bf16.msra.mxu0 %v3886
        %5129 = vmatpush.bf16.msra.mxu0 %v3884
        %5130 = vmatpush.bf16.msra.mxu0 %v3882
        %5131 = vmatpush.bf16.msra.mxu0 %v3880
        %5132 = vmatpush.bf16.msra.mxu0 %v3878
        %5133 = vmatpush.bf16.msra.mxu0 %v3876
        %5134 = vmatpush.bf16.msra.mxu0 %v3874
        %5135 = vmatmul.bf16.gmra.mxu0 %v4128
        %v5136 = vpop.f32.mrf.mxu0
        %v5137 = vadd.f32 %v5124, %v5136
        %v5138 = vpop.f32.mrf.mxu0
        %5139 = vdwg.mxu0
        %5140 = vmatpush.bf16.msra.mxu0 %v3904
        %5141 = vmatpush.bf16.msra.mxu0 %v3902
        %5142 = vmatpush.bf16.msra.mxu0 %v3900
        %5143 = vmatpush.bf16.msra.mxu0 %v3898
        %5144 = vmatpush.bf16.msra.mxu0 %v3896
        %5145 = vmatpush.bf16.msra.mxu0 %v3894
        %5146 = vmatpush.bf16.msra.mxu0 %v3892
        %5147 = vmatpush.bf16.msra.mxu0 %v3890
        %5148 = vmatmul.bf16.gmra.mxu0 %v4129
        %v5149 = vpop.f32.mrf.mxu0
        %v5150 = vadd.f32 %v5137, %v5149
        %v5151 = vpop.f32.mrf.mxu0
        %5152 = vdwg.mxu0
        %5153 = vmatpush.bf16.msra.mxu0 %v3920
        %5154 = vmatpush.bf16.msra.mxu0 %v3918
        %5155 = vmatpush.bf16.msra.mxu0 %v3916
        %5156 = vmatpush.bf16.msra.mxu0 %v3914
        %5157 = vmatpush.bf16.msra.mxu0 %v3912
        %5158 = vmatpush.bf16.msra.mxu0 %v3910
        %5159 = vmatpush.bf16.msra.mxu0 %v3908
        %5160 = vmatpush.bf16.msra.mxu0 %v3906
        %5161 = vmatmul.bf16.gmra.mxu0 %v4130
        %v5162 = vpop.f32.mrf.mxu0
        %v5163 = vadd.f32 %v5150, %v5162
        %v5164 = vpop.f32.mrf.mxu0
        %5165 = vdwg.mxu0
        %5166 = vmatpush.bf16.msra.mxu0 %v3936
        %5167 = vmatpush.bf16.msra.mxu0 %v3934
        %5168 = vmatpush.bf16.msra.mxu0 %v3932
        %5169 = vmatpush.bf16.msra.mxu0 %v3930
        %5170 = vmatpush.bf16.msra.mxu0 %v3928
        %5171 = vmatpush.bf16.msra.mxu0 %v3926
        %5172 = vmatpush.bf16.msra.mxu0 %v3924
        %5173 = vmatpush.bf16.msra.mxu0 %v3922
        %5174 = vmatmul.bf16.gmra.mxu0 %v4133
        %v5175 = vpop.f32.mrf.mxu0
        %v5176 = vadd.f32 %v5163, %v5175
        %v5177 = vpop.f32.mrf.mxu0
        %5178 = vdwg.mxu0
        %5179 = vmatpush.bf16.msra.mxu0 %v3952
        %5180 = vmatpush.bf16.msra.mxu0 %v3950
        %5181 = vmatpush.bf16.msra.mxu0 %v3948
        %5182 = vmatpush.bf16.msra.mxu0 %v3946
        %5183 = vmatpush.bf16.msra.mxu0 %v3944
        %5184 = vmatpush.bf16.msra.mxu0 %v3942
        %5185 = vmatpush.bf16.msra.mxu0 %v3940
        %5186 = vmatpush.bf16.msra.mxu0 %v3938
        %5187 = vmatmul.bf16.gmra.mxu0 %v4134
        %v5188 = vpop.f32.mrf.mxu0
        %v5189 = vadd.f32 %v5176, %v5188
        %v5190 = vpop.f32.mrf.mxu0
        %5191 = vdwg.mxu0
        %5192 = vmatpush.bf16.msra.mxu0 %v3968
        %5193 = vmatpush.bf16.msra.mxu0 %v3966
        %5194 = vmatpush.bf16.msra.mxu0 %v3964
        %5195 = vmatpush.bf16.msra.mxu0 %v3962
        %5196 = vmatpush.bf16.msra.mxu0 %v3960
        %5197 = vmatpush.bf16.msra.mxu0 %v3958
        %5198 = vmatpush.bf16.msra.mxu0 %v3956
        %5199 = vmatpush.bf16.msra.mxu0 %v3954
        %5200 = vmatmul.bf16.gmra.mxu0 %v4135
        %v5201 = vpop.f32.mrf.mxu0
        %v5202 = vadd.f32 %v5189, %v5201
        %v5203 = vpop.f32.mrf.mxu0
        %5204 = vdwg.mxu0
        %5205 = vmatpush.bf16.msra.mxu0 %v3984
        %5206 = vmatpush.bf16.msra.mxu0 %v3982
        %5207 = vmatpush.bf16.msra.mxu0 %v3980
        %5208 = vmatpush.bf16.msra.mxu0 %v3978
        %5209 = vmatpush.bf16.msra.mxu0 %v3976
        %5210 = vmatpush.bf16.msra.mxu0 %v3974
        %5211 = vmatpush.bf16.msra.mxu0 %v3972
        %5212 = vmatpush.bf16.msra.mxu0 %v3970
        %5213 = vmatmul.bf16.gmra.mxu0 %v4136
        %v5214 = vpop.f32.mrf.mxu0
        %v5215 = vadd.f32 %v5202, %v5214
        %v5216 = vpop.f32.mrf.mxu0
        %5217 = vdwg.mxu0
        %5218 = vmatpush.bf16.msra.mxu0 %v4000
        %5219 = vmatpush.bf16.msra.mxu0 %v3998
        %5220 = vmatpush.bf16.msra.mxu0 %v3996
        %5221 = vmatpush.bf16.msra.mxu0 %v3994
        %5222 = vmatpush.bf16.msra.mxu0 %v3992
        %5223 = vmatpush.bf16.msra.mxu0 %v3990
        %5224 = vmatpush.bf16.msra.mxu0 %v3988
        %5225 = vmatpush.bf16.msra.mxu0 %v3986
        %5226 = vmatmul.bf16.gmra.mxu0 %v4137
        %v5227 = vpop.f32.mrf.mxu0
        %v5228 = vadd.f32 %v5215, %v5227
        %v5229 = vpop.f32.mrf.mxu0
        %5230 = vdwg.mxu0
        %5231 = vmatpush.bf16.msra.mxu0 %v4016
        %5232 = vmatpush.bf16.msra.mxu0 %v4014
        %5233 = vmatpush.bf16.msra.mxu0 %v4012
        %5234 = vmatpush.bf16.msra.mxu0 %v4010
        %5235 = vmatpush.bf16.msra.mxu0 %v4008
        %5236 = vmatpush.bf16.msra.mxu0 %v4006
        %5237 = vmatpush.bf16.msra.mxu0 %v4004
        %5238 = vmatpush.bf16.msra.mxu0 %v4002
        %5239 = vmatmul.bf16.gmra.mxu0 %v4138
        %v5240 = vpop.f32.mrf.mxu0
        %v5241 = vadd.f32 %v5228, %v5240
        %v5242 = vpop.f32.mrf.mxu0
        %5243 = vdwg.mxu0
        %5244 = vmatpush.bf16.msra.mxu0 %v4032
        %5245 = vmatpush.bf16.msra.mxu0 %v4030
        %5246 = vmatpush.bf16.msra.mxu0 %v4028
        %5247 = vmatpush.bf16.msra.mxu0 %v4026
        %5248 = vmatpush.bf16.msra.mxu0 %v4024
        %5249 = vmatpush.bf16.msra.mxu0 %v4022
        %5250 = vmatpush.bf16.msra.mxu0 %v4020
        %5251 = vmatpush.bf16.msra.mxu0 %v4018
        %5252 = vmatmul.bf16.gmra.mxu0 %v4139
        %v5253 = vpop.f32.mrf.mxu0
        %v5254 = vadd.f32 %v5241, %v5253
        %v5255 = vpop.f32.mrf.mxu0
        %5256 = vdwg.mxu0
        %5257 = vmatpush.bf16.msra.mxu0 %v4048
        %5258 = vmatpush.bf16.msra.mxu0 %v4046
        %5259 = vmatpush.bf16.msra.mxu0 %v4044
        %5260 = vmatpush.bf16.msra.mxu0 %v4042
        %5261 = vmatpush.bf16.msra.mxu0 %v4040
        %5262 = vmatpush.bf16.msra.mxu0 %v4038
        %5263 = vmatpush.bf16.msra.mxu0 %v4036
        %5264 = vmatpush.bf16.msra.mxu0 %v4034
        %5265 = vmatmul.bf16.gmra.mxu0 %v4140
        %v5266 = vpop.f32.mrf.mxu0
        %v5267 = vadd.f32 %v5254, %v5266
        %v5268 = vpop.f32.mrf.mxu0
        %5269 = vdwg.mxu0
        %5270 = vmatpush.bf16.msra.mxu0 %v4064
        %5271 = vmatpush.bf16.msra.mxu0 %v4062
        %5272 = vmatpush.bf16.msra.mxu0 %v4060
        %5273 = vmatpush.bf16.msra.mxu0 %v4058
        %5274 = vmatpush.bf16.msra.mxu0 %v4056
        %5275 = vmatpush.bf16.msra.mxu0 %v4054
        %5276 = vmatpush.bf16.msra.mxu0 %v4052
        %5277 = vmatpush.bf16.msra.mxu0 %v4050
        %5278 = vmatmul.bf16.gmra.mxu0 %v4143
        %v5279 = vpop.f32.mrf.mxu0
        %v5280 = vadd.f32 %v5267, %v5279
        %v5281 = vpop.f32.mrf.mxu0
        %5282 = vdwg.mxu0
        %5283 = vmatpush.bf16.msra.mxu0 %v4080
        %5284 = vmatpush.bf16.msra.mxu0 %v4078
        %5285 = vmatpush.bf16.msra.mxu0 %v4076
        %5286 = vmatpush.bf16.msra.mxu0 %v4074
        %5287 = vmatpush.bf16.msra.mxu0 %v4072
        %5288 = vmatpush.bf16.msra.mxu0 %v4070
        %5289 = vmatpush.bf16.msra.mxu0 %v4068
        %5290 = vmatpush.bf16.msra.mxu0 %v4066
        %5291 = vmatmul.bf16.gmra.mxu0 %v4144
        %v5292 = vpop.f32.mrf.mxu0
        %v5293 = vadd.f32 %v5280, %v5292
        %v5294 = vpop.f32.mrf.mxu0
        %5295 = vdwg.mxu0
        %5296 = vmatpush.bf16.msra.mxu0 0
        %5297 = vmatpush.bf16.msra.mxu0 0
        %5298 = vmatpush.bf16.msra.mxu0 0
        %5299 = vmatpush.bf16.msra.mxu0 0
        %5300 = vmatpush.bf16.msra.mxu0 0
        %5301 = vmatpush.bf16.msra.mxu0 0
        %5302 = vmatpush.bf16.msra.mxu0 %v4084
        %5303 = vmatpush.bf16.msra.mxu0 %v4082
        %5304 = vmatmul.bf16.gmra.mxu0 %v4189
        %v5305 = vpop.f32.mrf.mxu0
        %v5306 = vadd.f32 %v5293, %v5305
        %v5307 = vpop.f32.mrf.mxu0
        %5308 = vdwg.mxu0
        %v5309 = vld [vmem:[%s296] sm:$0x3]
        %v5311 = vperm.slane %v5309, 0
        %v5312 = vperm.slane %v5309, 1
        %v5315 = vmul.f32 %v4747, %v5311
        %v5316 = vmul.f32 %v5306, %v5312
        %v5317 = vld [vmem:[%s306] sm:$0x3]
        %v5319 = vperm.slane %v5317, 0
        %v5320 = vperm.slane %v5317, 1
        %v5323 = vadd.f32 %v5315, %v5319
        %v5324 = vadd.f32 %v5316, %v5320
        %v5325 = vpack.c.bf16 %v5323, %v5323
        %v5326 = vpack.c.bf16 %v5324, %v5324
        %v5327 = vld [vmem:[%s316] sm:$0xf]
        %v5328 = vld [vmem:[%s316 + $0x4] sm:$0xf]
        %v5329 = vld [vmem:[%s316 + $0x8] sm:$0xf]
        %v5330 = vld [vmem:[%s316 + $0xc] sm:$0xf]
        %v5331 = vld [vmem:[%s316 + $0x10] sm:$0xf]
        %v5332 = vld [vmem:[%s316 + $0x14] sm:$0xf]
        %v5333 = vld [vmem:[%s316 + $0x18] sm:$0xf]
        %v5334 = vld [vmem:[%s316 + $0x1c] sm:$0xf]
        %v5335 = vld [vmem:[%s316 + $0x20] sm:$0xf]
        %v5336 = vld [vmem:[%s316 + $0x24] sm:$0xf]
        %v5337 = vld [vmem:[%s316 + $0x28] sm:$0xf]
        %v5338 = vld [vmem:[%s316 + $0x2c] sm:$0xf]
        %v5339 = vld [vmem:[%s316 + $0x30] sm:$0xf]
        %v5340 = vld [vmem:[%s316 + $0x34] sm:$0xf]
        %v5341 = vld [vmem:[%s316 + $0x38] sm:$0xf]
        %v5342 = vld [vmem:[%s316 + $0x3c] sm:$0xf]
        %v5343 = vld [vmem:[%s316 + $0x40] sm:$0xf]
        %v5344 = vld [vmem:[%s316 + $0x44] sm:$0xf]
        %v5345 = vld [vmem:[%s316 + $0x48] sm:$0xf]
        %v5346 = vld [vmem:[%s316 + $0x4c] sm:$0xf]
        %v5347 = vld [vmem:[%s316 + $0x50] sm:$0xf]
        %v5348 = vld [vmem:[%s316 + $0x54] sm:$0xf]
        %v5349 = vld [vmem:[%s316 + $0x58] sm:$0xf]
        %v5350 = vld [vmem:[%s316 + $0x5c] sm:$0xf]
        %v5351 = vld [vmem:[%s316 + $0x60] sm:$0xf]
        %v5352 = vld [vmem:[%s316 + $0x64] sm:$0xf]
        %v5353 = vld [vmem:[%s316 + $0x68] sm:$0xf]
        %v5354 = vld [vmem:[%s316 + $0x6c] sm:$0xf]
        %v5355 = vld [vmem:[%s316 + $0x70] sm:$0xf]
        %v5356 = vld [vmem:[%s316 + $0x74] sm:$0xf]
        %v5357 = vld [vmem:[%s316 + $0x78] sm:$0xf]
        %v5358 = vld [vmem:[%s316 + $0x7c] sm:$0xf]
        %v5391 = vunpack.c.l.b16 %v5327
        %v5392 = vunpack.c.l.b16 %v5328
        %v5393 = vunpack.c.l.b16 %v5329
        %v5394 = vunpack.c.l.b16 %v5330
        %v5395 = vunpack.c.l.b16 %v5331
        %v5396 = vunpack.c.l.b16 %v5332
        %v5397 = vunpack.c.l.b16 %v5333
        %v5398 = vunpack.c.l.b16 %v5334
        %v5399 = vunpack.c.l.b16 %v5335
        %v5400 = vunpack.c.l.b16 %v5336
        %v5401 = vunpack.c.l.b16 %v5337
        %v5402 = vunpack.c.l.b16 %v5338
        %v5403 = vunpack.c.l.b16 %v5339
        %v5404 = vunpack.c.l.b16 %v5340
        %v5405 = vunpack.c.l.b16 %v5341
        %v5406 = vunpack.c.l.b16 %v5342
        %v5407 = vunpack.c.l.b16 %v5343
        %v5408 = vunpack.c.l.b16 %v5344
        %v5409 = vunpack.c.l.b16 %v5345
        %v5410 = vunpack.c.l.b16 %v5346
        %v5411 = vunpack.c.l.b16 %v5347
        %v5412 = vunpack.c.l.b16 %v5348
        %v5413 = vunpack.c.l.b16 %v5349
        %v5414 = vunpack.c.l.b16 %v5350
        %v5415 = vunpack.c.l.b16 %v5351
        %v5416 = vunpack.c.l.b16 %v5352
        %v5417 = vunpack.c.l.b16 %v5353
        %v5418 = vunpack.c.l.b16 %v5354
        %v5419 = vunpack.c.l.b16 %v5355
        %v5420 = vunpack.c.l.b16 %v5356
        %v5421 = vunpack.c.l.b16 %v5357
        %v5422 = vunpack.c.l.b16 %v5358
        %v5423 = vpack.c.b16 %v5392, %v5391
        %v5424 = vpack.c.b16 %v5394, %v5393
        %v5425 = vpack.c.b16 %v5396, %v5395
        %v5426 = vpack.c.b16 %v5398, %v5397
        %v5427 = vpack.c.b16 %v5400, %v5399
        %v5428 = vpack.c.b16 %v5402, %v5401
        %v5429 = vpack.c.b16 %v5404, %v5403
        %v5430 = vpack.c.b16 %v5406, %v5405
        %v5431 = vpack.c.b16 %v5408, %v5407
        %v5432 = vpack.c.b16 %v5410, %v5409
        %v5433 = vpack.c.b16 %v5412, %v5411
        %v5434 = vpack.c.b16 %v5414, %v5413
        %v5435 = vpack.c.b16 %v5416, %v5415
        %v5436 = vpack.c.b16 %v5418, %v5417
        %v5437 = vpack.c.b16 %v5420, %v5419
        %v5438 = vpack.c.b16 %v5422, %v5421
        %5455 = vmatpush.bf16.msra.mxu0 %v5430
        %5456 = vmatpush.bf16.msra.mxu0 %v5429
        %5457 = vmatpush.bf16.msra.mxu0 %v5428
        %5458 = vmatpush.bf16.msra.mxu0 %v5427
        %5459 = vmatpush.bf16.msra.mxu0 %v5426
        %5460 = vmatpush.bf16.msra.mxu0 %v5425
        %5461 = vmatpush.bf16.msra.mxu0 %v5424
        %5462 = vmatpush.bf16.msra.mxu0 %v5423
        %5463 = vmatmul.bf16.gmra.mxu0 %v5325
        %v5464 = vpop.f32.mrf.mxu0
        %v5465 = vadd.f32 0.0, %v5464
        %v5466 = vpop.f32.mrf.mxu0
        %5467 = vdwg.mxu0
        %5468 = vmatpush.bf16.msra.mxu0 %v5438
        %5469 = vmatpush.bf16.msra.mxu0 %v5437
        %5470 = vmatpush.bf16.msra.mxu0 %v5436
        %5471 = vmatpush.bf16.msra.mxu0 %v5435
        %5472 = vmatpush.bf16.msra.mxu0 %v5434
        %5473 = vmatpush.bf16.msra.mxu0 %v5433
        %5474 = vmatpush.bf16.msra.mxu0 %v5432
        %5475 = vmatpush.bf16.msra.mxu0 %v5431
        %5476 = vmatmul.bf16.gmra.mxu0 %v5326
        %v5477 = vpop.f32.mrf.mxu0
        %v5478 = vadd.f32 %v5465, %v5477
        %v5479 = vpop.f32.mrf.mxu0
        %5480 = vdwg.mxu0
        %5481 = vst [vmem:[%s365] sm:$0x3] %v5478
        %p5482 = scmp.lt.s32.totalorder %s25, 3
        %s5483 = scalar_select %p5482, %s25, 3
        %s5484 = smul.addr %s5483, 2
        %s5485 = scalar_lea.vmem %s5, %s5484
        // Predicated region
        $region57: #{cnn_forward.3} parent=39 // pred_check
          %p5486 = pneg %p168
        $region58: #{cnn_forward.3} parent=39 // pred_check_branch
          %5488 = sbr.rel (%p5486) target = $region60
        $region59: #{cnn_forward.3} parent=39 // pred_region
          _
        $region60: #{cnn_forward.3} parent=39 // pred_fallthru
          _
      $region40: #{cnn_forward.3} parent=5 // pred_fallthru
        _
      %p5489 = scmp.le.s32.totalorder 2, %s20
      // Predicated region
      $region61: #{cnn_forward.3} parent=5 // pred_check
        %p5490 = pneg %p5489
      $region62: #{cnn_forward.3} parent=5 // pred_check_branch
        %5492 = sbr.rel (%p5490) target = $region64
      $region63: #{cnn_forward.3} parent=5 // pred_region
        %s5493 = ssub.s32 %s20, 2
        // Predicated region
        $region65: #{cnn_forward.3} parent=63 // pred_check
          %p5494 = pneg %p174
        $region66: #{cnn_forward.3} parent=63 // pred_check_branch
          %5496 = sbr.rel (%p5494) target = $region68
        $region67: #{cnn_forward.3} parent=63 // pred_region
          %p5497 = scmp.lt.s32.totalorder %s26, 3
          %s5498 = scalar_select %p5497, %s26, 3
          %s5499 = smul.addr %s5498, 2
          %s5500 = scalar_lea.vmem %s5, %s5499
        $region68: #{cnn_forward.3} parent=63 // pred_fallthru
          _
      $region64: #{cnn_forward.3} parent=5 // pred_fallthru
        _
    $region6: #{cnn_forward.3} parent=1 // loop_footer
      %s24 = sadd.s32 1, %s20
    $region7: #{cnn_forward.3} parent=1 // loop_footer_branch
      %19 = sbr.rel target = $region3
    $region8: #{cnn_forward.3} parent=1 // loop_exit
      _
    %5501 = vsyncpa [#allocation3], 1
    %s5502 = scalar_lea.sflag [#allocation3], 1
    %5503 = vsyncpa %s5502, 1
    %5504 = vsyncpa [#allocation5], 1
    %s5505 = scalar_lea.sflag [#allocation5], 1
    %5506 = vsyncpa %s5505, 1
    %5507 = vsyncpa [#allocation8], 1
    %s5508 = scalar_lea.sflag [#allocation8], 1
    %5509 = vsyncpa %s5508, 1

</llo_original>
